<compile_context>
chip_gen: v7x
topology: tpu7x:2x2x1
jax: 0.10.0
libtpu: 0.0.40
codegen_flags: <defaults>
</compile_context>

<pallas_src>
import functools
import math

import jax
import jax.numpy as jnp
from jax import lax
from jax.experimental import pallas as pl
from jax.experimental.pallas import tpu as pltpu


def _layernorm(x, gamma, beta, eps=1e-5):
    # Fused single-pass reduction: E[x] and E[x^2] together, var = E[x^2]-E[x]^2.
    mu = jnp.mean(x, axis=-1, keepdims=True)
    msq = jnp.mean(x * x, axis=-1, keepdims=True)
    var = msq - mu * mu
    return (x - mu) * lax.rsqrt(var + eps) * gamma + beta


def transformer_block_kernel(
    q_res_ref,                       # (1, Bq, E)  query tile (residual), compute dtype
    qh_ref,                          # (1, heads, Bq, hd) per-head unprojected Q, cdt
    k_ref, v_ref,                    # (1, heads, Lk, hd) PRE-projected K / V, cdt
    bias_ref,                        # (1, 1, Lk)  additive mask bias (0 / -1e20), f32
    wq_ref,                          # (hd, hd)    Q projection, softmax scale folded in
    wo_ref, bo_ref,                  # fc_out: (E, E), (1, E)
    g1_ref, be1_ref,                 # norm1 gamma/beta: (1, E)
    w1_ref, bf1_ref,                 # ffn layer 1: (E, H), (1, H)
    w2_ref, bf2_ref,                 # ffn layer 2: (H, E), (1, E)
    g2_ref, be2_ref,                 # norm2 gamma/beta: (1, E)
    out_ref,                         # (1, Bq, E)  f32
    ctx_ref,                         # VMEM scratch (Bq, E), compute dtype
    *, heads, approx_recip,
):
    cdt = wq_ref.dtype               # compute dtype for the MXU matmuls
    bq = qh_ref.shape[2]
    hd = qh_ref.shape[3]
    bias = bias_ref[0]               # (1, Lk) -> broadcasts over (heads, Bq, Lk)

    # ---- Q projection: one batched matmul over all heads (M = heads*Bq) ----
    qf = qh_ref[0].reshape(heads * bq, hd)                    # leading-dim merge
    q_all = jnp.dot(qf, wq_ref[...], preferred_element_type=jnp.float32)
    q_all = q_all.astype(cdt).reshape(heads, bq, hd)

    k = k_ref[0]                                              # (heads, Lk, hd)
    v = v_ref[0]

    # ---- attention: batched over heads, softmax in f32 ----
    # TODO(synk): for long Lk switch to flash-style online softmax over key
    #   tiles so K/V and the (heads, Bq, Lk) scores don't scale VMEM with Lk.
    s = jnp.einsum('hqd,hkd->hqk', q_all, k,
                   preferred_element_type=jnp.float32) + bias  # (heads, Bq, Lk)
    s_max = jnp.max(s, axis=-1, keepdims=True)
    p = jnp.exp(s - s_max)
    denom = jnp.sum(p, axis=-1, keepdims=True)
    if approx_recip:
        p = p * pl.reciprocal(denom, approx=True)
    else:
        p = p / denom                                          # exact (f32 parity)
    ctx = jnp.einsum('hqk,hkd->hqd', p.astype(cdt), v,
                     preferred_element_type=jnp.float32).astype(cdt)

    # ---- assemble head-concatenated context, single K=E fc_out matmul ----
    for h in range(heads):                                     # cheap static-slice stores
        ctx_ref[:, h * hd:(h + 1) * hd] = ctx[h]
    attn = jnp.dot(ctx_ref[...], wo_ref[...],
                   preferred_element_type=jnp.float32) + bo_ref[...]

    # ---- residual + norm1 (dropout is identity in eval mode) ----
    # TODO(synk): training-mode dropout not implemented (inference semantics).
    x = _layernorm(attn + q_res_ref[0].astype(jnp.float32), g1_ref[...], be1_ref[...])

    # ---- feed-forward: Linear -> ReLU -> Linear (cdt matmuls, f32 accum) ----
    hdn = jnp.dot(x.astype(cdt), w1_ref[...],
                  preferred_element_type=jnp.float32) + bf1_ref[...]
    hdn = jnp.maximum(hdn, 0.0)
    ff = jnp.dot(hdn.astype(cdt), w2_ref[...],
                 preferred_element_type=jnp.float32) + bf2_ref[...]

    # ---- residual + norm2 ----
    out_ref[0] = _layernorm(ff + x, g2_ref[...], be2_ref[...])


def _vmem_capacity_bytes():
    try:
        return int(pltpu.get_tpu_info().vmem_capacity_bytes)
    except Exception:
        return 64 << 20          # conservative: v7x per-TensorCore VMEM


def transformer_block(value, key, query, mask, params, *, heads,
                      block_q=None, compute_dtype=jnp.bfloat16):
    N, Lq, E = query.shape
    Lk = key.shape[1]
    hd = E // heads
    assert heads * hd == E, "embed_size must be divisible by heads"
    H = params["w1"].shape[1]
    cdt = jnp.dtype(compute_dtype)
    approx_recip = cdt != jnp.dtype(jnp.float32)

    vmem_cap = _vmem_capacity_bytes()
    if block_q is None:
        if Lq <= 128:
            block_q = Lq
        else:
            # Larger tiles amortize per-step overhead on big-VMEM parts (v5e/v6e);
            # keep 128 on v7x (64 MiB VMEM).
            block_q = 256 if (vmem_cap >= (100 << 20) and Lq % 256 == 0) else 128
    assert Lq % block_q == 0, "query_len must be divisible by block_q"
    num_q = Lq // block_q

    # (N, L, E) -> (N, heads, L, hd): heads leaves the lane axis so the kernel
    # never slices hd-wide chunks at non-128 lane offsets; cast to compute dtype
    # to halve activation DMA.
    def to_heads(x):
        n, l, _ = x.shape
        return x.reshape(n, l, heads, hd).transpose(0, 2, 1, 3).astype(cdt)

    q_h = to_heads(query)
    # K / V projected ONCE here (single XLA matmuls); they are constant across
    # the query-tile grid axis, so projecting in-kernel was num_q-fold redundant.
    k_p = jnp.einsum('nhld,df->nhlf', to_heads(key), params["wk"].astype(cdt),
                     preferred_element_type=jnp.float32).astype(cdt)
    v_p = jnp.einsum('nhld,df->nhlf', to_heads(value), params["wv"].astype(cdt),
                     preferred_element_type=jnp.float32).astype(cdt)

    # Residual in compute dtype (no second f32 copy of the query DMA'd).
    q_res = query.astype(cdt)

    # Additive mask bias, precomputed once outside the kernel.
    bias = jnp.where(mask.reshape(N, 1, Lk) == 0,
                     jnp.float32(-1e20), jnp.float32(0.0))

    # Softmax scale (1/sqrt(embed_size), matching the reference) folded into wq
    # (applied in f32, then cast to the compute dtype).
    scale = 1.0 / math.sqrt(E)
    wq = (params["wq"] * scale).astype(cdt)
    wo = params["wo"].astype(cdt)          # full (E, E): single K=E fc_out matmul
    w1 = params["w1"].astype(cdt)
    w2 = params["w2"].astype(cdt)

    # ---- generation-aware VMEM budget ----
    f32 = jnp.float32
    nb = lambda shape, dt: math.prod(shape) * jnp.dtype(dt).itemsize
    blk2 = 2 * (nb((1, block_q, E), cdt)                 # q_res
                + nb((1, heads, block_q, hd), cdt)       # q_h
                + 2 * nb((1, heads, Lk, hd), cdt)        # k_p, v_p
                + nb((1, 1, Lk), f32)                    # bias
                + nb((1, block_q, E), f32))              # out
    wgt = (nb((hd, hd), cdt) + nb((E, E), cdt) + nb((E, H), cdt) + nb((H, E), cdt)
           + 6 * nb((1, E), f32) + nb((1, H), f32))      # single-buffered weights
    scratch_b = nb((block_q, E), cdt)
    interm = 4 * (2 * heads * block_q * Lk               # scores + probs (f32)
                  + 3 * block_q * E                      # attn, x, ff (f32)
                  + block_q * H                          # ffn hidden (f32)
                  + 2 * heads * block_q * hd)            # q_all, ctx
    needed = blk2 + wgt + scratch_b + interm + (4 << 20)
    vmem_limit = int(max(16 << 20, min(needed, vmem_cap - (8 << 20))))

    # Advisory cost estimate so XLA schedules the wrapper-side ops around us.
    flops = int(2 * N * heads * Lq * hd * hd
                + 4 * N * heads * Lq * Lk * hd
                + 2 * N * Lq * E * E
                + 4 * N * Lq * E * H)
    transcendentals = int(N * heads * Lq * Lk)
    in_arrays = (q_res, q_h, k_p, v_p, bias, wq, wo, params["bo"],
                 params["g1"], params["be1"], w1, params["bf1"],
                 w2, params["bf2"], params["g2"], params["be2"])
    bytes_accessed = int(sum(int(a.size) * a.dtype.itemsize for a in in_arrays)
                         + N * Lq * E * 4)
    cost = pl.CostEstimate(flops=flops, transcendentals=transcendentals,
                           bytes_accessed=bytes_accessed)

    kernel = functools.partial(transformer_block_kernel,
                               heads=heads, approx_recip=approx_recip)

    def _build(single_buffer_weights):
        def wspec(shape):
            idx = lambda b, qi, _s=shape: (0,) * len(_s)
            if single_buffer_weights and hasattr(pl, "Buffered"):
                try:
                    # Weights never change block index -> double buffering is
                    # pure VMEM waste (critical on v7x's 64 MiB VMEM).
                    return pl.BlockSpec(shape, idx, pipeline_mode=pl.Buffered(1))
                except TypeError:
                    pass
            return pl.BlockSpec(shape, idx)

        return pl.pallas_call(
            kernel,
            out_shape=jax.ShapeDtypeStruct((N, Lq, E), jnp.float32),
            grid_spec=pltpu.PrefetchScalarGridSpec(
                num_scalar_prefetch=0,
                grid=(N, num_q),
                in_specs=[
                    pl.BlockSpec((1, block_q, E), lambda b, qi: (b, qi, 0)),
                    pl.BlockSpec((1, heads, block_q, hd), lambda b, qi: (b, 0, qi, 0)),
                    pl.BlockSpec((1, heads, Lk, hd), lambda b, qi: (b, 0, 0, 0)),
                    pl.BlockSpec((1, heads, Lk, hd), lambda b, qi: (b, 0, 0, 0)),
                    pl.BlockSpec((1, 1, Lk), lambda b, qi: (b, 0, 0)),
                    wspec((hd, hd)),
                    wspec((E, E)), wspec((1, E)),
                    wspec((1, E)), wspec((1, E)),
                    wspec((E, H)), wspec((1, H)),
                    wspec((H, E)), wspec((1, E)),
                    wspec((1, E)), wspec((1, E)),
                ],
                out_specs=pl.BlockSpec((1, block_q, E), lambda b, qi: (b, qi, 0)),
                scratch_shapes=[pltpu.VMEM((block_q, E), cdt)],
            ),
            compiler_params=pltpu.CompilerParams(
                dimension_semantics=("parallel", "parallel"),
                vmem_limit_bytes=vmem_limit),
            cost_estimate=cost,
        )(q_res, q_h, k_p, v_p, bias,
          wq,
          wo, params["bo"],
          params["g1"], params["be1"],
          w1, params["bf1"],
          w2, params["bf2"],
          params["g2"], params["be2"])

    try:
        return _build(True)
    except Exception:
        # Fallback for jax builds without BlockSpec pipeline_mode support:
        # identical kernel, default (double-buffered) weight blocks.
        return _build(False)


def init_params(rng, embed_size, heads, forward_expansion):
    hd = embed_size // heads
    H = forward_expansion * embed_size
    keys = jax.random.split(rng, 8)
    scale_hd = 1.0 / math.sqrt(hd)
    scale_e = 1.0 / math.sqrt(embed_size)
    scale_h = 1.0 / math.sqrt(H)
    return {
        # stored as (in, out) == PyTorch weight.T
        "wv": jax.random.uniform(keys[0], (hd, hd), jnp.float32, -scale_hd, scale_hd),
        "wk": jax.random.uniform(keys[1], (hd, hd), jnp.float32, -scale_hd, scale_hd),
        "wq": jax.random.uniform(keys[2], (hd, hd), jnp.float32, -scale_hd, scale_hd),
        "wo": jax.random.uniform(keys[3], (embed_size, embed_size), jnp.float32, -scale_e, scale_e),
        "bo": jax.random.uniform(keys[4], (1, embed_size), jnp.float32, -scale_e, scale_e),
        "g1": jnp.ones((1, embed_size), jnp.float32),
        "be1": jnp.zeros((1, embed_size), jnp.float32),
        "w1": jax.random.uniform(keys[5], (embed_size, H), jnp.float32, -scale_e, scale_e),
        "bf1": jax.random.uniform(keys[6], (1, H), jnp.float32, -scale_e, scale_e),
        "w2": jax.random.uniform(keys[7], (H, embed_size), jnp.float32, -scale_h, scale_h),
        "bf2": jnp.zeros((1, embed_size), jnp.float32),
        "g2": jnp.ones((1, embed_size), jnp.float32),
        "be2": jnp.zeros((1, embed_size), jnp.float32),
    }


if __name__ == "__main__":
    # Small demo shapes; real configs should keep E a multiple of 128 so the
    # output stores are lane-dense.
    N, L, E = 2, 8, 32
    heads, forward_expansion = 4, 4

    root = jax.random.PRNGKey(0)
    k_p, k_v, k_k, k_q = jax.random.split(root, 4)
    params = init_params(k_p, E, heads, forward_expansion)

    value = jax.random.normal(k_v, (N, L, E), jnp.float32)
    key = jax.random.normal(k_k, (N, L, E), jnp.float32)
    query = jax.random.normal(k_q, (N, L, E), jnp.float32)
    # mask: attend everywhere except the last key position of batch 1
    mask = jnp.ones((N, 1, L), jnp.float32).at[1, 0, L - 1].set(0.0)

    out = transformer_block(value, key, query, mask, params, heads=heads)
    jax.block_until_ready(out)
    assert out.shape == (N, L, E)
    assert bool(jnp.all(jnp.isfinite(out)))
    print("KERNEL_OK")
</pallas_src>

<mosaic_0001>
module attributes {stable_mosaic.version = 11 : i64} {
  func.func @transformer_block_kernel(%arg0: i32, %arg1: i32, %arg2: memref<1x8x32xbf16, #tpu.memory_space<vmem>>, %arg3: memref<1x4x8x8xbf16, #tpu.memory_space<vmem>>, %arg4: memref<1x4x8x8xbf16, #tpu.memory_space<vmem>>, %arg5: memref<1x4x8x8xbf16, #tpu.memory_space<vmem>>, %arg6: memref<1x1x8xf32, #tpu.memory_space<vmem>>, %arg7: memref<8x8xbf16, #tpu.memory_space<vmem>>, %arg8: memref<32x32xbf16, #tpu.memory_space<vmem>>, %arg9: memref<1x32xf32, #tpu.memory_space<vmem>>, %arg10: memref<1x32xf32, #tpu.memory_space<vmem>>, %arg11: memref<1x32xf32, #tpu.memory_space<vmem>>, %arg12: memref<32x128xbf16, #tpu.memory_space<vmem>>, %arg13: memref<1x128xf32, #tpu.memory_space<vmem>>, %arg14: memref<128x32xbf16, #tpu.memory_space<vmem>>, %arg15: memref<1x32xf32, #tpu.memory_space<vmem>>, %arg16: memref<1x32xf32, #tpu.memory_space<vmem>>, %arg17: memref<1x32xf32, #tpu.memory_space<vmem>>, %arg18: memref<1x8x32xf32, #tpu.memory_space<vmem>>, %arg19: memref<8x32xbf16, #tpu.memory_space<vmem>>) attributes {dimension_semantics = [#tpu.dimension_semantics<parallel>, #tpu.dimension_semantics<parallel>], iteration_bounds = array<i64: 2, 1>, scalar_prefetch = 0 : i64, scratch_operands = 1 : i64, tpu.core_type = #tpu.core_type<tc>, window_params = [{transform_indices = @transform_0, window_bounds = array<i64: 1, 8, 32>}, {transform_indices = @transform_1, window_bounds = array<i64: 1, 4, 8, 8>}, {transform_indices = @transform_2, window_bounds = array<i64: 1, 4, 8, 8>}, {transform_indices = @transform_3, window_bounds = array<i64: 1, 4, 8, 8>}, {transform_indices = @transform_4, window_bounds = array<i64: 1, 1, 8>}, {pipeline_mode = #tpu.pipeline_mode<synchronous>, transform_indices = @transform_5, window_bounds = array<i64: 8, 8>}, {pipeline_mode = #tpu.pipeline_mode<synchronous>, transform_indices = @transform_6, window_bounds = array<i64: 32, 32>}, {pipeline_mode = #tpu.pipeline_mode<synchronous>, transform_indices = @transform_7, window_bounds = array<i64: 1, 32>}, {pipeline_mode = #tpu.pipeline_mode<synchronous>, transform_indices = @transform_8, window_bounds = array<i64: 1, 32>}, {pipeline_mode = #tpu.pipeline_mode<synchronous>, transform_indices = @transform_9, window_bounds = array<i64: 1, 32>}, {pipeline_mode = #tpu.pipeline_mode<synchronous>, transform_indices = @transform_10, window_bounds = array<i64: 32, 128>}, {pipeline_mode = #tpu.pipeline_mode<synchronous>, transform_indices = @transform_11, window_bounds = array<i64: 1, 128>}, {pipeline_mode = #tpu.pipeline_mode<synchronous>, transform_indices = @transform_12, window_bounds = array<i64: 128, 32>}, {pipeline_mode = #tpu.pipeline_mode<synchronous>, transform_indices = @transform_13, window_bounds = array<i64: 1, 32>}, {pipeline_mode = #tpu.pipeline_mode<synchronous>, transform_indices = @transform_14, window_bounds = array<i64: 1, 32>}, {pipeline_mode = #tpu.pipeline_mode<synchronous>, transform_indices = @transform_15, window_bounds = array<i64: 1, 32>}, {transform_indices = @transform_16, window_bounds = array<i64: 1, 8, 32>}]} {
    %c0 = arith.constant 0 : index
    %c0_0 = arith.constant 0 : index
    %c0_1 = arith.constant 0 : index
    %0 = vector.load %arg6[%c0, %c0_0, %c0_1] : memref<1x1x8xf32, #tpu.memory_space<vmem>>, vector<1x1x8xf32>
    %1 = vector.shape_cast %0 : vector<1x1x8xf32> to vector<1x8xf32>
    %c0_2 = arith.constant 0 : index
    %c0_3 = arith.constant 0 : index
    %c0_4 = arith.constant 0 : index
    %c0_5 = arith.constant 0 : index
    %2 = vector.load %arg3[%c0_2, %c0_3, %c0_4, %c0_5] : memref<1x4x8x8xbf16, #tpu.memory_space<vmem>>, vector<1x4x8x8xbf16>
    %3 = vector.shape_cast %2 : vector<1x4x8x8xbf16> to vector<4x8x8xbf16>
    %4 = vector.shape_cast %3 : vector<4x8x8xbf16> to vector<32x8xbf16>
    %c0_6 = arith.constant 0 : index
    %c0_7 = arith.constant 0 : index
    %5 = vector.load %arg7[%c0_6, %c0_7] : memref<8x8xbf16, #tpu.memory_space<vmem>>, vector<8x8xbf16>
    %cst = arith.constant dense<0.000000e+00> : vector<32x8xf32>
    %6 = tpu.matmul %4, %5, %cst {dimension_numbers = #tpu.dot_dimension_numbers<[1], [0], [0], [1], [0, 0, 1, 1], [], []>} : vector<32x8xbf16>, vector<8x8xbf16>, vector<32x8xf32> -> vector<32x8xf32>
    %7 = arith.truncf %6 : vector<32x8xf32> to vector<32x8xbf16>
    %8 = vector.shape_cast %7 : vector<32x8xbf16> to vector<4x8x8xbf16>
    %c0_8 = arith.constant 0 : index
    %c0_9 = arith.constant 0 : index
    %c0_10 = arith.constant 0 : index
    %c0_11 = arith.constant 0 : index
    %9 = vector.load %arg4[%c0_8, %c0_9, %c0_10, %c0_11] : memref<1x4x8x8xbf16, #tpu.memory_space<vmem>>, vector<1x4x8x8xbf16>
    %10 = vector.shape_cast %9 : vector<1x4x8x8xbf16> to vector<4x8x8xbf16>
    %c0_12 = arith.constant 0 : index
    %c0_13 = arith.constant 0 : index
    %c0_14 = arith.constant 0 : index
    %c0_15 = arith.constant 0 : index
    %11 = vector.load %arg5[%c0_12, %c0_13, %c0_14, %c0_15] : memref<1x4x8x8xbf16, #tpu.memory_space<vmem>>, vector<1x4x8x8xbf16>
    %12 = vector.shape_cast %11 : vector<1x4x8x8xbf16> to vector<4x8x8xbf16>
    "tpu.trace_start"() <{level = 10 : i32, message = "hqd,hkd->hqk"}> : () -> ()
    %cst_16 = arith.constant dense<0.000000e+00> : vector<4x8x8xf32>
    %13 = tpu.matmul %8, %10, %cst_16 {dimension_numbers = #tpu.dot_dimension_numbers<[2], [2], [1], [1], [0, 0, 0, 1, 1, 1], [0], [0]>} : vector<4x8x8xbf16>, vector<4x8x8xbf16>, vector<4x8x8xf32> -> vector<4x8x8xf32>
    "tpu.trace_stop"() : () -> ()
    %14 = vector.shape_cast %1 : vector<1x8xf32> to vector<1x1x8xf32>
    %15 = vector.broadcast %14 : vector<1x1x8xf32> to vector<4x8x8xf32>
    %16 = arith.addf %13, %15 : vector<4x8x8xf32>
    %cst_17 = arith.constant dense<0xFF800000> : vector<4x8xf32>
    %17 = vector.multi_reduction <maximumf>, %16, %cst_17 [2] : vector<4x8x8xf32> to vector<4x8xf32>
    %18 = vector.shape_cast %17 : vector<4x8xf32> to vector<4x8x1xf32>
    %19 = vector.broadcast %18 : vector<4x8x1xf32> to vector<4x8x8xf32>
    %20 = arith.subf %16, %19 : vector<4x8x8xf32>
    %21 = math.exp %20 : vector<4x8x8xf32>
    %cst_18 = arith.constant dense<0.000000e+00> : vector<4x8xf32>
    %22 = vector.multi_reduction <add>, %21, %cst_18 [2] : vector<4x8x8xf32> to vector<4x8xf32>
    %23 = vector.shape_cast %22 : vector<4x8xf32> to vector<4x8x1xf32>
    %24 = tpu.reciprocal %23 {approx = true} : vector<4x8x1xf32> -> vector<4x8x1xf32>
    %25 = vector.broadcast %24 : vector<4x8x1xf32> to vector<4x8x8xf32>
    %26 = arith.mulf %21, %25 : vector<4x8x8xf32>
    %27 = arith.truncf %26 : vector<4x8x8xf32> to vector<4x8x8xbf16>
    "tpu.trace_start"() <{level = 10 : i32, message = "hqk,hkd->hqd"}> : () -> ()
    %cst_19 = arith.constant dense<0.000000e+00> : vector<4x8x8xf32>
    %28 = tpu.matmul %27, %12, %cst_19 {dimension_numbers = #tpu.dot_dimension_numbers<[2], [1], [1], [2], [0, 0, 0, 1, 1, 2], [0], [0]>} : vector<4x8x8xbf16>, vector<4x8x8xbf16>, vector<4x8x8xf32> -> vector<4x8x8xf32>
    "tpu.trace_stop"() : () -> ()
    %29 = arith.truncf %28 : vector<4x8x8xf32> to vector<4x8x8xbf16>
    %30 = vector.extract_strided_slice %29 {offsets = [0, 0, 0], sizes = [1, 8, 8], strides = [1, 1, 1]} : vector<4x8x8xbf16> to vector<1x8x8xbf16>
    %31 = vector.shape_cast %30 : vector<1x8x8xbf16> to vector<8x8xbf16>
    %c0_20 = arith.constant 0 : index
    %c0_21 = arith.constant 0 : index
    %32 = vector.load %arg19[%c0_20, %c0_21] : memref<8x32xbf16, #tpu.memory_space<vmem>>, vector<8x8xbf16>
    tpu.vector_store %arg19[%c0_20, %c0_21], %31 {strides = array<i32>} : memref<8x32xbf16, #tpu.memory_space<vmem>>, vector<8x8xbf16>,
    %33 = vector.extract_strided_slice %29 {offsets = [1, 0, 0], sizes = [1, 8, 8], strides = [1, 1, 1]} : vector<4x8x8xbf16> to vector<1x8x8xbf16>
    %34 = vector.shape_cast %33 : vector<1x8x8xbf16> to vector<8x8xbf16>
    %c0_22 = arith.constant 0 : index
    %c8 = arith.constant 8 : index
    %35 = vector.load %arg19[%c0_22, %c8] : memref<8x32xbf16, #tpu.memory_space<vmem>>, vector<8x8xbf16>
    tpu.vector_store %arg19[%c0_22, %c8], %34 {strides = array<i32>} : memref<8x32xbf16, #tpu.memory_space<vmem>>, vector<8x8xbf16>,
    %36 = vector.extract_strided_slice %29 {offsets = [2, 0, 0], sizes = [1, 8, 8], strides = [1, 1, 1]} : vector<4x8x8xbf16> to vector<1x8x8xbf16>
    %37 = vector.shape_cast %36 : vector<1x8x8xbf16> to vector<8x8xbf16>
    %c0_23 = arith.constant 0 : index
    %c16 = arith.constant 16 : index
    %38 = vector.load %arg19[%c0_23, %c16] : memref<8x32xbf16, #tpu.memory_space<vmem>>, vector<8x8xbf16>
    tpu.vector_store %arg19[%c0_23, %c16], %37 {strides = array<i32>} : memref<8x32xbf16, #tpu.memory_space<vmem>>, vector<8x8xbf16>,
    %39 = vector.extract_strided_slice %29 {offsets = [3, 0, 0], sizes = [1, 8, 8], strides = [1, 1, 1]} : vector<4x8x8xbf16> to vector<1x8x8xbf16>
    %40 = vector.shape_cast %39 : vector<1x8x8xbf16> to vector<8x8xbf16>
    %c0_24 = arith.constant 0 : index
    %c24 = arith.constant 24 : index
    %41 = vector.load %arg19[%c0_24, %c24] : memref<8x32xbf16, #tpu.memory_space<vmem>>, vector<8x8xbf16>
    tpu.vector_store %arg19[%c0_24, %c24], %40 {strides = array<i32>} : memref<8x32xbf16, #tpu.memory_space<vmem>>, vector<8x8xbf16>,
    %c0_25 = arith.constant 0 : index
    %c0_26 = arith.constant 0 : index
    %42 = vector.load %arg19[%c0_25, %c0_26] : memref<8x32xbf16, #tpu.memory_space<vmem>>, vector<8x32xbf16>
    %c0_27 = arith.constant 0 : index
    %c0_28 = arith.constant 0 : index
    %43 = vector.load %arg8[%c0_27, %c0_28] : memref<32x32xbf16, #tpu.memory_space<vmem>>, vector<32x32xbf16>
    %cst_29 = arith.constant dense<0.000000e+00> : vector<8x32xf32>
    %44 = tpu.matmul %42, %43, %cst_29 {dimension_numbers = #tpu.dot_dimension_numbers<[1], [0], [0], [1], [0, 0, 1, 1], [], []>} : vector<8x32xbf16>, vector<32x32xbf16>, vector<8x32xf32> -> vector<8x32xf32>
    %c0_30 = arith.constant 0 : index
    %c0_31 = arith.constant 0 : index
    %45 = vector.load %arg9[%c0_30, %c0_31] : memref<1x32xf32, #tpu.memory_space<vmem>>, vector<1x32xf32>
    %46 = vector.broadcast %45 : vector<1x32xf32> to vector<8x32xf32>
    %47 = arith.addf %44, %46 : vector<8x32xf32>
    %c0_32 = arith.constant 0 : index
    %c0_33 = arith.constant 0 : index
    %c0_34 = arith.constant 0 : index
    %48 = vector.load %arg2[%c0_32, %c0_33, %c0_34] : memref<1x8x32xbf16, #tpu.memory_space<vmem>>, vector<1x8x32xbf16>
    %49 = vector.shape_cast %48 : vector<1x8x32xbf16> to vector<8x32xbf16>
    %50 = arith.extf %49 : vector<8x32xbf16> to vector<8x32xf32>
    %51 = arith.addf %47, %50 : vector<8x32xf32>
    %c0_35 = arith.constant 0 : index
    %c0_36 = arith.constant 0 : index
    %52 = vector.load %arg10[%c0_35, %c0_36] : memref<1x32xf32, #tpu.memory_space<vmem>>, vector<1x32xf32>
    %c0_37 = arith.constant 0 : index
    %c0_38 = arith.constant 0 : index
    %53 = vector.load %arg11[%c0_37, %c0_38] : memref<1x32xf32, #tpu.memory_space<vmem>>, vector<1x32xf32>
    %cst_39 = arith.constant dense<0.000000e+00> : vector<8xf32>
    %54 = vector.multi_reduction <add>, %51, %cst_39 [1] : vector<8x32xf32> to vector<8xf32>
    %55 = vector.shape_cast %54 : vector<8xf32> to vector<8x1xf32>
    %cst_40 = arith.constant 3.200000e+01 : f32
    %56 = vector.broadcast %cst_40 : f32 to vector<8x1xf32>
    %57 = arith.divf %55, %56 : vector<8x1xf32>
    %58 = arith.mulf %51, %51 : vector<8x32xf32>
    %cst_41 = arith.constant dense<0.000000e+00> : vector<8xf32>
    %59 = vector.multi_reduction <add>, %58, %cst_41 [1] : vector<8x32xf32> to vector<8xf32>
    %60 = vector.shape_cast %59 : vector<8xf32> to vector<8x1xf32>
    %cst_42 = arith.constant 3.200000e+01 : f32
    %61 = vector.broadcast %cst_42 : f32 to vector<8x1xf32>
    %62 = arith.divf %60, %61 : vector<8x1xf32>
    %63 = arith.mulf %57, %57 : vector<8x1xf32>
    %64 = arith.subf %62, %63 : vector<8x1xf32>
    %65 = vector.broadcast %57 : vector<8x1xf32> to vector<8x32xf32>
    %66 = arith.subf %51, %65 : vector<8x32xf32>
    %cst_43 = arith.constant 9.99999974E-6 : f32
    %67 = vector.broadcast %cst_43 : f32 to vector<8x1xf32>
    %68 = arith.addf %64, %67 : vector<8x1xf32>
    %69 = math.rsqrt %68 : vector<8x1xf32>
    %70 = vector.broadcast %69 : vector<8x1xf32> to vector<8x32xf32>
    %71 = arith.mulf %66, %70 : vector<8x32xf32>
    %72 = vector.broadcast %52 : vector<1x32xf32> to vector<8x32xf32>
    %73 = arith.mulf %71, %72 : vector<8x32xf32>
    %74 = vector.broadcast %53 : vector<1x32xf32> to vector<8x32xf32>
    %75 = arith.addf %73, %74 : vector<8x32xf32>
    %76 = arith.truncf %75 : vector<8x32xf32> to vector<8x32xbf16>
    %c0_44 = arith.constant 0 : index
    %c0_45 = arith.constant 0 : index
    %77 = vector.load %arg12[%c0_44, %c0_45] : memref<32x128xbf16, #tpu.memory_space<vmem>>, vector<32x128xbf16>
    %cst_46 = arith.constant dense<0.000000e+00> : vector<8x128xf32>
    %78 = tpu.matmul %76, %77, %cst_46 {dimension_numbers = #tpu.dot_dimension_numbers<[1], [0], [0], [1], [0, 0, 1, 1], [], []>} : vector<8x32xbf16>, vector<32x128xbf16>, vector<8x128xf32> -> vector<8x128xf32>
    %c0_47 = arith.constant 0 : index
    %c0_48 = arith.constant 0 : index
    %79 = vector.load %arg13[%c0_47, %c0_48] : memref<1x128xf32, #tpu.memory_space<vmem>>, vector<1x128xf32>
    %80 = vector.broadcast %79 : vector<1x128xf32> to vector<8x128xf32>
    %81 = arith.addf %78, %80 : vector<8x128xf32>
    %cst_49 = arith.constant 0.000000e+00 : f32
    %82 = vector.broadcast %cst_49 : f32 to vector<8x128xf32>
    %83 = arith.maximumf %81, %82 : vector<8x128xf32>
    %84 = arith.truncf %83 : vector<8x128xf32> to vector<8x128xbf16>
    %c0_50 = arith.constant 0 : index
    %c0_51 = arith.constant 0 : index
    %85 = vector.load %arg14[%c0_50, %c0_51] : memref<128x32xbf16, #tpu.memory_space<vmem>>, vector<128x32xbf16>
    %cst_52 = arith.constant dense<0.000000e+00> : vector<8x32xf32>
    %86 = tpu.matmul %84, %85, %cst_52 {dimension_numbers = #tpu.dot_dimension_numbers<[1], [0], [0], [1], [0, 0, 1, 1], [], []>} : vector<8x128xbf16>, vector<128x32xbf16>, vector<8x32xf32> -> vector<8x32xf32>
    %c0_53 = arith.constant 0 : index
    %c0_54 = arith.constant 0 : index
    %87 = vector.load %arg15[%c0_53, %c0_54] : memref<1x32xf32, #tpu.memory_space<vmem>>, vector<1x32xf32>
    %88 = vector.broadcast %87 : vector<1x32xf32> to vector<8x32xf32>
    %89 = arith.addf %86, %88 : vector<8x32xf32>
    %90 = arith.addf %89, %75 : vector<8x32xf32>
    %c0_55 = arith.constant 0 : index
    %c0_56 = arith.constant 0 : index
    %91 = vector.load %arg16[%c0_55, %c0_56] : memref<1x32xf32, #tpu.memory_space<vmem>>, vector<1x32xf32>
    %c0_57 = arith.constant 0 : index
    %c0_58 = arith.constant 0 : index
    %92 = vector.load %arg17[%c0_57, %c0_58] : memref<1x32xf32, #tpu.memory_space<vmem>>, vector<1x32xf32>
    %cst_59 = arith.constant dense<0.000000e+00> : vector<8xf32>
    %93 = vector.multi_reduction <add>, %90, %cst_59 [1] : vector<8x32xf32> to vector<8xf32>
    %94 = vector.shape_cast %93 : vector<8xf32> to vector<8x1xf32>
    %cst_60 = arith.constant 3.200000e+01 : f32
    %95 = vector.broadcast %cst_60 : f32 to vector<8x1xf32>
    %96 = arith.divf %94, %95 : vector<8x1xf32>
    %97 = arith.mulf %90, %90 : vector<8x32xf32>
    %cst_61 = arith.constant dense<0.000000e+00> : vector<8xf32>
    %98 = vector.multi_reduction <add>, %97, %cst_61 [1] : vector<8x32xf32> to vector<8xf32>
    %99 = vector.shape_cast %98 : vector<8xf32> to vector<8x1xf32>
    %cst_62 = arith.constant 3.200000e+01 : f32
    %100 = vector.broadcast %cst_62 : f32 to vector<8x1xf32>
    %101 = arith.divf %99, %100 : vector<8x1xf32>
    %102 = arith.mulf %96, %96 : vector<8x1xf32>
    %103 = arith.subf %101, %102 : vector<8x1xf32>
    %104 = vector.broadcast %96 : vector<8x1xf32> to vector<8x32xf32>
    %105 = arith.subf %90, %104 : vector<8x32xf32>
    %cst_63 = arith.constant 9.99999974E-6 : f32
    %106 = vector.broadcast %cst_63 : f32 to vector<8x1xf32>
    %107 = arith.addf %103, %106 : vector<8x1xf32>
    %108 = math.rsqrt %107 : vector<8x1xf32>
    %109 = vector.broadcast %108 : vector<8x1xf32> to vector<8x32xf32>
    %110 = arith.mulf %105, %109 : vector<8x32xf32>
    %111 = vector.broadcast %91 : vector<1x32xf32> to vector<8x32xf32>
    %112 = arith.mulf %110, %111 : vector<8x32xf32>
    %113 = vector.broadcast %92 : vector<1x32xf32> to vector<8x32xf32>
    %114 = arith.addf %112, %113 : vector<8x32xf32>
    %c0_64 = arith.constant 0 : index
    %c0_65 = arith.constant 0 : index
    %c0_66 = arith.constant 0 : index
    %115 = vector.load %arg18[%c0_64, %c0_65, %c0_66] : memref<1x8x32xf32, #tpu.memory_space<vmem>>, vector<1x8x32xf32>
    %116 = vector.shape_cast %115 : vector<1x8x32xf32> to vector<8x32xf32>
    %117 = vector.shape_cast %114 : vector<8x32xf32> to vector<1x8x32xf32>
    tpu.vector_store %arg18[%c0_64, %c0_65, %c0_66], %117 {strides = array<i32>} : memref<1x8x32xf32, #tpu.memory_space<vmem>>, vector<1x8x32xf32>,
    return
  }
  func.func @transform_0(%arg0: i32, %arg1: i32) -> (i32, i32, i32) {
    %c0_i32 = arith.constant 0 : i32
    %c0_i32_0 = arith.constant 0 : i32
    return %arg0, %arg1, %c0_i32 : i32, i32, i32
  }
  func.func @transform_1(%arg0: i32, %arg1: i32) -> (i32, i32, i32, i32) {
    %c0_i32 = arith.constant 0 : i32
    %c0_i32_0 = arith.constant 0 : i32
    %c0_i32_1 = arith.constant 0 : i32
    return %arg0, %c0_i32, %arg1, %c0_i32_0 : i32, i32, i32, i32
  }
  func.func @transform_2(%arg0: i32, %arg1: i32) -> (i32, i32, i32, i32) {
    %c0_i32 = arith.constant 0 : i32
    %c0_i32_0 = arith.constant 0 : i32
    %c0_i32_1 = arith.constant 0 : i32
    %c0_i32_2 = arith.constant 0 : i32
    return %arg0, %c0_i32, %c0_i32_0, %c0_i32_1 : i32, i32, i32, i32
  }
  func.func @transform_3(%arg0: i32, %arg1: i32) -> (i32, i32, i32, i32) {
    %c0_i32 = arith.constant 0 : i32
    %c0_i32_0 = arith.constant 0 : i32
    %c0_i32_1 = arith.constant 0 : i32
    %c0_i32_2 = arith.constant 0 : i32
    return %arg0, %c0_i32, %c0_i32_0, %c0_i32_1 : i32, i32, i32, i32
  }
  func.func @transform_4(%arg0: i32, %arg1: i32) -> (i32, i32, i32) {
    %c0_i32 = arith.constant 0 : i32
    %c0_i32_0 = arith.constant 0 : i32
    %c0_i32_1 = arith.constant 0 : i32
    return %arg0, %c0_i32, %c0_i32_0 : i32, i32, i32
  }
  func.func @transform_5(%arg0: i32, %arg1: i32) -> (i32, i32) {
    %c0_i32 = arith.constant 0 : i32
    %c0_i32_0 = arith.constant 0 : i32
    %c0_i32_1 = arith.constant 0 : i32
    return %c0_i32, %c0_i32_0 : i32, i32
  }
  func.func @transform_6(%arg0: i32, %arg1: i32) -> (i32, i32) {
    %c0_i32 = arith.constant 0 : i32
    %c0_i32_0 = arith.constant 0 : i32
    %c0_i32_1 = arith.constant 0 : i32
    return %c0_i32, %c0_i32_0 : i32, i32
  }
  func.func @transform_7(%arg0: i32, %arg1: i32) -> (i32, i32) {
    %c0_i32 = arith.constant 0 : i32
    %c0_i32_0 = arith.constant 0 : i32
    %c0_i32_1 = arith.constant 0 : i32
    return %c0_i32, %c0_i32_0 : i32, i32
  }
  func.func @transform_8(%arg0: i32, %arg1: i32) -> (i32, i32) {
    %c0_i32 = arith.constant 0 : i32
    %c0_i32_0 = arith.constant 0 : i32
    %c0_i32_1 = arith.constant 0 : i32
    return %c0_i32, %c0_i32_0 : i32, i32
  }
  func.func @transform_9(%arg0: i32, %arg1: i32) -> (i32, i32) {
    %c0_i32 = arith.constant 0 : i32
    %c0_i32_0 = arith.constant 0 : i32
    %c0_i32_1 = arith.constant 0 : i32
    return %c0_i32, %c0_i32_0 : i32, i32
  }
  func.func @transform_10(%arg0: i32, %arg1: i32) -> (i32, i32) {
    %c0_i32 = arith.constant 0 : i32
    %c0_i32_0 = arith.constant 0 : i32
    %c0_i32_1 = arith.constant 0 : i32
    return %c0_i32, %c0_i32_0 : i32, i32
  }
  func.func @transform_11(%arg0: i32, %arg1: i32) -> (i32, i32) {
    %c0_i32 = arith.constant 0 : i32
    %c0_i32_0 = arith.constant 0 : i32
    %c0_i32_1 = arith.constant 0 : i32
    return %c0_i32, %c0_i32_0 : i32, i32
  }
  func.func @transform_12(%arg0: i32, %arg1: i32) -> (i32, i32) {
    %c0_i32 = arith.constant 0 : i32
    %c0_i32_0 = arith.constant 0 : i32
    %c0_i32_1 = arith.constant 0 : i32
    return %c0_i32, %c0_i32_0 : i32, i32
  }
  func.func @transform_13(%arg0: i32, %arg1: i32) -> (i32, i32) {
    %c0_i32 = arith.constant 0 : i32
    %c0_i32_0 = arith.constant 0 : i32
    %c0_i32_1 = arith.constant 0 : i32
    return %c0_i32, %c0_i32_0 : i32, i32
  }
  func.func @transform_14(%arg0: i32, %arg1: i32) -> (i32, i32) {
    %c0_i32 = arith.constant 0 : i32
    %c0_i32_0 = arith.constant 0 : i32
    %c0_i32_1 = arith.constant 0 : i32
    return %c0_i32, %c0_i32_0 : i32, i32
  }
  func.func @transform_15(%arg0: i32, %arg1: i32) -> (i32, i32) {
    %c0_i32 = arith.constant 0 : i32
    %c0_i32_0 = arith.constant 0 : i32
    %c0_i32_1 = arith.constant 0 : i32
    return %c0_i32, %c0_i32_0 : i32, i32
  }
  func.func @transform_16(%arg0: i32, %arg1: i32) -> (i32, i32, i32) {
    %c0_i32 = arith.constant 0 : i32
    %c0_i32_0 = arith.constant 0 : i32
    return %arg0, %arg1, %c0_i32 : i32, i32, i32
  }
}

module attributes {stable_mosaic.version = 11 : i64} {
  func.func @transformer_block_kernel(%arg0: i32, %arg1: i32, %arg2: memref<1x8x32xbf16, #tpu.memory_space<vmem>>, %arg3: memref<1x4x8x8xbf16, #tpu.memory_space<vmem>>, %arg4: memref<1x4x8x8xbf16, #tpu.memory_space<vmem>>, %arg5: memref<1x4x8x8xbf16, #tpu.memory_space<vmem>>, %arg6: memref<1x1x8xf32, #tpu.memory_space<vmem>>, %arg7: memref<8x8xbf16, #tpu.memory_space<vmem>>, %arg8: memref<32x32xbf16, #tpu.memory_space<vmem>>, %arg9: memref<1x32xf32, #tpu.memory_space<vmem>>, %arg10: memref<1x32xf32, #tpu.memory_space<vmem>>, %arg11: memref<1x32xf32, #tpu.memory_space<vmem>>, %arg12: memref<32x128xbf16, #tpu.memory_space<vmem>>, %arg13: memref<1x128xf32, #tpu.memory_space<vmem>>, %arg14: memref<128x32xbf16, #tpu.memory_space<vmem>>, %arg15: memref<1x32xf32, #tpu.memory_space<vmem>>, %arg16: memref<1x32xf32, #tpu.memory_space<vmem>>, %arg17: memref<1x32xf32, #tpu.memory_space<vmem>>, %arg18: memref<1x8x32xf32, #tpu.memory_space<vmem>>, %arg19: memref<8x32xbf16, #tpu.memory_space<vmem>>) attributes {dimension_semantics = [#tpu.dimension_semantics<parallel>, #tpu.dimension_semantics<parallel>], iteration_bounds = array<i64: 2, 1>, scalar_prefetch = 0 : i64, scratch_operands = 1 : i64, tpu.core_type = #tpu.core_type<tc>, window_params = [{transform_indices = @transform_0, window_bounds = array<i64: 1, 8, 32>}, {transform_indices = @transform_1, window_bounds = array<i64: 1, 4, 8, 8>}, {transform_indices = @transform_2, window_bounds = array<i64: 1, 4, 8, 8>}, {transform_indices = @transform_3, window_bounds = array<i64: 1, 4, 8, 8>}, {transform_indices = @transform_4, window_bounds = array<i64: 1, 1, 8>}, {pipeline_mode = #tpu.pipeline_mode<synchronous>, transform_indices = @transform_5, window_bounds = array<i64: 8, 8>}, {pipeline_mode = #tpu.pipeline_mode<synchronous>, transform_indices = @transform_6, window_bounds = array<i64: 32, 32>}, {pipeline_mode = #tpu.pipeline_mode<synchronous>, transform_indices = @transform_7, window_bounds = array<i64: 1, 32>}, {pipeline_mode = #tpu.pipeline_mode<synchronous>, transform_indices = @transform_8, window_bounds = array<i64: 1, 32>}, {pipeline_mode = #tpu.pipeline_mode<synchronous>, transform_indices = @transform_9, window_bounds = array<i64: 1, 32>}, {pipeline_mode = #tpu.pipeline_mode<synchronous>, transform_indices = @transform_10, window_bounds = array<i64: 32, 128>}, {pipeline_mode = #tpu.pipeline_mode<synchronous>, transform_indices = @transform_11, window_bounds = array<i64: 1, 128>}, {pipeline_mode = #tpu.pipeline_mode<synchronous>, transform_indices = @transform_12, window_bounds = array<i64: 128, 32>}, {pipeline_mode = #tpu.pipeline_mode<synchronous>, transform_indices = @transform_13, window_bounds = array<i64: 1, 32>}, {pipeline_mode = #tpu.pipeline_mode<synchronous>, transform_indices = @transform_14, window_bounds = array<i64: 1, 32>}, {pipeline_mode = #tpu.pipeline_mode<synchronous>, transform_indices = @transform_15, window_bounds = array<i64: 1, 32>}, {transform_indices = @transform_16, window_bounds = array<i64: 1, 8, 32>}]} {
    %c0 = arith.constant 0 : index
    %c0_0 = arith.constant 0 : index
    %c0_1 = arith.constant 0 : index
    %0 = vector.load %arg6[%c0, %c0_0, %c0_1] : memref<1x1x8xf32, #tpu.memory_space<vmem>>, vector<1x1x8xf32>
    %1 = vector.shape_cast %0 : vector<1x1x8xf32> to vector<1x8xf32>
    %c0_2 = arith.constant 0 : index
    %c0_3 = arith.constant 0 : index
    %c0_4 = arith.constant 0 : index
    %c0_5 = arith.constant 0 : index
    %2 = vector.load %arg3[%c0_2, %c0_3, %c0_4, %c0_5] : memref<1x4x8x8xbf16, #tpu.memory_space<vmem>>, vector<1x4x8x8xbf16>
    %3 = vector.shape_cast %2 : vector<1x4x8x8xbf16> to vector<4x8x8xbf16>
    %4 = vector.shape_cast %3 : vector<4x8x8xbf16> to vector<32x8xbf16>
    %c0_6 = arith.constant 0 : index
    %c0_7 = arith.constant 0 : index
    %5 = vector.load %arg7[%c0_6, %c0_7] : memref<8x8xbf16, #tpu.memory_space<vmem>>, vector<8x8xbf16>
    %cst = arith.constant dense<0.000000e+00> : vector<32x8xf32>
    %6 = tpu.matmul %4, %5, %cst {dimension_numbers = #tpu.dot_dimension_numbers<[1], [0], [0], [1], [0, 0, 1, 1], [], []>} : vector<32x8xbf16>, vector<8x8xbf16>, vector<32x8xf32> -> vector<32x8xf32>
    %7 = arith.truncf %6 : vector<32x8xf32> to vector<32x8xbf16>
    %8 = vector.shape_cast %7 : vector<32x8xbf16> to vector<4x8x8xbf16>
    %c0_8 = arith.constant 0 : index
    %c0_9 = arith.constant 0 : index
    %c0_10 = arith.constant 0 : index
    %c0_11 = arith.constant 0 : index
    %9 = vector.load %arg4[%c0_8, %c0_9, %c0_10, %c0_11] : memref<1x4x8x8xbf16, #tpu.memory_space<vmem>>, vector<1x4x8x8xbf16>
    %10 = vector.shape_cast %9 : vector<1x4x8x8xbf16> to vector<4x8x8xbf16>
    %c0_12 = arith.constant 0 : index
    %c0_13 = arith.constant 0 : index
    %c0_14 = arith.constant 0 : index
    %c0_15 = arith.constant 0 : index
    %11 = vector.load %arg5[%c0_12, %c0_13, %c0_14, %c0_15] : memref<1x4x8x8xbf16, #tpu.memory_space<vmem>>, vector<1x4x8x8xbf16>
    %12 = vector.shape_cast %11 : vector<1x4x8x8xbf16> to vector<4x8x8xbf16>
    "tpu.trace_start"() <{level = 10 : i32, message = "hqd,hkd->hqk"}> : () -> ()
    %cst_16 = arith.constant dense<0.000000e+00> : vector<4x8x8xf32>
    %13 = tpu.matmul %8, %10, %cst_16 {dimension_numbers = #tpu.dot_dimension_numbers<[2], [2], [1], [1], [0, 0, 0, 1, 1, 1], [0], [0]>} : vector<4x8x8xbf16>, vector<4x8x8xbf16>, vector<4x8x8xf32> -> vector<4x8x8xf32>
    "tpu.trace_stop"() : () -> ()
    %14 = vector.shape_cast %1 : vector<1x8xf32> to vector<1x1x8xf32>
    %15 = vector.broadcast %14 : vector<1x1x8xf32> to vector<4x8x8xf32>
    %16 = arith.addf %13, %15 : vector<4x8x8xf32>
    %cst_17 = arith.constant dense<0xFF800000> : vector<4x8xf32>
    %17 = vector.multi_reduction <maximumf>, %16, %cst_17 [2] : vector<4x8x8xf32> to vector<4x8xf32>
    %18 = vector.shape_cast %17 : vector<4x8xf32> to vector<4x8x1xf32>
    %19 = vector.broadcast %18 : vector<4x8x1xf32> to vector<4x8x8xf32>
    %20 = arith.subf %16, %19 : vector<4x8x8xf32>
    %21 = math.exp %20 : vector<4x8x8xf32>
    %cst_18 = arith.constant dense<0.000000e+00> : vector<4x8xf32>
    %22 = vector.multi_reduction <add>, %21, %cst_18 [2] : vector<4x8x8xf32> to vector<4x8xf32>
    %23 = vector.shape_cast %22 : vector<4x8xf32> to vector<4x8x1xf32>
    %24 = tpu.reciprocal %23 {approx = true} : vector<4x8x1xf32> -> vector<4x8x1xf32>
    %25 = vector.broadcast %24 : vector<4x8x1xf32> to vector<4x8x8xf32>
    %26 = arith.mulf %21, %25 : vector<4x8x8xf32>
    %27 = arith.truncf %26 : vector<4x8x8xf32> to vector<4x8x8xbf16>
    "tpu.trace_start"() <{level = 10 : i32, message = "hqk,hkd->hqd"}> : () -> ()
    %cst_19 = arith.constant dense<0.000000e+00> : vector<4x8x8xf32>
    %28 = tpu.matmul %27, %12, %cst_19 {dimension_numbers = #tpu.dot_dimension_numbers<[2], [1], [1], [2], [0, 0, 0, 1, 1, 2], [0], [0]>} : vector<4x8x8xbf16>, vector<4x8x8xbf16>, vector<4x8x8xf32> -> vector<4x8x8xf32>
    "tpu.trace_stop"() : () -> ()
    %29 = arith.truncf %28 : vector<4x8x8xf32> to vector<4x8x8xbf16>
    %30 = vector.extract_strided_slice %29 {offsets = [0, 0, 0], sizes = [1, 8, 8], strides = [1, 1, 1]} : vector<4x8x8xbf16> to vector<1x8x8xbf16>
    %31 = vector.shape_cast %30 : vector<1x8x8xbf16> to vector<8x8xbf16>
    %c0_20 = arith.constant 0 : index
    %c0_21 = arith.constant 0 : index
    %32 = vector.load %arg19[%c0_20, %c0_21] : memref<8x32xbf16, #tpu.memory_space<vmem>>, vector<8x8xbf16>
    tpu.vector_store %arg19[%c0_20, %c0_21], %31 {strides = array<i32>} : memref<8x32xbf16, #tpu.memory_space<vmem>>, vector<8x8xbf16>,
    %33 = vector.extract_strided_slice %29 {offsets = [1, 0, 0], sizes = [1, 8, 8], strides = [1, 1, 1]} : vector<4x8x8xbf16> to vector<1x8x8xbf16>
    %34 = vector.shape_cast %33 : vector<1x8x8xbf16> to vector<8x8xbf16>
    %c0_22 = arith.constant 0 : index
    %c8 = arith.constant 8 : index
    %35 = vector.load %arg19[%c0_22, %c8] : memref<8x32xbf16, #tpu.memory_space<vmem>>, vector<8x8xbf16>
    tpu.vector_store %arg19[%c0_22, %c8], %34 {strides = array<i32>} : memref<8x32xbf16, #tpu.memory_space<vmem>>, vector<8x8xbf16>,
    %36 = vector.extract_strided_slice %29 {offsets = [2, 0, 0], sizes = [1, 8, 8], strides = [1, 1, 1]} : vector<4x8x8xbf16> to vector<1x8x8xbf16>
    %37 = vector.shape_cast %36 : vector<1x8x8xbf16> to vector<8x8xbf16>
    %c0_23 = arith.constant 0 : index
    %c16 = arith.constant 16 : index
    %38 = vector.load %arg19[%c0_23, %c16] : memref<8x32xbf16, #tpu.memory_space<vmem>>, vector<8x8xbf16>
    tpu.vector_store %arg19[%c0_23, %c16], %37 {strides = array<i32>} : memref<8x32xbf16, #tpu.memory_space<vmem>>, vector<8x8xbf16>,
    %39 = vector.extract_strided_slice %29 {offsets = [3, 0, 0], sizes = [1, 8, 8], strides = [1, 1, 1]} : vector<4x8x8xbf16> to vector<1x8x8xbf16>
    %40 = vector.shape_cast %39 : vector<1x8x8xbf16> to vector<8x8xbf16>
    %c0_24 = arith.constant 0 : index
    %c24 = arith.constant 24 : index
    %41 = vector.load %arg19[%c0_24, %c24] : memref<8x32xbf16, #tpu.memory_space<vmem>>, vector<8x8xbf16>
    tpu.vector_store %arg19[%c0_24, %c24], %40 {strides = array<i32>} : memref<8x32xbf16, #tpu.memory_space<vmem>>, vector<8x8xbf16>,
    %c0_25 = arith.constant 0 : index
    %c0_26 = arith.constant 0 : index
    %42 = vector.load %arg19[%c0_25, %c0_26] : memref<8x32xbf16, #tpu.memory_space<vmem>>, vector<8x32xbf16>
    %c0_27 = arith.constant 0 : index
    %c0_28 = arith.constant 0 : index
    %43 = vector.load %arg8[%c0_27, %c0_28] : memref<32x32xbf16, #tpu.memory_space<vmem>>, vector<32x32xbf16>
    %cst_29 = arith.constant dense<0.000000e+00> : vector<8x32xf32>
    %44 = tpu.matmul %42, %43, %cst_29 {dimension_numbers = #tpu.dot_dimension_numbers<[1], [0], [0], [1], [0, 0, 1, 1], [], []>} : vector<8x32xbf16>, vector<32x32xbf16>, vector<8x32xf32> -> vector<8x32xf32>
    %c0_30 = arith.constant 0 : index
    %c0_31 = arith.constant 0 : index
    %45 = vector.load %arg9[%c0_30, %c0_31] : memref<1x32xf32, #tpu.memory_space<vmem>>, vector<1x32xf32>
    %46 = vector.broadcast %45 : vector<1x32xf32> to vector<8x32xf32>
    %47 = arith.addf %44, %46 : vector<8x32xf32>
    %c0_32 = arith.constant 0 : index
    %c0_33 = arith.constant 0 : index
    %c0_34 = arith.constant 0 : index
    %48 = vector.load %arg2[%c0_32, %c0_33, %c0_34] : memref<1x8x32xbf16, #tpu.memory_space<vmem>>, vector<1x8x32xbf16>
    %49 = vector.shape_cast %48 : vector<1x8x32xbf16> to vector<8x32xbf16>
    %50 = arith.extf %49 : vector<8x32xbf16> to vector<8x32xf32>
    %51 = arith.addf %47, %50 : vector<8x32xf32>
    %c0_35 = arith.constant 0 : index
    %c0_36 = arith.constant 0 : index
    %52 = vector.load %arg10[%c0_35, %c0_36] : memref<1x32xf32, #tpu.memory_space<vmem>>, vector<1x32xf32>
    %c0_37 = arith.constant 0 : index
    %c0_38 = arith.constant 0 : index
    %53 = vector.load %arg11[%c0_37, %c0_38] : memref<1x32xf32, #tpu.memory_space<vmem>>, vector<1x32xf32>
    %cst_39 = arith.constant dense<0.000000e+00> : vector<8xf32>
    %54 = vector.multi_reduction <add>, %51, %cst_39 [1] : vector<8x32xf32> to vector<8xf32>
    %55 = vector.shape_cast %54 : vector<8xf32> to vector<8x1xf32>
    %cst_40 = arith.constant 3.200000e+01 : f32
    %56 = vector.broadcast %cst_40 : f32 to vector<8x1xf32>
    %57 = arith.divf %55, %56 : vector<8x1xf32>
    %58 = arith.mulf %51, %51 : vector<8x32xf32>
    %cst_41 = arith.constant dense<0.000000e+00> : vector<8xf32>
    %59 = vector.multi_reduction <add>, %58, %cst_41 [1] : vector<8x32xf32> to vector<8xf32>
    %60 = vector.shape_cast %59 : vector<8xf32> to vector<8x1xf32>
    %cst_42 = arith.constant 3.200000e+01 : f32
    %61 = vector.broadcast %cst_42 : f32 to vector<8x1xf32>
    %62 = arith.divf %60, %61 : vector<8x1xf32>
    %63 = arith.mulf %57, %57 : vector<8x1xf32>
    %64 = arith.subf %62, %63 : vector<8x1xf32>
    %65 = vector.broadcast %57 : vector<8x1xf32> to vector<8x32xf32>
    %66 = arith.subf %51, %65 : vector<8x32xf32>
    %cst_43 = arith.constant 9.99999974E-6 : f32
    %67 = vector.broadcast %cst_43 : f32 to vector<8x1xf32>
    %68 = arith.addf %64, %67 : vector<8x1xf32>
    %69 = math.rsqrt %68 : vector<8x1xf32>
    %70 = vector.broadcast %69 : vector<8x1xf32> to vector<8x32xf32>
    %71 = arith.mulf %66, %70 : vector<8x32xf32>
    %72 = vector.broadcast %52 : vector<1x32xf32> to vector<8x32xf32>
    %73 = arith.mulf %71, %72 : vector<8x32xf32>
    %74 = vector.broadcast %53 : vector<1x32xf32> to vector<8x32xf32>
    %75 = arith.addf %73, %74 : vector<8x32xf32>
    %76 = arith.truncf %75 : vector<8x32xf32> to vector<8x32xbf16>
    %c0_44 = arith.constant 0 : index
    %c0_45 = arith.constant 0 : index
    %77 = vector.load %arg12[%c0_44, %c0_45] : memref<32x128xbf16, #tpu.memory_space<vmem>>, vector<32x128xbf16>
    %cst_46 = arith.constant dense<0.000000e+00> : vector<8x128xf32>
    %78 = tpu.matmul %76, %77, %cst_46 {dimension_numbers = #tpu.dot_dimension_numbers<[1], [0], [0], [1], [0, 0, 1, 1], [], []>} : vector<8x32xbf16>, vector<32x128xbf16>, vector<8x128xf32> -> vector<8x128xf32>
    %c0_47 = arith.constant 0 : index
    %c0_48 = arith.constant 0 : index
    %79 = vector.load %arg13[%c0_47, %c0_48] : memref<1x128xf32, #tpu.memory_space<vmem>>, vector<1x128xf32>
    %80 = vector.broadcast %79 : vector<1x128xf32> to vector<8x128xf32>
    %81 = arith.addf %78, %80 : vector<8x128xf32>
    %cst_49 = arith.constant 0.000000e+00 : f32
    %82 = vector.broadcast %cst_49 : f32 to vector<8x128xf32>
    %83 = arith.maximumf %81, %82 : vector<8x128xf32>
    %84 = arith.truncf %83 : vector<8x128xf32> to vector<8x128xbf16>
    %c0_50 = arith.constant 0 : index
    %c0_51 = arith.constant 0 : index
    %85 = vector.load %arg14[%c0_50, %c0_51] : memref<128x32xbf16, #tpu.memory_space<vmem>>, vector<128x32xbf16>
    %cst_52 = arith.constant dense<0.000000e+00> : vector<8x32xf32>
    %86 = tpu.matmul %84, %85, %cst_52 {dimension_numbers = #tpu.dot_dimension_numbers<[1], [0], [0], [1], [0, 0, 1, 1], [], []>} : vector<8x128xbf16>, vector<128x32xbf16>, vector<8x32xf32> -> vector<8x32xf32>
    %c0_53 = arith.constant 0 : index
    %c0_54 = arith.constant 0 : index
    %87 = vector.load %arg15[%c0_53, %c0_54] : memref<1x32xf32, #tpu.memory_space<vmem>>, vector<1x32xf32>
    %88 = vector.broadcast %87 : vector<1x32xf32> to vector<8x32xf32>
    %89 = arith.addf %86, %88 : vector<8x32xf32>
    %90 = arith.addf %89, %75 : vector<8x32xf32>
    %c0_55 = arith.constant 0 : index
    %c0_56 = arith.constant 0 : index
    %91 = vector.load %arg16[%c0_55, %c0_56] : memref<1x32xf32, #tpu.memory_space<vmem>>, vector<1x32xf32>
    %c0_57 = arith.constant 0 : index
    %c0_58 = arith.constant 0 : index
    %92 = vector.load %arg17[%c0_57, %c0_58] : memref<1x32xf32, #tpu.memory_space<vmem>>, vector<1x32xf32>
    %cst_59 = arith.constant dense<0.000000e+00> : vector<8xf32>
    %93 = vector.multi_reduction <add>, %90, %cst_59 [1] : vector<8x32xf32> to vector<8xf32>
    %94 = vector.shape_cast %93 : vector<8xf32> to vector<8x1xf32>
    %cst_60 = arith.constant 3.200000e+01 : f32
    %95 = vector.broadcast %cst_60 : f32 to vector<8x1xf32>
    %96 = arith.divf %94, %95 : vector<8x1xf32>
    %97 = arith.mulf %90, %90 : vector<8x32xf32>
    %cst_61 = arith.constant dense<0.000000e+00> : vector<8xf32>
    %98 = vector.multi_reduction <add>, %97, %cst_61 [1] : vector<8x32xf32> to vector<8xf32>
    %99 = vector.shape_cast %98 : vector<8xf32> to vector<8x1xf32>
    %cst_62 = arith.constant 3.200000e+01 : f32
    %100 = vector.broadcast %cst_62 : f32 to vector<8x1xf32>
    %101 = arith.divf %99, %100 : vector<8x1xf32>
    %102 = arith.mulf %96, %96 : vector<8x1xf32>
    %103 = arith.subf %101, %102 : vector<8x1xf32>
    %104 = vector.broadcast %96 : vector<8x1xf32> to vector<8x32xf32>
    %105 = arith.subf %90, %104 : vector<8x32xf32>
    %cst_63 = arith.constant 9.99999974E-6 : f32
    %106 = vector.broadcast %cst_63 : f32 to vector<8x1xf32>
    %107 = arith.addf %103, %106 : vector<8x1xf32>
    %108 = math.rsqrt %107 : vector<8x1xf32>
    %109 = vector.broadcast %108 : vector<8x1xf32> to vector<8x32xf32>
    %110 = arith.mulf %105, %109 : vector<8x32xf32>
    %111 = vector.broadcast %91 : vector<1x32xf32> to vector<8x32xf32>
    %112 = arith.mulf %110, %111 : vector<8x32xf32>
    %113 = vector.broadcast %92 : vector<1x32xf32> to vector<8x32xf32>
    %114 = arith.addf %112, %113 : vector<8x32xf32>
    %c0_64 = arith.constant 0 : index
    %c0_65 = arith.constant 0 : index
    %c0_66 = arith.constant 0 : index
    %115 = vector.load %arg18[%c0_64, %c0_65, %c0_66] : memref<1x8x32xf32, #tpu.memory_space<vmem>>, vector<1x8x32xf32>
    %116 = vector.shape_cast %115 : vector<1x8x32xf32> to vector<8x32xf32>
    %117 = vector.shape_cast %114 : vector<8x32xf32> to vector<1x8x32xf32>
    tpu.vector_store %arg18[%c0_64, %c0_65, %c0_66], %117 {strides = array<i32>} : memref<1x8x32xf32, #tpu.memory_space<vmem>>, vector<1x8x32xf32>,
    return
  }
  func.func @transform_0(%arg0: i32, %arg1: i32) -> (i32, i32, i32) {
    %c0_i32 = arith.constant 0 : i32
    %c0_i32_0 = arith.constant 0 : i32
    return %arg0, %arg1, %c0_i32 : i32, i32, i32
  }
  func.func @transform_1(%arg0: i32, %arg1: i32) -> (i32, i32, i32, i32) {
    %c0_i32 = arith.constant 0 : i32
    %c0_i32_0 = arith.constant 0 : i32
    %c0_i32_1 = arith.constant 0 : i32
    return %arg0, %c0_i32, %arg1, %c0_i32_0 : i32, i32, i32, i32
  }
  func.func @transform_2(%arg0: i32, %arg1: i32) -> (i32, i32, i32, i32) {
    %c0_i32 = arith.constant 0 : i32
    %c0_i32_0 = arith.constant 0 : i32
    %c0_i32_1 = arith.constant 0 : i32
    %c0_i32_2 = arith.constant 0 : i32
    return %arg0, %c0_i32, %c0_i32_0, %c0_i32_1 : i32, i32, i32, i32
  }
  func.func @transform_3(%arg0: i32, %arg1: i32) -> (i32, i32, i32, i32) {
    %c0_i32 = arith.constant 0 : i32
    %c0_i32_0 = arith.constant 0 : i32
    %c0_i32_1 = arith.constant 0 : i32
    %c0_i32_2 = arith.constant 0 : i32
    return %arg0, %c0_i32, %c0_i32_0, %c0_i32_1 : i32, i32, i32, i32
  }
  func.func @transform_4(%arg0: i32, %arg1: i32) -> (i32, i32, i32) {
    %c0_i32 = arith.constant 0 : i32
    %c0_i32_0 = arith.constant 0 : i32
    %c0_i32_1 = arith.constant 0 : i32
    return %arg0, %c0_i32, %c0_i32_0 : i32, i32, i32
  }
  func.func @transform_5(%arg0: i32, %arg1: i32) -> (i32, i32) {
    %c0_i32 = arith.constant 0 : i32
    %c0_i32_0 = arith.constant 0 : i32
    %c0_i32_1 = arith.constant 0 : i32
    return %c0_i32, %c0_i32_0 : i32, i32
  }
  func.func @transform_6(%arg0: i32, %arg1: i32) -> (i32, i32) {
    %c0_i32 = arith.constant 0 : i32
    %c0_i32_0 = arith.constant 0 : i32
    %c0_i32_1 = arith.constant 0 : i32
    return %c0_i32, %c0_i32_0 : i32, i32
  }
  func.func @transform_7(%arg0: i32, %arg1: i32) -> (i32, i32) {
    %c0_i32 = arith.constant 0 : i32
    %c0_i32_0 = arith.constant 0 : i32
    %c0_i32_1 = arith.constant 0 : i32
    return %c0_i32, %c0_i32_0 : i32, i32
  }
  func.func @transform_8(%arg0: i32, %arg1: i32) -> (i32, i32) {
    %c0_i32 = arith.constant 0 : i32
    %c0_i32_0 = arith.constant 0 : i32
    %c0_i32_1 = arith.constant 0 : i32
    return %c0_i32, %c0_i32_0 : i32, i32
  }
  func.func @transform_9(%arg0: i32, %arg1: i32) -> (i32, i32) {
    %c0_i32 = arith.constant 0 : i32
    %c0_i32_0 = arith.constant 0 : i32
    %c0_i32_1 = arith.constant 0 : i32
    return %c0_i32, %c0_i32_0 : i32, i32
  }
  func.func @transform_10(%arg0: i32, %arg1: i32) -> (i32, i32) {
    %c0_i32 = arith.constant 0 : i32
    %c0_i32_0 = arith.constant 0 : i32
    %c0_i32_1 = arith.constant 0 : i32
    return %c0_i32, %c0_i32_0 : i32, i32
  }
  func.func @transform_11(%arg0: i32, %arg1: i32) -> (i32, i32) {
    %c0_i32 = arith.constant 0 : i32
    %c0_i32_0 = arith.constant 0 : i32
    %c0_i32_1 = arith.constant 0 : i32
    return %c0_i32, %c0_i32_0 : i32, i32
  }
  func.func @transform_12(%arg0: i32, %arg1: i32) -> (i32, i32) {
    %c0_i32 = arith.constant 0 : i32
    %c0_i32_0 = arith.constant 0 : i32
    %c0_i32_1 = arith.constant 0 : i32
    return %c0_i32, %c0_i32_0 : i32, i32
  }
  func.func @transform_13(%arg0: i32, %arg1: i32) -> (i32, i32) {
    %c0_i32 = arith.constant 0 : i32
    %c0_i32_0 = arith.constant 0 : i32
    %c0_i32_1 = arith.constant 0 : i32
    return %c0_i32, %c0_i32_0 : i32, i32
  }
  func.func @transform_14(%arg0: i32, %arg1: i32) -> (i32, i32) {
    %c0_i32 = arith.constant 0 : i32
    %c0_i32_0 = arith.constant 0 : i32
    %c0_i32_1 = arith.constant 0 : i32
    return %c0_i32, %c0_i32_0 : i32, i32
  }
  func.func @transform_15(%arg0: i32, %arg1: i32) -> (i32, i32) {
    %c0_i32 = arith.constant 0 : i32
    %c0_i32_0 = arith.constant 0 : i32
    %c0_i32_1 = arith.constant 0 : i32
    return %c0_i32, %c0_i32_0 : i32, i32
  }
  func.func @transform_16(%arg0: i32, %arg1: i32) -> (i32, i32, i32) {
    %c0_i32 = arith.constant 0 : i32
    %c0_i32_0 = arith.constant 0 : i32
    return %arg0, %arg1, %c0_i32 : i32, i32, i32
  }
}

</mosaic_0001>

<llo_original>
// kernel: tpu_custom_call.1
$region0: #{tpu_custom_call.1}
  #allocation0 [shape = 'u32[]', space=smem, size = 0x4, offset = 0x4, fixed_abs, tag = 'smem constant byte address 0x4 - core index']
  #allocation1 [shape = 'u32[144,128]{1,0:T(1,128)}', space=vmem, size = 0x12000, scoped, tag = 'internal scratch']
  #allocation2 [shape = 'bf16[8,32]{1,0:T(8,128)(2,1)}', space=vmem, size = 0x800, scoped, tag = 'scratch operand']
  %s0 = inlined_call_operand.hbm [shape: bf16[2,8,32], index: 0, kind: input, shape index: {}]
  %s1 = inlined_call_operand.vmem [shape: bf16[2,4,8,8], index: 1, kind: input, shape index: {}]
  %s2 = inlined_call_operand.vmem [shape: bf16[2,4,8,8], index: 2, kind: input, shape index: {}]
  %s3 = inlined_call_operand.hbm [shape: bf16[2,4,8,8], index: 3, kind: input, shape index: {}]
  %s4 = inlined_call_operand.vmem [shape: f32[2,1,8], index: 4, kind: input, shape index: {}]
  %s5 = inlined_call_operand.hbm [shape: bf16[8,8], index: 5, kind: input, shape index: {}]
  %s6 = inlined_call_operand.vmem [shape: bf16[32,32], index: 6, kind: input, shape index: {}]
  %s7 = inlined_call_operand.hbm [shape: f32[1,32], index: 7, kind: input, shape index: {}]
  %s8 = inlined_call_operand.hbm [shape: f32[1,32], index: 8, kind: input, shape index: {}]
  %s9 = inlined_call_operand.hbm [shape: f32[1,32], index: 9, kind: input, shape index: {}]
  %s10 = inlined_call_operand.vmem [shape: bf16[32,128], index: 10, kind: input, shape index: {}]
  %s11 = inlined_call_operand.vmem [shape: f32[1,128], index: 11, kind: input, shape index: {}]
  %s12 = inlined_call_operand.vmem [shape: bf16[128,32], index: 12, kind: input, shape index: {}]
  %s13 = inlined_call_operand.vmem [shape: f32[1,32], index: 13, kind: input, shape index: {}]
  %s14 = inlined_call_operand.vmem [shape: f32[1,32], index: 14, kind: input, shape index: {}]
  %s15 = inlined_call_operand.vmem [shape: f32[1,32], index: 15, kind: input, shape index: {}]
  %s16 = inlined_call_operand.hbm [shape: f32[2,8,32], index: 16, kind: output, shape index: {}]
  %s17 = sld [smem:[#allocation0]]
  $region121: #{tpu_custom_call.1} parent=0
    _
  %s19 = ssub.s32 1, %s17
  %s20 = scalar_select 0, %s19, %s17
  $region1: #{tpu_custom_call.1} parent=0
    #allocation3 [shape = 'u8[4096]{0}', space=vmem, size = 0x1000, scoped, tag = 'input window, operand 0']
    #allocation4 [shape = 's32[2]{0}', space=sflag, size = 0x8, scoped, tag = 'scoped memory for tpu_custom_call.1']
    #allocation5 [shape = 's32[2]{0}', space=sflag, size = 0x8, scoped, tag = 'scoped memory for tpu_custom_call.1']
    #allocation6 [shape = 'u8[16384]{0}', space=vmem, size = 0x4000, scoped, tag = 'input window, operand 3']
    #allocation7 [shape = 's32[2]{0}', space=sflag, size = 0x8, scoped, tag = 'scoped memory for tpu_custom_call.1']
    #allocation8 [shape = 'u8[2048]{0}', space=vmem, size = 0x800, scoped, tag = 'input window, operand 5, single buffered']
    #allocation9 [shape = 'u8[512]{0}', space=vmem, size = 0x400, scoped, tag = 'input window, operand 7, single buffered']
    #allocation10 [shape = 's32[1]{0}', space=sflag, size = 0x4, scoped, tag = 'scoped memory for tpu_custom_call.1']
    #allocation11 [shape = 'u8[512]{0}', space=vmem, size = 0x400, scoped, tag = 'input window, operand 8, single buffered']
    #allocation12 [shape = 'u8[512]{0}', space=vmem, size = 0x400, scoped, tag = 'input window, operand 9, single buffered']
    #allocation13 [shape = 's32[1]{0}', space=sflag, size = 0x4, scoped, tag = 'scoped memory for tpu_custom_call.1']
    #allocation14 [shape = 'u8[8192]{0}', space=vmem, size = 0x2000, scoped, tag = 'output window, operand 0']
    %21 = vsyncpa [#allocation4], 0
    %s22 = scalar_lea.sflag [#allocation4], 1
    %23 = vsyncpa %s22, 0
    %24 = vsyncpa [#allocation7], 0
    %s25 = scalar_lea.sflag [#allocation7], 1
    %26 = vsyncpa %s25, 0
    %27 = vsyncpa [#allocation10], 0
    %28 = vsyncpa [#allocation13], 0
    %29 = vsyncpa [#allocation5], 0
    %s30 = scalar_lea.sflag [#allocation5], 1
    %31 = vsyncpa %s30, 0
    loop: start=0, step=1, limit=4
    $region2: #{tpu_custom_call.1} parent=1 // loop_pre_header
      _
    $region3: #{tpu_custom_call.1} parent=1 // loop_header
      %s33 = sphi 0, %s37
      %p34 = scmp.ge.s32.totalorder %s33, 4
      %s40 = sphi 0, %s52
      %s41 = sphi 0, %s48
      %s42 = sphi 0, %s40
      %s43 = sphi 0, %s41
      %s44 = sphi 0, %s42
      %s45 = sphi 0, %s43
      %s57 = sphi 0, %s59
      %s60 = sphi 0, %s57
      %s61 = sphi 0, %s60
      %s77 = sphi 0, %s61
      %s85 = sphi 0, %s87
      %s88 = sphi 0, %s85
      %s89 = sphi 0, %s88
      %s105 = sphi 0, %s89
      %s111 = sphi 0, %s113
      %s114 = sphi 0, %s111
      %s115 = sphi 0, %s114
      %s131 = sphi 0, %s115
      %s137 = sphi 0, %s139
      %s140 = sphi 0, %s137
      %s141 = sphi 0, %s140
      %s157 = sphi 0, %s141
      %s163 = sphi 0, %s165
      %s166 = sphi 0, %s163
      %s167 = sphi 0, %s166
      %s183 = sphi 0, %s167
      %s187 = sphi 0, %s187
      %s189 = sphi 0, %s187
      %s190 = sphi 0, %s189
      %s204 = sphi 0, %s190
      %s208 = sphi 0, %s208
      %s210 = sphi 0, %s208
      %s211 = sphi 0, %s210
      %s225 = sphi 0, %s211
      %s229 = sphi 0, %s229
      %s231 = sphi 0, %s229
      %s232 = sphi 0, %s231
      %s246 = sphi 0, %s232
      %s250 = sphi 0, %s250
      %s252 = sphi 0, %s250
      %s253 = sphi 0, %s252
      %s267 = sphi 0, %s253
      %s271 = sphi 0, %s271
      %s273 = sphi 0, %s271
      %s274 = sphi 0, %s273
      %s288 = sphi 0, %s274
      %s292 = sphi 0, %s292
      %s294 = sphi 0, %s292
      %s295 = sphi 0, %s294
      %s309 = sphi 0, %s295
      %s313 = sphi 0, %s313
      %s315 = sphi 0, %s313
      %s316 = sphi 0, %s315
      %s330 = sphi 0, %s316
      %s334 = sphi 0, %s334
      %s336 = sphi 0, %s334
      %s337 = sphi 0, %s336
      %s351 = sphi 0, %s337
      %s355 = sphi 0, %s355
      %s357 = sphi 0, %s355
      %s358 = sphi 0, %s357
      %s372 = sphi 0, %s358
      %s376 = sphi 0, %s376
      %s378 = sphi 0, %s376
      %s379 = sphi 0, %s378
      %s393 = sphi 0, %s379
      %s397 = sphi 0, %s397
      %s399 = sphi 0, %s397
      %s400 = sphi 0, %s399
      %s414 = sphi 0, %s400
      %s422 = sphi 0, %s424
      %s425 = sphi 0, %s422
      %s426 = sphi 0, %s425
      %s442 = sphi 0, %s426
    $region4: #{tpu_custom_call.1} parent=1 // loop_header_branch
      %36 = sbr.rel (%p34) target = $region8
    $region5: #{tpu_custom_call.1} parent=1 // loop_body
      %s38 = ssub.s32 %s33, 1
      %s39 = ssub.s32 %s33, 2
      %s46 = sadd.s32 1, %s41
      %p47 = scmp.ge.s32.totalorder %s46, 1
      %s48 = scalar_select %p47, 0, %s46
      %s49 = sadd.s32 1, %s40
      %s50 = scalar_select %p47, %s49, %s40
      %p51 = scmp.ge.s32.totalorder %s50, 2
      %s52 = scalar_select %p51, 0, %s50
      %s53 = ssub.s32 %s40, %s52
      %s54 = ssub.s32 %s41, %s48
      %s55 = sor.u32 %s53, %s54
      %p56 = scmp.eq.s32.totalorder %s55, 0
      %s58 = sadd.s32 %s57, 1
      %s59 = scalar_select %p56, %s57, %s58
      %p62 = pneg %p56
      %p63 = scmp.eq.s32.totalorder %s33, 1
      %p64 = por %p62, %p63
      %p65 = scmp.ne.s32.totalorder %s57, %s60
      %p66 = scmp.eq.s32.totalorder %s33, 0
      %p67 = por %p65, %p66
      %p68 = scmp.ne.s32.totalorder %s57, %s60
      %p69 = scmp.eq.s32.totalorder %s38, 1
      %p70 = por %p68, %p69
      %p71 = scmp.ne.s32.totalorder %s60, %s61
      %p72 = scmp.eq.s32.totalorder %s38, 0
      %p73 = por %p71, %p72
      %p74 = scmp.ne.s32.totalorder %s60, %s61
      %p75 = scmp.eq.s32.totalorder %s39, 1
      %p76 = por %p74, %p75
      %p78 = scmp.ne.s32.totalorder %s61, %s77
      %p79 = scmp.eq.s32.totalorder %s39, 0
      %p80 = por %p78, %p79
      %s81 = ssub.s32 %s40, %s52
      %s82 = ssub.s32 %s41, %s48
      %s83 = sor.u32 %s81, %s82
      %p84 = scmp.eq.s32.totalorder %s83, 0
      %s86 = sadd.s32 %s85, 1
      %s87 = scalar_select %p84, %s85, %s86
      %p90 = pneg %p84
      %p91 = scmp.eq.s32.totalorder %s33, 1
      %p92 = por %p90, %p91
      %p93 = scmp.ne.s32.totalorder %s85, %s88
      %p94 = scmp.eq.s32.totalorder %s33, 0
      %p95 = por %p93, %p94
      %p96 = scmp.ne.s32.totalorder %s85, %s88
      %p97 = scmp.eq.s32.totalorder %s38, 1
      %p98 = por %p96, %p97
      %p99 = scmp.ne.s32.totalorder %s88, %s89
      %p100 = scmp.eq.s32.totalorder %s38, 0
      %p101 = por %p99, %p100
      %p102 = scmp.ne.s32.totalorder %s88, %s89
      %p103 = scmp.eq.s32.totalorder %s39, 1
      %p104 = por %p102, %p103
      %p106 = scmp.ne.s32.totalorder %s89, %s105
      %p107 = scmp.eq.s32.totalorder %s39, 0
      %p108 = por %p106, %p107
      %s109 = ssub.s32 %s40, %s52
      %p110 = scmp.eq.s32.totalorder %s109, 0
      %s112 = sadd.s32 %s111, 1
      %s113 = scalar_select %p110, %s111, %s112
      %p116 = pneg %p110
      %p117 = scmp.eq.s32.totalorder %s33, 1
      %p118 = por %p116, %p117
      %p119 = scmp.ne.s32.totalorder %s111, %s114
      %p120 = scmp.eq.s32.totalorder %s33, 0
      %p121 = por %p119, %p120
      %p122 = scmp.ne.s32.totalorder %s111, %s114
      %p123 = scmp.eq.s32.totalorder %s38, 1
      %p124 = por %p122, %p123
      %p125 = scmp.ne.s32.totalorder %s114, %s115
      %p126 = scmp.eq.s32.totalorder %s38, 0
      %p127 = por %p125, %p126
      %p128 = scmp.ne.s32.totalorder %s114, %s115
      %p129 = scmp.eq.s32.totalorder %s39, 1
      %p130 = por %p128, %p129
      %p132 = scmp.ne.s32.totalorder %s115, %s131
      %p133 = scmp.eq.s32.totalorder %s39, 0
      %p134 = por %p132, %p133
      %s135 = ssub.s32 %s40, %s52
      %p136 = scmp.eq.s32.totalorder %s135, 0
      %s138 = sadd.s32 %s137, 1
      %s139 = scalar_select %p136, %s137, %s138
      %p142 = pneg %p136
      %p143 = scmp.eq.s32.totalorder %s33, 1
      %p144 = por %p142, %p143
      %p145 = scmp.ne.s32.totalorder %s137, %s140
      %p146 = scmp.eq.s32.totalorder %s33, 0
      %p147 = por %p145, %p146
      %p148 = scmp.ne.s32.totalorder %s137, %s140
      %p149 = scmp.eq.s32.totalorder %s38, 1
      %p150 = por %p148, %p149
      %p151 = scmp.ne.s32.totalorder %s140, %s141
      %p152 = scmp.eq.s32.totalorder %s38, 0
      %p153 = por %p151, %p152
      %p154 = scmp.ne.s32.totalorder %s140, %s141
      %p155 = scmp.eq.s32.totalorder %s39, 1
      %p156 = por %p154, %p155
      %p158 = scmp.ne.s32.totalorder %s141, %s157
      %p159 = scmp.eq.s32.totalorder %s39, 0
      %p160 = por %p158, %p159
      %s161 = ssub.s32 %s40, %s52
      %p162 = scmp.eq.s32.totalorder %s161, 0
      %s164 = sadd.s32 %s163, 1
      %s165 = scalar_select %p162, %s163, %s164
      %p168 = pneg %p162
      %p169 = scmp.eq.s32.totalorder %s33, 1
      %p170 = por %p168, %p169
      %p171 = scmp.ne.s32.totalorder %s163, %s166
      %p172 = scmp.eq.s32.totalorder %s33, 0
      %p173 = por %p171, %p172
      %p174 = scmp.ne.s32.totalorder %s163, %s166
      %p175 = scmp.eq.s32.totalorder %s38, 1
      %p176 = por %p174, %p175
      %p177 = scmp.ne.s32.totalorder %s166, %s167
      %p178 = scmp.eq.s32.totalorder %s38, 0
      %p179 = por %p177, %p178
      %p180 = scmp.ne.s32.totalorder %s166, %s167
      %p181 = scmp.eq.s32.totalorder %s39, 1
      %p182 = por %p180, %p181
      %p184 = scmp.ne.s32.totalorder %s167, %s183
      %p185 = scmp.eq.s32.totalorder %s39, 0
      %p186 = por %p184, %p185
      %s188 = sadd.s32 %s187, 1
      %p191 = scmp.eq.s32.totalorder %s33, 1
      %p192 = scmp.ne.s32.totalorder %s187, %s189
      %p193 = scmp.eq.s32.totalorder %s33, 0
      %p194 = por %p192, %p193
      %p195 = scmp.ne.s32.totalorder %s187, %s189
      %p196 = scmp.eq.s32.totalorder %s38, 1
      %p197 = por %p195, %p196
      %p198 = scmp.ne.s32.totalorder %s189, %s190
      %p199 = scmp.eq.s32.totalorder %s38, 0
      %p200 = por %p198, %p199
      %p201 = scmp.ne.s32.totalorder %s189, %s190
      %p202 = scmp.eq.s32.totalorder %s39, 1
      %p203 = por %p201, %p202
      %p205 = scmp.ne.s32.totalorder %s190, %s204
      %p206 = scmp.eq.s32.totalorder %s39, 0
      %p207 = por %p205, %p206
      %s209 = sadd.s32 %s208, 1
      %p212 = scmp.eq.s32.totalorder %s33, 1
      %p213 = scmp.ne.s32.totalorder %s208, %s210
      %p214 = scmp.eq.s32.totalorder %s33, 0
      %p215 = por %p213, %p214
      %p216 = scmp.ne.s32.totalorder %s208, %s210
      %p217 = scmp.eq.s32.totalorder %s38, 1
      %p218 = por %p216, %p217
      %p219 = scmp.ne.s32.totalorder %s210, %s211
      %p220 = scmp.eq.s32.totalorder %s38, 0
      %p221 = por %p219, %p220
      %p222 = scmp.ne.s32.totalorder %s210, %s211
      %p223 = scmp.eq.s32.totalorder %s39, 1
      %p224 = por %p222, %p223
      %p226 = scmp.ne.s32.totalorder %s211, %s225
      %p227 = scmp.eq.s32.totalorder %s39, 0
      %p228 = por %p226, %p227
      %s230 = sadd.s32 %s229, 1
      %p233 = scmp.eq.s32.totalorder %s33, 1
      %p234 = scmp.ne.s32.totalorder %s229, %s231
      %p235 = scmp.eq.s32.totalorder %s33, 0
      %p236 = por %p234, %p235
      %p237 = scmp.ne.s32.totalorder %s229, %s231
      %p238 = scmp.eq.s32.totalorder %s38, 1
      %p239 = por %p237, %p238
      %p240 = scmp.ne.s32.totalorder %s231, %s232
      %p241 = scmp.eq.s32.totalorder %s38, 0
      %p242 = por %p240, %p241
      %p243 = scmp.ne.s32.totalorder %s231, %s232
      %p244 = scmp.eq.s32.totalorder %s39, 1
      %p245 = por %p243, %p244
      %p247 = scmp.ne.s32.totalorder %s232, %s246
      %p248 = scmp.eq.s32.totalorder %s39, 0
      %p249 = por %p247, %p248
      %s251 = sadd.s32 %s250, 1
      %p254 = scmp.eq.s32.totalorder %s33, 1
      %p255 = scmp.ne.s32.totalorder %s250, %s252
      %p256 = scmp.eq.s32.totalorder %s33, 0
      %p257 = por %p255, %p256
      %p258 = scmp.ne.s32.totalorder %s250, %s252
      %p259 = scmp.eq.s32.totalorder %s38, 1
      %p260 = por %p258, %p259
      %p261 = scmp.ne.s32.totalorder %s252, %s253
      %p262 = scmp.eq.s32.totalorder %s38, 0
      %p263 = por %p261, %p262
      %p264 = scmp.ne.s32.totalorder %s252, %s253
      %p265 = scmp.eq.s32.totalorder %s39, 1
      %p266 = por %p264, %p265
      %p268 = scmp.ne.s32.totalorder %s253, %s267
      %p269 = scmp.eq.s32.totalorder %s39, 0
      %p270 = por %p268, %p269
      %s272 = sadd.s32 %s271, 1
      %p275 = scmp.eq.s32.totalorder %s33, 1
      %p276 = scmp.ne.s32.totalorder %s271, %s273
      %p277 = scmp.eq.s32.totalorder %s33, 0
      %p278 = por %p276, %p277
      %p279 = scmp.ne.s32.totalorder %s271, %s273
      %p280 = scmp.eq.s32.totalorder %s38, 1
      %p281 = por %p279, %p280
      %p282 = scmp.ne.s32.totalorder %s273, %s274
      %p283 = scmp.eq.s32.totalorder %s38, 0
      %p284 = por %p282, %p283
      %p285 = scmp.ne.s32.totalorder %s273, %s274
      %p286 = scmp.eq.s32.totalorder %s39, 1
      %p287 = por %p285, %p286
      %p289 = scmp.ne.s32.totalorder %s274, %s288
      %p290 = scmp.eq.s32.totalorder %s39, 0
      %p291 = por %p289, %p290
      %s293 = sadd.s32 %s292, 1
      %p296 = scmp.eq.s32.totalorder %s33, 1
      %p297 = scmp.ne.s32.totalorder %s292, %s294
      %p298 = scmp.eq.s32.totalorder %s33, 0
      %p299 = por %p297, %p298
      %p300 = scmp.ne.s32.totalorder %s292, %s294
      %p301 = scmp.eq.s32.totalorder %s38, 1
      %p302 = por %p300, %p301
      %p303 = scmp.ne.s32.totalorder %s294, %s295
      %p304 = scmp.eq.s32.totalorder %s38, 0
      %p305 = por %p303, %p304
      %p306 = scmp.ne.s32.totalorder %s294, %s295
      %p307 = scmp.eq.s32.totalorder %s39, 1
      %p308 = por %p306, %p307
      %p310 = scmp.ne.s32.totalorder %s295, %s309
      %p311 = scmp.eq.s32.totalorder %s39, 0
      %p312 = por %p310, %p311
      %s314 = sadd.s32 %s313, 1
      %p317 = scmp.eq.s32.totalorder %s33, 1
      %p318 = scmp.ne.s32.totalorder %s313, %s315
      %p319 = scmp.eq.s32.totalorder %s33, 0
      %p320 = por %p318, %p319
      %p321 = scmp.ne.s32.totalorder %s313, %s315
      %p322 = scmp.eq.s32.totalorder %s38, 1
      %p323 = por %p321, %p322
      %p324 = scmp.ne.s32.totalorder %s315, %s316
      %p325 = scmp.eq.s32.totalorder %s38, 0
      %p326 = por %p324, %p325
      %p327 = scmp.ne.s32.totalorder %s315, %s316
      %p328 = scmp.eq.s32.totalorder %s39, 1
      %p329 = por %p327, %p328
      %p331 = scmp.ne.s32.totalorder %s316, %s330
      %p332 = scmp.eq.s32.totalorder %s39, 0
      %p333 = por %p331, %p332
      %s335 = sadd.s32 %s334, 1
      %p338 = scmp.eq.s32.totalorder %s33, 1
      %p339 = scmp.ne.s32.totalorder %s334, %s336
      %p340 = scmp.eq.s32.totalorder %s33, 0
      %p341 = por %p339, %p340
      %p342 = scmp.ne.s32.totalorder %s334, %s336
      %p343 = scmp.eq.s32.totalorder %s38, 1
      %p344 = por %p342, %p343
      %p345 = scmp.ne.s32.totalorder %s336, %s337
      %p346 = scmp.eq.s32.totalorder %s38, 0
      %p347 = por %p345, %p346
      %p348 = scmp.ne.s32.totalorder %s336, %s337
      %p349 = scmp.eq.s32.totalorder %s39, 1
      %p350 = por %p348, %p349
      %p352 = scmp.ne.s32.totalorder %s337, %s351
      %p353 = scmp.eq.s32.totalorder %s39, 0
      %p354 = por %p352, %p353
      %s356 = sadd.s32 %s355, 1
      %p359 = scmp.eq.s32.totalorder %s33, 1
      %p360 = scmp.ne.s32.totalorder %s355, %s357
      %p361 = scmp.eq.s32.totalorder %s33, 0
      %p362 = por %p360, %p361
      %p363 = scmp.ne.s32.totalorder %s355, %s357
      %p364 = scmp.eq.s32.totalorder %s38, 1
      %p365 = por %p363, %p364
      %p366 = scmp.ne.s32.totalorder %s357, %s358
      %p367 = scmp.eq.s32.totalorder %s38, 0
      %p368 = por %p366, %p367
      %p369 = scmp.ne.s32.totalorder %s357, %s358
      %p370 = scmp.eq.s32.totalorder %s39, 1
      %p371 = por %p369, %p370
      %p373 = scmp.ne.s32.totalorder %s358, %s372
      %p374 = scmp.eq.s32.totalorder %s39, 0
      %p375 = por %p373, %p374
      %s377 = sadd.s32 %s376, 1
      %p380 = scmp.eq.s32.totalorder %s33, 1
      %p381 = scmp.ne.s32.totalorder %s376, %s378
      %p382 = scmp.eq.s32.totalorder %s33, 0
      %p383 = por %p381, %p382
      %p384 = scmp.ne.s32.totalorder %s376, %s378
      %p385 = scmp.eq.s32.totalorder %s38, 1
      %p386 = por %p384, %p385
      %p387 = scmp.ne.s32.totalorder %s378, %s379
      %p388 = scmp.eq.s32.totalorder %s38, 0
      %p389 = por %p387, %p388
      %p390 = scmp.ne.s32.totalorder %s378, %s379
      %p391 = scmp.eq.s32.totalorder %s39, 1
      %p392 = por %p390, %p391
      %p394 = scmp.ne.s32.totalorder %s379, %s393
      %p395 = scmp.eq.s32.totalorder %s39, 0
      %p396 = por %p394, %p395
      %s398 = sadd.s32 %s397, 1
      %p401 = scmp.eq.s32.totalorder %s33, 1
      %p402 = scmp.ne.s32.totalorder %s397, %s399
      %p403 = scmp.eq.s32.totalorder %s33, 0
      %p404 = por %p402, %p403
      %p405 = scmp.ne.s32.totalorder %s397, %s399
      %p406 = scmp.eq.s32.totalorder %s38, 1
      %p407 = por %p405, %p406
      %p408 = scmp.ne.s32.totalorder %s399, %s400
      %p409 = scmp.eq.s32.totalorder %s38, 0
      %p410 = por %p408, %p409
      %p411 = scmp.ne.s32.totalorder %s399, %s400
      %p412 = scmp.eq.s32.totalorder %s39, 1
      %p413 = por %p411, %p412
      %p415 = scmp.ne.s32.totalorder %s400, %s414
      %p416 = scmp.eq.s32.totalorder %s39, 0
      %p417 = por %p415, %p416
      %s418 = ssub.s32 %s40, %s52
      %s419 = ssub.s32 %s41, %s48
      %s420 = sor.u32 %s418, %s419
      %p421 = scmp.eq.s32.totalorder %s420, 0
      %s423 = sadd.s32 %s422, 1
      %s424 = scalar_select %p421, %s422, %s423
      %p427 = pneg %p421
      %p428 = scmp.eq.s32.totalorder %s33, 1
      %p429 = por %p427, %p428
      %p430 = scmp.ne.s32.totalorder %s422, %s425
      %p431 = scmp.eq.s32.totalorder %s33, 0
      %p432 = por %p430, %p431
      %p433 = scmp.ne.s32.totalorder %s422, %s425
      %p434 = scmp.eq.s32.totalorder %s38, 1
      %p435 = por %p433, %p434
      %p436 = scmp.ne.s32.totalorder %s425, %s426
      %p437 = scmp.eq.s32.totalorder %s38, 0
      %p438 = por %p436, %p437
      %p439 = scmp.ne.s32.totalorder %s425, %s426
      %p440 = scmp.eq.s32.totalorder %s39, 1
      %p441 = por %p439, %p440
      %p443 = scmp.ne.s32.totalorder %s426, %s442
      %p444 = scmp.eq.s32.totalorder %s39, 0
      %p445 = por %p443, %p444
      %p446 = scmp.le.s32.totalorder 1, %s33
      %p447 = scmp.lt.s32.totalorder %s33, 3
      %p448 = pnand %p446, %p447
      %p449 = pneg %p448
      // Predicated region
      $region9: #{tpu_custom_call.1} parent=5 // pred_check
        _
      $region10: #{tpu_custom_call.1} parent=5 // pred_check_branch
        %451 = sbr.rel (%p448) target = $region12
      $region11: #{tpu_custom_call.1} parent=5 // pred_region
        %s452 = ssub.s32 %s33, 1
        // Predicated region
        $region13: #{tpu_custom_call.1} parent=11 // pred_check
          %p453 = pneg %p200
        $region14: #{tpu_custom_call.1} parent=11 // pred_check_branch
          %455 = sbr.rel (%p453) target = $region16
        $region15: #{tpu_custom_call.1} parent=11 // pred_region
          %s457 = ssub.s32 64, 64
          %458 = vsyncadd [#allocation7], %s457
          %s460 = sshll.u32 [#allocation8], 4
          %s461 = int_to_ptr.vmem [resolvable:$true] %s460
          %463 = dma.hbm_to_vmem [thread:$0]  %s5, 64, %s461, [#allocation7]
        $region16: #{tpu_custom_call.1} parent=11 // pred_fallthru
          _
        // Predicated region
        $region17: #{tpu_custom_call.1} parent=11 // pred_check
          %p464 = pneg %p221
        $region18: #{tpu_custom_call.1} parent=11 // pred_check_branch
          %466 = sbr.rel (%p464) target = $region20
        $region19: #{tpu_custom_call.1} parent=11 // pred_region
          _
        $region20: #{tpu_custom_call.1} parent=11 // pred_fallthru
          _
        // Predicated region
        $region21: #{tpu_custom_call.1} parent=11 // pred_check
          %p467 = pneg %p242
        $region22: #{tpu_custom_call.1} parent=11 // pred_check_branch
          %469 = sbr.rel (%p467) target = $region24
        $region23: #{tpu_custom_call.1} parent=11 // pred_region
          %s471 = ssub.s32 16, 16
          %472 = vsyncadd [#allocation10], %s471
          %s474 = sshll.u32 [#allocation9], 4
          %s475 = int_to_ptr.vmem [resolvable:$true] %s474
          %477 = dma.hbm_to_vmem [thread:$0]  %s7, 16, %s475, [#allocation10]
        $region24: #{tpu_custom_call.1} parent=11 // pred_fallthru
          _
        // Predicated region
        $region25: #{tpu_custom_call.1} parent=11 // pred_check
          %p478 = pneg %p263
        $region26: #{tpu_custom_call.1} parent=11 // pred_check_branch
          %480 = sbr.rel (%p478) target = $region28
        $region27: #{tpu_custom_call.1} parent=11 // pred_region
          %s482 = ssub.s32 16, 16
          %483 = vsyncadd [#allocation10], %s482
          %s485 = sshll.u32 [#allocation11], 4
          %s486 = int_to_ptr.vmem [resolvable:$true] %s485
          %488 = dma.hbm_to_vmem [thread:$0]  %s8, 16, %s486, [#allocation10]
        $region28: #{tpu_custom_call.1} parent=11 // pred_fallthru
          _
        // Predicated region
        $region29: #{tpu_custom_call.1} parent=11 // pred_check
          %p489 = pneg %p284
        $region30: #{tpu_custom_call.1} parent=11 // pred_check_branch
          %491 = sbr.rel (%p489) target = $region32
        $region31: #{tpu_custom_call.1} parent=11 // pred_region
          %s493 = ssub.s32 16, 16
          %494 = vsyncadd [#allocation13], %s493
          %s496 = sshll.u32 [#allocation12], 4
          %s497 = int_to_ptr.vmem [resolvable:$true] %s496
          %499 = dma.hbm_to_vmem [thread:$0]  %s9, 16, %s497, [#allocation13]
        $region32: #{tpu_custom_call.1} parent=11 // pred_fallthru
          _
        // Predicated region
        $region33: #{tpu_custom_call.1} parent=11 // pred_check
          %p500 = pneg %p305
        $region34: #{tpu_custom_call.1} parent=11 // pred_check_branch
          %502 = sbr.rel (%p500) target = $region36
        $region35: #{tpu_custom_call.1} parent=11 // pred_region
          _
        $region36: #{tpu_custom_call.1} parent=11 // pred_fallthru
          _
        // Predicated region
        $region37: #{tpu_custom_call.1} parent=11 // pred_check
          %p503 = pneg %p326
        $region38: #{tpu_custom_call.1} parent=11 // pred_check_branch
          %505 = sbr.rel (%p503) target = $region40
        $region39: #{tpu_custom_call.1} parent=11 // pred_region
          _
        $region40: #{tpu_custom_call.1} parent=11 // pred_fallthru
          _
        // Predicated region
        $region41: #{tpu_custom_call.1} parent=11 // pred_check
          %p506 = pneg %p347
        $region42: #{tpu_custom_call.1} parent=11 // pred_check_branch
          %508 = sbr.rel (%p506) target = $region44
        $region43: #{tpu_custom_call.1} parent=11 // pred_region
          _
        $region44: #{tpu_custom_call.1} parent=11 // pred_fallthru
          _
        // Predicated region
        $region45: #{tpu_custom_call.1} parent=11 // pred_check
          %p509 = pneg %p368
        $region46: #{tpu_custom_call.1} parent=11 // pred_check_branch
          %511 = sbr.rel (%p509) target = $region48
        $region47: #{tpu_custom_call.1} parent=11 // pred_region
          _
        $region48: #{tpu_custom_call.1} parent=11 // pred_fallthru
          _
        // Predicated region
        $region49: #{tpu_custom_call.1} parent=11 // pred_check
          %p512 = pneg %p389
        $region50: #{tpu_custom_call.1} parent=11 // pred_check_branch
          %514 = sbr.rel (%p512) target = $region52
        $region51: #{tpu_custom_call.1} parent=11 // pred_region
          _
        $region52: #{tpu_custom_call.1} parent=11 // pred_fallthru
          _
        // Predicated region
        $region53: #{tpu_custom_call.1} parent=11 // pred_check
          %p515 = pneg %p410
        $region54: #{tpu_custom_call.1} parent=11 // pred_check_branch
          %517 = sbr.rel (%p515) target = $region56
        $region55: #{tpu_custom_call.1} parent=11 // pred_region
          _
        $region56: #{tpu_custom_call.1} parent=11 // pred_fallthru
          _
      $region12: #{tpu_custom_call.1} parent=5 // pred_fallthru
        _
      %p518 = scmp.lt.s32.totalorder %s33, 2
      // Predicated region
      $region57: #{tpu_custom_call.1} parent=5 // pred_check
        %p519 = pneg %p518
      $region58: #{tpu_custom_call.1} parent=5 // pred_check_branch
        %521 = sbr.rel (%p519) target = $region60
      $region59: #{tpu_custom_call.1} parent=5 // pred_region
        // Predicated region
        $region61: #{tpu_custom_call.1} parent=59 // pred_check
          %p522 = pneg %p67
        $region62: #{tpu_custom_call.1} parent=59 // pred_check_branch
          %524 = sbr.rel (%p522) target = $region64
        $region63: #{tpu_custom_call.1} parent=59 // pred_region
          %s525 = sand.u32 %s57, 1
          %s526 = scalar_lea.sflag [#allocation4], %s525
          %s527 = sand.u32 %s57, 1
          %s528 = smul.addr %s527, 4
          %s529 = scalar_lea.vmem [#allocation3], %s528
          %s531 = ssub.s32 64, 64
          %532 = vsyncadd %s526, %s531
          %s533 = sadd.s32 %s41, %s40
          %s534 = smul.addr %s533, 64
          %s535 = scalar_lea.hbm %s0, %s534
          %s537 = sshll.u32 %s529, 4
          %s538 = int_to_ptr.vmem [resolvable:$true] %s537
          %540 = dma.hbm_to_vmem [thread:$0]  %s535, 64, %s538, %s526
        $region64: #{tpu_custom_call.1} parent=59 // pred_fallthru
          _
        // Predicated region
        $region65: #{tpu_custom_call.1} parent=59 // pred_check
          %p541 = pneg %p95
        $region66: #{tpu_custom_call.1} parent=59 // pred_check_branch
          %543 = sbr.rel (%p541) target = $region68
        $region67: #{tpu_custom_call.1} parent=59 // pred_region
          %p544 = scmp.lt.s32.totalorder %s40, 1
          %s545 = scalar_select %p544, %s40, 1
          %p546 = scmp.lt.s32.totalorder %s41, 0
          %s547 = scalar_select %p546, %s41, 0
          %s548 = smul.addr %s545, 4
          %s549 = sadd.s32 %s547, %s548
          %s550 = smul.addr %s549, 4
          %s551 = scalar_lea.vmem %s1, %s550
        $region68: #{tpu_custom_call.1} parent=59 // pred_fallthru
          _
        // Predicated region
        $region69: #{tpu_custom_call.1} parent=59 // pred_check
          %p552 = pneg %p121
        $region70: #{tpu_custom_call.1} parent=59 // pred_check_branch
          %554 = sbr.rel (%p552) target = $region72
        $region71: #{tpu_custom_call.1} parent=59 // pred_region
          %p555 = scmp.lt.s32.totalorder %s40, 1
          %s556 = scalar_select %p555, %s40, 1
          %s557 = smul.addr %s556, 4
          %s558 = smul.addr %s557, 4
          %s559 = scalar_lea.vmem %s2, %s558
        $region72: #{tpu_custom_call.1} parent=59 // pred_fallthru
          _
        // Predicated region
        $region73: #{tpu_custom_call.1} parent=59 // pred_check
          %p560 = pneg %p147
        $region74: #{tpu_custom_call.1} parent=59 // pred_check_branch
          %562 = sbr.rel (%p560) target = $region76
        $region75: #{tpu_custom_call.1} parent=59 // pred_region
          %s563 = sand.u32 %s33, 1
          %s564 = scalar_lea.sflag [#allocation7], %s563
          %s565 = sand.u32 %s137, 1
          %s566 = smul.addr %s565, 16
          %s567 = scalar_lea.vmem [#allocation6], %s566
          %s569 = ssub.s32 256, 256
          %570 = vsyncadd %s564, %s569
          %s571 = smul.addr %s40, 4
          %s572 = smul.addr %s571, 64
          %s573 = scalar_lea.hbm %s3, %s572
          %s574 = sshll.u32 %s567, 4
          %s575 = int_to_ptr.vmem [resolvable:$true] %s574
          %580 = dma.hbm_to_vmem [thread:$0]  %s573, 256, %s575, %s564, 64, 64, 4
        $region76: #{tpu_custom_call.1} parent=59 // pred_fallthru
          _
        // Predicated region
        $region77: #{tpu_custom_call.1} parent=59 // pred_check
          %p581 = pneg %p173
        $region78: #{tpu_custom_call.1} parent=59 // pred_check_branch
          %583 = sbr.rel (%p581) target = $region80
        $region79: #{tpu_custom_call.1} parent=59 // pred_region
          %p584 = scmp.lt.s32.totalorder %s40, 1
          %s585 = scalar_select %p584, %s40, 1
          %s586 = scalar_lea.vmem %s4, %s585
        $region80: #{tpu_custom_call.1} parent=59 // pred_fallthru
          _
      $region60: #{tpu_custom_call.1} parent=5 // pred_fallthru
        _
      %p587 = scmp.le.s32.totalorder 1, %s33
      %p588 = scmp.lt.s32.totalorder %s33, 3
      %p589 = pnand %p587, %p588
      %p590 = pneg %p589
      // Predicated region
      $region81: #{tpu_custom_call.1} parent=5 // pred_check
        _
      $region82: #{tpu_custom_call.1} parent=5 // pred_check_branch
        %592 = sbr.rel (%p589) target = $region84
      $region83: #{tpu_custom_call.1} parent=5 // pred_region
        %s593 = ssub.s32 %s33, 1
        %s594 = sand.u32 %s60, 1
        %s595 = scalar_lea.sflag [#allocation4], %s594
        %s596 = sand.u32 %s60, 1
        %s597 = smul.addr %s596, 4
        %s598 = scalar_lea.vmem [#allocation3], %s597
        // Predicated region
        $region85: #{tpu_custom_call.1} parent=83 // pred_check
          %p599 = pneg %p73
        $region86: #{tpu_custom_call.1} parent=83 // pred_check_branch
          %601 = sbr.rel (%p599) target = $region88
        $region87: #{tpu_custom_call.1} parent=83 // pred_region
          %602 = dma.done %s595, 64
        $region88: #{tpu_custom_call.1} parent=83 // pred_fallthru
          _
        %s603 = sand.u32 %s38, 1
        %s604 = scalar_lea.sflag [#allocation7], %s603
        %s605 = sand.u32 %s140, 1
        %s606 = smul.addr %s605, 16
        %s607 = scalar_lea.vmem [#allocation6], %s606
        // Predicated region
        $region89: #{tpu_custom_call.1} parent=83 // pred_check
          %p608 = pneg %p153
        $region90: #{tpu_custom_call.1} parent=83 // pred_check_branch
          %610 = sbr.rel (%p608) target = $region92
        $region91: #{tpu_custom_call.1} parent=83 // pred_region
          %611 = dma.done %s604, 256
        $region92: #{tpu_custom_call.1} parent=83 // pred_fallthru
          _
        // Predicated region
        $region93: #{tpu_custom_call.1} parent=83 // pred_check
          %p612 = pneg %p200
        $region94: #{tpu_custom_call.1} parent=83 // pred_check_branch
          %614 = sbr.rel (%p612) target = $region96
        $region95: #{tpu_custom_call.1} parent=83 // pred_region
          %615 = dma.done [#allocation7], 64
        $region96: #{tpu_custom_call.1} parent=83 // pred_fallthru
          _
        // Predicated region
        $region97: #{tpu_custom_call.1} parent=83 // pred_check
          %p616 = pneg %p242
        $region98: #{tpu_custom_call.1} parent=83 // pred_check_branch
          %618 = sbr.rel (%p616) target = $region100
        $region99: #{tpu_custom_call.1} parent=83 // pred_region
          %619 = dma.done [#allocation10], 16
        $region100: #{tpu_custom_call.1} parent=83 // pred_fallthru
          _
        // Predicated region
        $region101: #{tpu_custom_call.1} parent=83 // pred_check
          %p620 = pneg %p263
        $region102: #{tpu_custom_call.1} parent=83 // pred_check_branch
          %622 = sbr.rel (%p620) target = $region104
        $region103: #{tpu_custom_call.1} parent=83 // pred_region
          %623 = dma.done [#allocation10], 16
        $region104: #{tpu_custom_call.1} parent=83 // pred_fallthru
          _
        // Predicated region
        $region105: #{tpu_custom_call.1} parent=83 // pred_check
          %p624 = pneg %p284
        $region106: #{tpu_custom_call.1} parent=83 // pred_check_branch
          %626 = sbr.rel (%p624) target = $region108
        $region107: #{tpu_custom_call.1} parent=83 // pred_region
          %627 = dma.done [#allocation13], 16
        $region108: #{tpu_custom_call.1} parent=83 // pred_fallthru
          _
        %s628 = sand.u32 %s60, 1
        %s629 = scalar_lea.sflag [#allocation4], %s628
        %s630 = sand.u32 %s60, 1
        %s631 = smul.addr %s630, 4
        %s632 = scalar_lea.vmem [#allocation3], %s631
        %p633 = pneg %p73
        %p634 = pneg %p70
        %p635 = scmp.lt.s32.totalorder %s42, 1
        %s636 = scalar_select %p635, %s42, 1
        %p637 = scmp.lt.s32.totalorder %s43, 0
        %s638 = scalar_select %p637, %s43, 0
        %s639 = smul.addr %s636, 4
        %s640 = sadd.s32 %s638, %s639
        %s641 = smul.addr %s640, 4
        %s642 = scalar_lea.vmem %s1, %s641
        %p643 = pneg %p101
        %p644 = pneg %p98
        %p645 = scmp.lt.s32.totalorder %s42, 1
        %s646 = scalar_select %p645, %s42, 1
        %s647 = smul.addr %s646, 4
        %s648 = smul.addr %s647, 4
        %s649 = scalar_lea.vmem %s2, %s648
        %p650 = pneg %p127
        %p651 = pneg %p124
        %s652 = sand.u32 %s38, 1
        %s653 = scalar_lea.sflag [#allocation7], %s652
        %s654 = sand.u32 %s140, 1
        %s655 = smul.addr %s654, 16
        %s656 = scalar_lea.vmem [#allocation6], %s655
        %p657 = pneg %p153
        %p658 = pneg %p150
        %p659 = scmp.lt.s32.totalorder %s42, 1
        %s660 = scalar_select %p659, %s42, 1
        %s661 = scalar_lea.vmem %s4, %s660
        %p662 = pneg %p179
        %p663 = pneg %p176
        %p664 = pneg %p200
        %p665 = pneg %p197
        %p666 = pneg %p221
        %p667 = pneg %p218
        %p668 = pneg %p242
        %p669 = pneg %p239
        %p670 = pneg %p263
        %p671 = pneg %p260
        %p672 = pneg %p284
        %p673 = pneg %p281
        %p674 = pneg %p305
        %p675 = pneg %p302
        %p676 = pneg %p326
        %p677 = pneg %p323
        %p678 = pneg %p347
        %p679 = pneg %p344
        %p680 = pneg %p368
        %p681 = pneg %p365
        %p682 = pneg %p389
        %p683 = pneg %p386
        %p684 = pneg %p410
        %p685 = pneg %p407
        %p686 = pneg %p438
        %p687 = pneg %p435
        %s688 = sand.u32 %s425, 1
        %s689 = scalar_lea.sflag [#allocation5], %s688
        %s690 = sand.u32 %s425, 1
        %s691 = smul.addr %s690, 8
        %s692 = scalar_lea.vmem [#allocation14], %s691
        %p693 = scmp.lt.s32.totalorder %s42, 1
        %s694 = scalar_select %p693, %s42, 1
        %p695 = scmp.lt.s32.totalorder %s43, 0
        %s696 = scalar_select %p695, %s43, 0
        %s697 = smul.addr %s694, 4
        %s698 = sadd.s32 %s696, %s697
        %s699 = smul.addr %s698, 4
        %s700 = scalar_lea.vmem %s1, %s699
        %p701 = scmp.lt.s32.totalorder %s42, 1
        %s702 = scalar_select %p701, %s42, 1
        %s703 = smul.addr %s702, 4
        %s704 = smul.addr %s703, 4
        %s705 = scalar_lea.vmem %s2, %s704
        %p706 = scmp.lt.s32.totalorder %s42, 1
        %s707 = scalar_select %p706, %s42, 1
        %s708 = scalar_lea.vmem %s4, %s707
        %v710 = vld [vmem:[%s708] sm:$0x1]
        %v711 = vld [vmem:[%s700] sm:$0xf]
        %v712 = vld [vmem:[%s700 + $0x4] sm:$0xf]
        %v713 = vld [vmem:[%s700 + $0x8] sm:$0xf]
        %v714 = vld [vmem:[%s700 + $0xc] sm:$0xf]
        %v715 = vld [vmem:[#allocation8] sm:$0xf]
        %v720 = vunpack.c.l.b16 %v711
        %v721 = vunpack.c.l.b16 %v712
        %v722 = vunpack.c.l.b16 %v713
        %v723 = vunpack.c.l.b16 %v714
        %v724 = vpack.c.b16 %v721, %v720
        %v725 = vpack.c.b16 %v723, %v722
        %vm726 = vcmask 64512
        %v728 = vsel %vm726, %v724, 0
        %v731 = vsel %vm726, %v725, 0
        %vm733 = vcmask 1043456
        %v735 = vsel %vm733, %v715, 0
        %737 = vmatprep.subr.bf16.mxu0 0
        %738 = vmatpush1.bf16.msra.mxu0 %v735
        %739 = vmatprep.subr.bf16.mxu0 0
        %740 = vmatpush1.bf16.msra.mxu0 0
        %741 = vmatprep.subr.bf16.mxu0 0
        %742 = vmatpush1.bf16.msra.mxu0 0
        %743 = vmatprep.subr.bf16.mxu0 0
        %744 = vmatpush1.bf16.msra.mxu0 0
        %745 = vmatprep.subr.bf16.mxu0 0
        %746 = vmatpush1.bf16.msra.mxu0 0
        %747 = vmatprep.subr.bf16.mxu0 0
        %748 = vmatpush1.bf16.msra.mxu0 0
        %749 = vmatprep.subr.bf16.mxu0 0
        %750 = vmatpush1.bf16.msra.mxu0 0
        %751 = vmatprep.subr.bf16.mxu0 0
        %752 = vmatpush1.bf16.msra.mxu0 0
        %753 = vmatprep.subr.bf16.mxu0 0
        %754 = vmatpush1.bf16.msra.mxu0 0
        %755 = vmatprep.subr.bf16.mxu0 0
        %756 = vmatpush1.bf16.msra.mxu0 0
        %757 = vmatprep.subr.bf16.mxu0 0
        %758 = vmatpush1.bf16.msra.mxu0 0
        %759 = vmatprep.subr.bf16.mxu0 0
        %760 = vmatpush1.bf16.msra.mxu0 0
        %761 = vmatprep.subr.bf16.mxu0 0
        %762 = vmatpush1.bf16.msra.mxu0 0
        %763 = vmatprep.subr.bf16.mxu0 0
        %764 = vmatpush1.bf16.msra.mxu0 0
        %765 = vmatprep.subr.bf16.mxu0 0
        %766 = vmatpush1.bf16.msra.mxu0 0
        %767 = vmatprep.subr.bf16.mxu0 0
        %768 = vmatpush1.bf16.msra.mxu0 0
        %769 = vmatprep.mubr.bf16.mxu0 0
        %770 = vmatmul.mubr.bf16.gmra.mrb[0].mxu0 %v728
        %v771 = vpop.f32.mrb[0].mxu0
        %v772 = vadd.f32 0.0, %v771
        %v773 = vpop.f32.mrb[0].mxu0
        %v774 = vpop.f32.mrb[0].mxu0
        %v775 = vadd.f32 0.0, %v774
        %v776 = vpop.f32.mrb[0].mxu0
        %777 = vmatprep.mubr.bf16.mxu0 0
        %778 = vmatmul.mubr.bf16.gmra.mrb[0].mxu0 %v731
        %v779 = vpop.f32.mrb[0].mxu0
        %v780 = vadd.f32 0.0, %v779
        %v781 = vpop.f32.mrb[0].mxu0
        %v782 = vpop.f32.mrb[0].mxu0
        %v783 = vadd.f32 0.0, %v782
        %v784 = vpop.f32.mrb[0].mxu0
        %785 = vdwg.mxu0
        %v786 = vpack.c.bf16 %v775, %v772
        %v787 = vpack.c.bf16 %v783, %v780
        %v790 = vunpack.c.l.b16 %v786
        %v791 = vunpack.c.h.b16 %v786
        %v792 = vunpack.c.l.b16 %v787
        %v793 = vunpack.c.h.b16 %v787
        %v794 = vpack.c.b16 %v790, %v790
        %v795 = vpack.c.b16 %v791, %v791
        %v796 = vpack.c.b16 %v792, %v792
        %v797 = vpack.c.b16 %v793, %v793
        %v798 = vld [vmem:[%s705] sm:$0xf]
        %v799 = vld [vmem:[%s705 + $0x4] sm:$0xf]
        %v800 = vld [vmem:[%s705 + $0x8] sm:$0xf]
        %v801 = vld [vmem:[%s705 + $0xc] sm:$0xf]
        %v802 = vld [vmem:[%s607] sm:$0xf]
        %v803 = vld [vmem:[%s607 + $0x4] sm:$0xf]
        %v804 = vld [vmem:[%s607 + $0x8] sm:$0xf]
        %v805 = vld [vmem:[%s607 + $0xc] sm:$0xf]
        %v807 = vlaneseq
        %v808 = vshrl.u32 %v807, 7
        %v809 = vsub.s32 0, %v808
        %v810 = vrot.slane %v710, %v809
        %v813 = vsel %vm726, %v794, 0
        %v816 = vsel %vm726, %v798, 0
        %818 = vmatprep.subr.bf16.mxu0 0
        %819 = vmatpush1.bf16.xpose.msra.mxu0 %v816
        %820 = vmatprep.subr.bf16.mxu0 0
        %821 = vmatpush1.bf16.xpose.msra.mxu0 0
        %822 = vmatprep.subr.bf16.mxu0 0
        %823 = vmatpush1.bf16.xpose.msra.mxu0 0
        %824 = vmatprep.subr.bf16.mxu0 0
        %825 = vmatpush1.bf16.xpose.msra.mxu0 0
        %826 = vmatprep.subr.bf16.mxu0 0
        %827 = vmatpush1.bf16.xpose.msra.mxu0 0
        %828 = vmatprep.subr.bf16.mxu0 0
        %829 = vmatpush1.bf16.xpose.msra.mxu0 0
        %830 = vmatprep.subr.bf16.mxu0 0
        %831 = vmatpush1.bf16.xpose.msra.mxu0 0
        %832 = vmatprep.subr.bf16.mxu0 0
        %833 = vmatpush1.bf16.xpose.msra.mxu0 0
        %834 = vmatprep.subr.bf16.mxu0 0
        %835 = vmatpush1.bf16.xpose.msra.mxu0 0
        %836 = vmatprep.subr.bf16.mxu0 0
        %837 = vmatpush1.bf16.xpose.msra.mxu0 0
        %838 = vmatprep.subr.bf16.mxu0 0
        %839 = vmatpush1.bf16.xpose.msra.mxu0 0
        %840 = vmatprep.subr.bf16.mxu0 0
        %841 = vmatpush1.bf16.xpose.msra.mxu0 0
        %842 = vmatprep.subr.bf16.mxu0 0
        %843 = vmatpush1.bf16.xpose.msra.mxu0 0
        %844 = vmatprep.subr.bf16.mxu0 0
        %845 = vmatpush1.bf16.xpose.msra.mxu0 0
        %846 = vmatprep.subr.bf16.mxu0 0
        %847 = vmatpush1.bf16.xpose.msra.mxu0 0
        %848 = vmatprep.subr.bf16.mxu0 0
        %849 = vmatpush1.bf16.xpose.msra.mxu0 0
        %850 = vmatprep.mubr.bf16.mxu0 0
        %851 = vmatmul.mubr.bf16.gmra.mrb[0].mxu0 %v813
        %v852 = vpop.f32.mrb[0].mxu0
        %v853 = vadd.f32 %v810, %v852
        %v854 = vpop.f32.mrb[0].mxu0
        %v855 = vpop.f32.mrb[0].mxu0
        %v856 = vpop.f32.mrb[0].mxu0
        %857 = vdwg.mxu0
        %v859 = vsel %vm726, %v795, 0
        %v862 = vsel %vm726, %v799, 0
        %864 = vmatprep.subr.bf16.mxu0 0
        %865 = vmatpush1.bf16.xpose.msra.mxu0 %v862
        %866 = vmatprep.subr.bf16.mxu0 0
        %867 = vmatpush1.bf16.xpose.msra.mxu0 0
        %868 = vmatprep.subr.bf16.mxu0 0
        %869 = vmatpush1.bf16.xpose.msra.mxu0 0
        %870 = vmatprep.subr.bf16.mxu0 0
        %871 = vmatpush1.bf16.xpose.msra.mxu0 0
        %872 = vmatprep.subr.bf16.mxu0 0
        %873 = vmatpush1.bf16.xpose.msra.mxu0 0
        %874 = vmatprep.subr.bf16.mxu0 0
        %875 = vmatpush1.bf16.xpose.msra.mxu0 0
        %876 = vmatprep.subr.bf16.mxu0 0
        %877 = vmatpush1.bf16.xpose.msra.mxu0 0
        %878 = vmatprep.subr.bf16.mxu0 0
        %879 = vmatpush1.bf16.xpose.msra.mxu0 0
        %880 = vmatprep.subr.bf16.mxu0 0
        %881 = vmatpush1.bf16.xpose.msra.mxu0 0
        %882 = vmatprep.subr.bf16.mxu0 0
        %883 = vmatpush1.bf16.xpose.msra.mxu0 0
        %884 = vmatprep.subr.bf16.mxu0 0
        %885 = vmatpush1.bf16.xpose.msra.mxu0 0
        %886 = vmatprep.subr.bf16.mxu0 0
        %887 = vmatpush1.bf16.xpose.msra.mxu0 0
        %888 = vmatprep.subr.bf16.mxu0 0
        %889 = vmatpush1.bf16.xpose.msra.mxu0 0
        %890 = vmatprep.subr.bf16.mxu0 0
        %891 = vmatpush1.bf16.xpose.msra.mxu0 0
        %892 = vmatprep.subr.bf16.mxu0 0
        %893 = vmatpush1.bf16.xpose.msra.mxu0 0
        %894 = vmatprep.subr.bf16.mxu0 0
        %895 = vmatpush1.bf16.xpose.msra.mxu0 0
        %896 = vmatprep.mubr.bf16.mxu0 0
        %897 = vmatmul.mubr.bf16.gmra.mrb[0].mxu0 %v859
        %v898 = vpop.f32.mrb[0].mxu0
        %v899 = vadd.f32 %v810, %v898
        %v900 = vpop.f32.mrb[0].mxu0
        %v901 = vpop.f32.mrb[0].mxu0
        %v902 = vpop.f32.mrb[0].mxu0
        %903 = vdwg.mxu0
        %v905 = vsel %vm726, %v796, 0
        %v908 = vsel %vm726, %v800, 0
        %910 = vmatprep.subr.bf16.mxu0 0
        %911 = vmatpush1.bf16.xpose.msra.mxu0 %v908
        %912 = vmatprep.subr.bf16.mxu0 0
        %913 = vmatpush1.bf16.xpose.msra.mxu0 0
        %914 = vmatprep.subr.bf16.mxu0 0
        %915 = vmatpush1.bf16.xpose.msra.mxu0 0
        %916 = vmatprep.subr.bf16.mxu0 0
        %917 = vmatpush1.bf16.xpose.msra.mxu0 0
        %918 = vmatprep.subr.bf16.mxu0 0
        %919 = vmatpush1.bf16.xpose.msra.mxu0 0
        %920 = vmatprep.subr.bf16.mxu0 0
        %921 = vmatpush1.bf16.xpose.msra.mxu0 0
        %922 = vmatprep.subr.bf16.mxu0 0
        %923 = vmatpush1.bf16.xpose.msra.mxu0 0
        %924 = vmatprep.subr.bf16.mxu0 0
        %925 = vmatpush1.bf16.xpose.msra.mxu0 0
        %926 = vmatprep.subr.bf16.mxu0 0
        %927 = vmatpush1.bf16.xpose.msra.mxu0 0
        %928 = vmatprep.subr.bf16.mxu0 0
        %929 = vmatpush1.bf16.xpose.msra.mxu0 0
        %930 = vmatprep.subr.bf16.mxu0 0
        %931 = vmatpush1.bf16.xpose.msra.mxu0 0
        %932 = vmatprep.subr.bf16.mxu0 0
        %933 = vmatpush1.bf16.xpose.msra.mxu0 0
        %934 = vmatprep.subr.bf16.mxu0 0
        %935 = vmatpush1.bf16.xpose.msra.mxu0 0
        %936 = vmatprep.subr.bf16.mxu0 0
        %937 = vmatpush1.bf16.xpose.msra.mxu0 0
        %938 = vmatprep.subr.bf16.mxu0 0
        %939 = vmatpush1.bf16.xpose.msra.mxu0 0
        %940 = vmatprep.subr.bf16.mxu0 0
        %941 = vmatpush1.bf16.xpose.msra.mxu0 0
        %942 = vmatprep.mubr.bf16.mxu0 0
        %943 = vmatmul.mubr.bf16.gmra.mrb[0].mxu0 %v905
        %v944 = vpop.f32.mrb[0].mxu0
        %v945 = vadd.f32 %v810, %v944
        %v946 = vpop.f32.mrb[0].mxu0
        %v947 = vpop.f32.mrb[0].mxu0
        %v948 = vpop.f32.mrb[0].mxu0
        %949 = vdwg.mxu0
        %v951 = vsel %vm726, %v797, 0
        %v954 = vsel %vm726, %v801, 0
        %956 = vmatprep.subr.bf16.mxu0 0
        %957 = vmatpush1.bf16.xpose.msra.mxu0 %v954
        %958 = vmatprep.subr.bf16.mxu0 0
        %959 = vmatpush1.bf16.xpose.msra.mxu0 0
        %960 = vmatprep.subr.bf16.mxu0 0
        %961 = vmatpush1.bf16.xpose.msra.mxu0 0
        %962 = vmatprep.subr.bf16.mxu0 0
        %963 = vmatpush1.bf16.xpose.msra.mxu0 0
        %964 = vmatprep.subr.bf16.mxu0 0
        %965 = vmatpush1.bf16.xpose.msra.mxu0 0
        %966 = vmatprep.subr.bf16.mxu0 0
        %967 = vmatpush1.bf16.xpose.msra.mxu0 0
        %968 = vmatprep.subr.bf16.mxu0 0
        %969 = vmatpush1.bf16.xpose.msra.mxu0 0
        %970 = vmatprep.subr.bf16.mxu0 0
        %971 = vmatpush1.bf16.xpose.msra.mxu0 0
        %972 = vmatprep.subr.bf16.mxu0 0
        %973 = vmatpush1.bf16.xpose.msra.mxu0 0
        %974 = vmatprep.subr.bf16.mxu0 0
        %975 = vmatpush1.bf16.xpose.msra.mxu0 0
        %976 = vmatprep.subr.bf16.mxu0 0
        %977 = vmatpush1.bf16.xpose.msra.mxu0 0
        %978 = vmatprep.subr.bf16.mxu0 0
        %979 = vmatpush1.bf16.xpose.msra.mxu0 0
        %980 = vmatprep.subr.bf16.mxu0 0
        %981 = vmatpush1.bf16.xpose.msra.mxu0 0
        %982 = vmatprep.subr.bf16.mxu0 0
        %983 = vmatpush1.bf16.xpose.msra.mxu0 0
        %984 = vmatprep.subr.bf16.mxu0 0
        %985 = vmatpush1.bf16.xpose.msra.mxu0 0
        %986 = vmatprep.subr.bf16.mxu0 0
        %987 = vmatpush1.bf16.xpose.msra.mxu0 0
        %988 = vmatprep.mubr.bf16.mxu0 0
        %989 = vmatmul.mubr.bf16.gmra.mrb[0].mxu0 %v951
        %v990 = vpop.f32.mrb[0].mxu0
        %v991 = vadd.f32 %v810, %v990
        %v992 = vpop.f32.mrb[0].mxu0
        %v993 = vpop.f32.mrb[0].mxu0
        %v994 = vpop.f32.mrb[0].mxu0
        %995 = vdwg.mxu0
        %v996 = vsel %vm726, %v853, -inf
        %997 = vmax.xlane.f32.xlu0 %v996
        %v998 = vpop.xlane.xlu0 %997
        %v999 = vsel %vm726, %v899, -inf
        %1000 = vmax.xlane.f32.xlu0 %v999
        %v1001 = vpop.xlane.xlu0 %1000
        %v1002 = vsel %vm726, %v945, -inf
        %1003 = vmax.xlane.f32.xlu0 %v1002
        %v1004 = vpop.xlane.xlu0 %1003
        %v1005 = vsel %vm726, %v991, -inf
        %1006 = vmax.xlane.f32.xlu0 %v1005
        %v1007 = vpop.xlane.xlu0 %1006
        %v1008 = vsub.f32 %v853, %v998
        %v1009 = vsub.f32 %v899, %v1001
        %v1010 = vsub.f32 %v945, %v1004
        %v1011 = vsub.f32 %v991, %v1007
        %v1012 = vmul.f32 %v1008, 1.442695
        %v1013 = vpow.pop %v1012
        %v1014 = vmul.f32 %v1009, 1.442695
        %v1015 = vpow.pop %v1014
        %v1016 = vmul.f32 %v1010, 1.442695
        %v1017 = vpow.pop %v1016
        %v1018 = vmul.f32 %v1011, 1.442695
        %v1019 = vpow.pop %v1018
        %v1020 = vsel %vm726, %v1013, 0.0
        %1021 = vadd.xlane.f32.xlu0 %v1020
        %v1022 = vpop.xlane.xlu0 %1021
        %v1023 = vsel %vm726, %v1015, 0.0
        %1024 = vadd.xlane.f32.xlu0 %v1023
        %v1025 = vpop.xlane.xlu0 %1024
        %v1026 = vsel %vm726, %v1017, 0.0
        %1027 = vadd.xlane.f32.xlu0 %v1026
        %v1028 = vpop.xlane.xlu0 %1027
        %v1029 = vsel %vm726, %v1019, 0.0
        %1030 = vadd.xlane.f32.xlu0 %v1029
        %v1031 = vpop.xlane.xlu0 %1030
        %v1032 = vrcp.pop %v1022
        %v1033 = vrcp.pop %v1025
        %v1034 = vrcp.pop %v1028
        %v1035 = vrcp.pop %v1031
        %v1036 = vmul.f32 %v1013, %v1032
        %v1037 = vmul.f32 %v1015, %v1033
        %v1038 = vmul.f32 %v1017, %v1034
        %v1039 = vmul.f32 %v1019, %v1035
        %v1040 = vpack.c.bf16 %v1036, %v1036
        %v1041 = vpack.c.bf16 %v1037, %v1037
        %v1042 = vpack.c.bf16 %v1038, %v1038
        %v1043 = vpack.c.bf16 %v1039, %v1039
        %v1045 = vsel %vm726, %v1040, 0
        %v1048 = vsel %vm733, %v802, 0
        %1050 = vmatprep.subr.bf16.mxu0 0
        %1051 = vmatpush1.bf16.msra.mxu0 %v1048
        %1052 = vmatprep.subr.bf16.mxu0 0
        %1053 = vmatpush1.bf16.msra.mxu0 0
        %1054 = vmatprep.subr.bf16.mxu0 0
        %1055 = vmatpush1.bf16.msra.mxu0 0
        %1056 = vmatprep.subr.bf16.mxu0 0
        %1057 = vmatpush1.bf16.msra.mxu0 0
        %1058 = vmatprep.subr.bf16.mxu0 0
        %1059 = vmatpush1.bf16.msra.mxu0 0
        %1060 = vmatprep.subr.bf16.mxu0 0
        %1061 = vmatpush1.bf16.msra.mxu0 0
        %1062 = vmatprep.subr.bf16.mxu0 0
        %1063 = vmatpush1.bf16.msra.mxu0 0
        %1064 = vmatprep.subr.bf16.mxu0 0
        %1065 = vmatpush1.bf16.msra.mxu0 0
        %1066 = vmatprep.subr.bf16.mxu0 0
        %1067 = vmatpush1.bf16.msra.mxu0 0
        %1068 = vmatprep.subr.bf16.mxu0 0
        %1069 = vmatpush1.bf16.msra.mxu0 0
        %1070 = vmatprep.subr.bf16.mxu0 0
        %1071 = vmatpush1.bf16.msra.mxu0 0
        %1072 = vmatprep.subr.bf16.mxu0 0
        %1073 = vmatpush1.bf16.msra.mxu0 0
        %1074 = vmatprep.subr.bf16.mxu0 0
        %1075 = vmatpush1.bf16.msra.mxu0 0
        %1076 = vmatprep.subr.bf16.mxu0 0
        %1077 = vmatpush1.bf16.msra.mxu0 0
        %1078 = vmatprep.subr.bf16.mxu0 0
        %1079 = vmatpush1.bf16.msra.mxu0 0
        %1080 = vmatprep.subr.bf16.mxu0 0
        %1081 = vmatpush1.bf16.msra.mxu0 0
        %1082 = vmatprep.mubr.bf16.mxu0 0
        %1083 = vmatmul.mubr.bf16.gmra.mrb[0].mxu0 %v1045
        %v1084 = vpop.f32.mrb[0].mxu0
        %v1085 = vadd.f32 0.0, %v1084
        %v1086 = vpop.f32.mrb[0].mxu0
        %v1087 = vpop.f32.mrb[0].mxu0
        %v1088 = vpop.f32.mrb[0].mxu0
        %1089 = vdwg.mxu0
        %v1091 = vsel %vm726, %v1041, 0
        %v1094 = vsel %vm733, %v803, 0
        %1096 = vmatprep.subr.bf16.mxu0 0
        %1097 = vmatpush1.bf16.msra.mxu0 %v1094
        %1098 = vmatprep.subr.bf16.mxu0 0
        %1099 = vmatpush1.bf16.msra.mxu0 0
        %1100 = vmatprep.subr.bf16.mxu0 0
        %1101 = vmatpush1.bf16.msra.mxu0 0
        %1102 = vmatprep.subr.bf16.mxu0 0
        %1103 = vmatpush1.bf16.msra.mxu0 0
        %1104 = vmatprep.subr.bf16.mxu0 0
        %1105 = vmatpush1.bf16.msra.mxu0 0
        %1106 = vmatprep.subr.bf16.mxu0 0
        %1107 = vmatpush1.bf16.msra.mxu0 0
        %1108 = vmatprep.subr.bf16.mxu0 0
        %1109 = vmatpush1.bf16.msra.mxu0 0
        %1110 = vmatprep.subr.bf16.mxu0 0
        %1111 = vmatpush1.bf16.msra.mxu0 0
        %1112 = vmatprep.subr.bf16.mxu0 0
        %1113 = vmatpush1.bf16.msra.mxu0 0
        %1114 = vmatprep.subr.bf16.mxu0 0
        %1115 = vmatpush1.bf16.msra.mxu0 0
        %1116 = vmatprep.subr.bf16.mxu0 0
        %1117 = vmatpush1.bf16.msra.mxu0 0
        %1118 = vmatprep.subr.bf16.mxu0 0
        %1119 = vmatpush1.bf16.msra.mxu0 0
        %1120 = vmatprep.subr.bf16.mxu0 0
        %1121 = vmatpush1.bf16.msra.mxu0 0
        %1122 = vmatprep.subr.bf16.mxu0 0
        %1123 = vmatpush1.bf16.msra.mxu0 0
        %1124 = vmatprep.subr.bf16.mxu0 0
        %1125 = vmatpush1.bf16.msra.mxu0 0
        %1126 = vmatprep.subr.bf16.mxu0 0
        %1127 = vmatpush1.bf16.msra.mxu0 0
        %1128 = vmatprep.mubr.bf16.mxu0 0
        %1129 = vmatmul.mubr.bf16.gmra.mrb[0].mxu0 %v1091
        %v1130 = vpop.f32.mrb[0].mxu0
        %v1131 = vadd.f32 0.0, %v1130
        %v1132 = vpop.f32.mrb[0].mxu0
        %v1133 = vpop.f32.mrb[0].mxu0
        %v1134 = vpop.f32.mrb[0].mxu0
        %1135 = vdwg.mxu0
        %v1137 = vsel %vm726, %v1042, 0
        %v1140 = vsel %vm733, %v804, 0
        %1142 = vmatprep.subr.bf16.mxu0 0
        %1143 = vmatpush1.bf16.msra.mxu0 %v1140
        %1144 = vmatprep.subr.bf16.mxu0 0
        %1145 = vmatpush1.bf16.msra.mxu0 0
        %1146 = vmatprep.subr.bf16.mxu0 0
        %1147 = vmatpush1.bf16.msra.mxu0 0
        %1148 = vmatprep.subr.bf16.mxu0 0
        %1149 = vmatpush1.bf16.msra.mxu0 0
        %1150 = vmatprep.subr.bf16.mxu0 0
        %1151 = vmatpush1.bf16.msra.mxu0 0
        %1152 = vmatprep.subr.bf16.mxu0 0
        %1153 = vmatpush1.bf16.msra.mxu0 0
        %1154 = vmatprep.subr.bf16.mxu0 0
        %1155 = vmatpush1.bf16.msra.mxu0 0
        %1156 = vmatprep.subr.bf16.mxu0 0
        %1157 = vmatpush1.bf16.msra.mxu0 0
        %1158 = vmatprep.subr.bf16.mxu0 0
        %1159 = vmatpush1.bf16.msra.mxu0 0
        %1160 = vmatprep.subr.bf16.mxu0 0
        %1161 = vmatpush1.bf16.msra.mxu0 0
        %1162 = vmatprep.subr.bf16.mxu0 0
        %1163 = vmatpush1.bf16.msra.mxu0 0
        %1164 = vmatprep.subr.bf16.mxu0 0
        %1165 = vmatpush1.bf16.msra.mxu0 0
        %1166 = vmatprep.subr.bf16.mxu0 0
        %1167 = vmatpush1.bf16.msra.mxu0 0
        %1168 = vmatprep.subr.bf16.mxu0 0
        %1169 = vmatpush1.bf16.msra.mxu0 0
        %1170 = vmatprep.subr.bf16.mxu0 0
        %1171 = vmatpush1.bf16.msra.mxu0 0
        %1172 = vmatprep.subr.bf16.mxu0 0
        %1173 = vmatpush1.bf16.msra.mxu0 0
        %1174 = vmatprep.mubr.bf16.mxu0 0
        %1175 = vmatmul.mubr.bf16.gmra.mrb[0].mxu0 %v1137
        %v1176 = vpop.f32.mrb[0].mxu0
        %v1177 = vadd.f32 0.0, %v1176
        %v1178 = vpop.f32.mrb[0].mxu0
        %v1179 = vpop.f32.mrb[0].mxu0
        %v1180 = vpop.f32.mrb[0].mxu0
        %1181 = vdwg.mxu0
        %v1183 = vsel %vm726, %v1043, 0
        %v1186 = vsel %vm733, %v805, 0
        %1188 = vmatprep.subr.bf16.mxu0 0
        %1189 = vmatpush1.bf16.msra.mxu0 %v1186
        %1190 = vmatprep.subr.bf16.mxu0 0
        %1191 = vmatpush1.bf16.msra.mxu0 0
        %1192 = vmatprep.subr.bf16.mxu0 0
        %1193 = vmatpush1.bf16.msra.mxu0 0
        %1194 = vmatprep.subr.bf16.mxu0 0
        %1195 = vmatpush1.bf16.msra.mxu0 0
        %1196 = vmatprep.subr.bf16.mxu0 0
        %1197 = vmatpush1.bf16.msra.mxu0 0
        %1198 = vmatprep.subr.bf16.mxu0 0
        %1199 = vmatpush1.bf16.msra.mxu0 0
        %1200 = vmatprep.subr.bf16.mxu0 0
        %1201 = vmatpush1.bf16.msra.mxu0 0
        %1202 = vmatprep.subr.bf16.mxu0 0
        %1203 = vmatpush1.bf16.msra.mxu0 0
        %1204 = vmatprep.subr.bf16.mxu0 0
        %1205 = vmatpush1.bf16.msra.mxu0 0
        %1206 = vmatprep.subr.bf16.mxu0 0
        %1207 = vmatpush1.bf16.msra.mxu0 0
        %1208 = vmatprep.subr.bf16.mxu0 0
        %1209 = vmatpush1.bf16.msra.mxu0 0
        %1210 = vmatprep.subr.bf16.mxu0 0
        %1211 = vmatpush1.bf16.msra.mxu0 0
        %1212 = vmatprep.subr.bf16.mxu0 0
        %1213 = vmatpush1.bf16.msra.mxu0 0
        %1214 = vmatprep.subr.bf16.mxu0 0
        %1215 = vmatpush1.bf16.msra.mxu0 0
        %1216 = vmatprep.subr.bf16.mxu0 0
        %1217 = vmatpush1.bf16.msra.mxu0 0
        %1218 = vmatprep.subr.bf16.mxu0 0
        %1219 = vmatpush1.bf16.msra.mxu0 0
        %1220 = vmatprep.mubr.bf16.mxu0 0
        %1221 = vmatmul.mubr.bf16.gmra.mrb[0].mxu0 %v1183
        %v1222 = vpop.f32.mrb[0].mxu0
        %v1223 = vadd.f32 0.0, %v1222
        %v1224 = vpop.f32.mrb[0].mxu0
        %v1225 = vpop.f32.mrb[0].mxu0
        %v1226 = vpop.f32.mrb[0].mxu0
        %1227 = vdwg.mxu0
        %v1228 = vpack.c.bf16 %v1085, %v1085
        %v1229 = vpack.c.bf16 %v1131, %v1131
        %v1230 = vpack.c.bf16 %v1177, %v1177
        %v1231 = vpack.c.bf16 %v1223, %v1223
        %vm1232 = vcmask 60416
        %1233 = vst.msk [vmem:[#allocation2] sm:$0xf] %vm1232, %v1228
        %v1235 = vunpack.c.l.b16 %v1229
        %v1236 = vpack.c.b16 %v1235, %v1235
        %1237 = vrot.lane.b32.xlu0 %v1236, 8
        %v1238 = vpop.permute.xlu0 %1237
        %vm1240 = vcmask 126016
        %1241 = vst.msk [vmem:[#allocation2] sm:$0xf] %vm1240, %v1238
        %v1243 = vunpack.c.l.b16 %v1230
        %v1244 = vpack.c.b16 %v1243, %v1243
        %1245 = vrot.lane.b32.xlu0 %v1244, 16
        %v1246 = vpop.permute.xlu0 %1245
        %vm1248 = vcmask 191616
        %1249 = vst.msk [vmem:[#allocation2] sm:$0xf] %vm1248, %v1246
        %v1251 = vunpack.c.l.b16 %v1231
        %v1252 = vpack.c.b16 %v1251, %v1251
        %1253 = vrot.lane.b32.xlu0 %v1252, 24
        %v1254 = vpop.permute.xlu0 %1253
        %vm1256 = vcmask 257216
        %1257 = vst.msk [vmem:[#allocation2] sm:$0xf] %vm1256, %v1254
        %v1258 = vld [vmem:[#allocation2] sm:$0xf]
        %v1259 = vld [vmem:[%s6] sm:$0xf]
        %v1260 = vld [vmem:[%s6 + $0x4] sm:$0xf]
        %v1261 = vld [vmem:[%s6 + $0x8] sm:$0xf]
        %v1262 = vld [vmem:[%s6 + $0xc] sm:$0xf]
        %v1263 = vld [vmem:[#allocation9] sm:$0x1]
        %v1265 = vlaneseq
        %v1266 = vshrl.u32 %v1265, 7
        %v1267 = vsub.s32 0, %v1266
        %v1268 = vrot.slane %v1263, %v1267
        %v1274 = vunpack.c.l.b16 %v1259
        %v1275 = vunpack.c.l.b16 %v1260
        %v1276 = vunpack.c.l.b16 %v1261
        %v1277 = vunpack.c.l.b16 %v1262
        %v1278 = vpack.c.b16 %v1275, %v1274
        %v1279 = vpack.c.b16 %v1277, %v1276
        %vm1282 = vcmask 261120
        %v1284 = vsel %vm1282, %v1258, 0
        %1286 = vmatprep.subr.bf16.mxu0 0
        %1287 = vmatpush1.bf16.msra.mxu0 %v1278
        %1288 = vmatprep.subr.bf16.mxu0 0
        %1289 = vmatpush1.bf16.msra.mxu0 %v1279
        %1290 = vmatprep.subr.bf16.mxu0 0
        %1291 = vmatpush1.bf16.msra.mxu0 0
        %1292 = vmatprep.subr.bf16.mxu0 0
        %1293 = vmatpush1.bf16.msra.mxu0 0
        %1294 = vmatprep.subr.bf16.mxu0 0
        %1295 = vmatpush1.bf16.msra.mxu0 0
        %1296 = vmatprep.subr.bf16.mxu0 0
        %1297 = vmatpush1.bf16.msra.mxu0 0
        %1298 = vmatprep.subr.bf16.mxu0 0
        %1299 = vmatpush1.bf16.msra.mxu0 0
        %1300 = vmatprep.subr.bf16.mxu0 0
        %1301 = vmatpush1.bf16.msra.mxu0 0
        %1302 = vmatprep.subr.bf16.mxu0 0
        %1303 = vmatpush1.bf16.msra.mxu0 0
        %1304 = vmatprep.subr.bf16.mxu0 0
        %1305 = vmatpush1.bf16.msra.mxu0 0
        %1306 = vmatprep.subr.bf16.mxu0 0
        %1307 = vmatpush1.bf16.msra.mxu0 0
        %1308 = vmatprep.subr.bf16.mxu0 0
        %1309 = vmatpush1.bf16.msra.mxu0 0
        %1310 = vmatprep.subr.bf16.mxu0 0
        %1311 = vmatpush1.bf16.msra.mxu0 0
        %1312 = vmatprep.subr.bf16.mxu0 0
        %1313 = vmatpush1.bf16.msra.mxu0 0
        %1314 = vmatprep.subr.bf16.mxu0 0
        %1315 = vmatpush1.bf16.msra.mxu0 0
        %1316 = vmatprep.subr.bf16.mxu0 0
        %1317 = vmatpush1.bf16.msra.mxu0 0
        %1318 = vmatprep.mubr.bf16.mxu0 0
        %1319 = vmatmul.mubr.bf16.gmra.mrb[0].mxu0 %v1284
        %v1320 = vpop.f32.mrb[0].mxu0
        %v1321 = vadd.f32 %v1268, %v1320
        %v1322 = vpop.f32.mrb[0].mxu0
        %v1323 = vpop.f32.mrb[0].mxu0
        %v1324 = vpop.f32.mrb[0].mxu0
        %1325 = vdwg.mxu0
        %v1326 = vld [vmem:[%s598] sm:$0xf]
        %v1327 = vunpack.c.l.bf16 %v1326
        %v1328 = vadd.f32 %v1321, %v1327
        %v1329 = vld [vmem:[#allocation11] sm:$0x1]
        %v1330 = vld [vmem:[#allocation12] sm:$0x1]
        %v1331 = vsel %vm1282, %v1328, 0.0
        %1332 = vadd.xlane.f32.xlu0 %v1331
        %v1333 = vpop.xlane.xlu0 %1332
        %v1334 = vrcp.pop 32.0
        %v1335 = vmul.f32 %v1333, %v1334
        %v1336 = vmul.f32 %v1328, %v1328
        %v1337 = vsel %vm1282, %v1336, 0.0
        %1338 = vadd.xlane.f32.xlu0 %v1337
        %v1339 = vpop.xlane.xlu0 %1338
        %v1340 = vmul.f32 %v1339, %v1334
        %v1341 = vmul.f32 %v1335, %v1335
        %v1342 = vsub.f32 %v1340, %v1341
        %v1343 = vsub.f32 %v1328, %v1335
        %v1344 = vadd.f32 %v1342, 1e-05
        %v1345 = vrsqrt.pop %v1344
        %v1346 = vmul.f32 %v1343, %v1345
        %v1348 = vlaneseq
        %v1349 = vshrl.u32 %v1348, 7
        %v1350 = vsub.s32 0, %v1349
        %v1351 = vrot.slane %v1329, %v1350
        %v1353 = vmul.f32 %v1346, %v1351
        %v1355 = vlaneseq
        %v1356 = vshrl.u32 %v1355, 7
        %v1357 = vsub.s32 0, %v1356
        %v1358 = vrot.slane %v1330, %v1357
        %v1360 = vadd.f32 %v1353, %v1358
        %v1361 = vpack.c.bf16 %v1360, %v1360
        %v1362 = vld [vmem:[%s10] sm:$0xf]
        %v1363 = vld [vmem:[%s10 + $0x4] sm:$0xf]
        %v1364 = vld [vmem:[%s10 + $0x8] sm:$0xf]
        %v1365 = vld [vmem:[%s10 + $0xc] sm:$0xf]
        %v1366 = vld [vmem:[%s11] sm:$0x1]
        %v1368 = vlaneseq
        %v1369 = vshrl.u32 %v1368, 7
        %v1370 = vsub.s32 0, %v1369
        %v1371 = vrot.slane %v1366, %v1370
        %v1377 = vunpack.c.l.b16 %v1362
        %v1378 = vunpack.c.l.b16 %v1363
        %v1379 = vunpack.c.l.b16 %v1364
        %v1380 = vunpack.c.l.b16 %v1365
        %v1381 = vpack.c.b16 %v1378, %v1377
        %v1382 = vpack.c.b16 %v1380, %v1379
        %v1386 = vsel %vm1282, %v1361, 0
        %1388 = vmatprep.subr.bf16.mxu0 0
        %1389 = vmatpush1.bf16.msra.mxu0 %v1381
        %1390 = vmatprep.subr.bf16.mxu0 0
        %1391 = vmatpush1.bf16.msra.mxu0 %v1382
        %1392 = vmatprep.subr.bf16.mxu0 0
        %1393 = vmatpush1.bf16.msra.mxu0 0
        %1394 = vmatprep.subr.bf16.mxu0 0
        %1395 = vmatpush1.bf16.msra.mxu0 0
        %1396 = vmatprep.subr.bf16.mxu0 0
        %1397 = vmatpush1.bf16.msra.mxu0 0
        %1398 = vmatprep.subr.bf16.mxu0 0
        %1399 = vmatpush1.bf16.msra.mxu0 0
        %1400 = vmatprep.subr.bf16.mxu0 0
        %1401 = vmatpush1.bf16.msra.mxu0 0
        %1402 = vmatprep.subr.bf16.mxu0 0
        %1403 = vmatpush1.bf16.msra.mxu0 0
        %1404 = vmatprep.subr.bf16.mxu0 0
        %1405 = vmatpush1.bf16.msra.mxu0 0
        %1406 = vmatprep.subr.bf16.mxu0 0
        %1407 = vmatpush1.bf16.msra.mxu0 0
        %1408 = vmatprep.subr.bf16.mxu0 0
        %1409 = vmatpush1.bf16.msra.mxu0 0
        %1410 = vmatprep.subr.bf16.mxu0 0
        %1411 = vmatpush1.bf16.msra.mxu0 0
        %1412 = vmatprep.subr.bf16.mxu0 0
        %1413 = vmatpush1.bf16.msra.mxu0 0
        %1414 = vmatprep.subr.bf16.mxu0 0
        %1415 = vmatpush1.bf16.msra.mxu0 0
        %1416 = vmatprep.subr.bf16.mxu0 0
        %1417 = vmatpush1.bf16.msra.mxu0 0
        %1418 = vmatprep.subr.bf16.mxu0 0
        %1419 = vmatpush1.bf16.msra.mxu0 0
        %1420 = vmatprep.mubr.bf16.mxu0 0
        %1421 = vmatmul.mubr.bf16.gmra.mrb[0].mxu0 %v1386
        %v1422 = vpop.f32.mrb[0].mxu0
        %v1423 = vadd.f32 %v1371, %v1422
        %v1424 = vpop.f32.mrb[0].mxu0
        %v1425 = vpop.f32.mrb[0].mxu0
        %v1426 = vpop.f32.mrb[0].mxu0
        %1427 = vdwg.mxu0
        %v1428 = vmax.f32 %v1423, 0.0
        %v1429 = vpack.c.bf16 %v1428, %v1428
        %v1430 = vld [vmem:[%s12] sm:$0xf]
        %v1431 = vld [vmem:[%s12 + $0x4] sm:$0xf]
        %v1432 = vld [vmem:[%s12 + $0x8] sm:$0xf]
        %v1433 = vld [vmem:[%s12 + $0xc] sm:$0xf]
        %v1434 = vld [vmem:[%s12 + $0x10] sm:$0xf]
        %v1435 = vld [vmem:[%s12 + $0x14] sm:$0xf]
        %v1436 = vld [vmem:[%s12 + $0x18] sm:$0xf]
        %v1437 = vld [vmem:[%s12 + $0x1c] sm:$0xf]
        %v1438 = vld [vmem:[%s12 + $0x20] sm:$0xf]
        %v1439 = vld [vmem:[%s12 + $0x24] sm:$0xf]
        %v1440 = vld [vmem:[%s12 + $0x28] sm:$0xf]
        %v1441 = vld [vmem:[%s12 + $0x2c] sm:$0xf]
        %v1442 = vld [vmem:[%s12 + $0x30] sm:$0xf]
        %v1443 = vld [vmem:[%s12 + $0x34] sm:$0xf]
        %v1444 = vld [vmem:[%s12 + $0x38] sm:$0xf]
        %v1445 = vld [vmem:[%s12 + $0x3c] sm:$0xf]
        %v1446 = vld [vmem:[%s13] sm:$0x1]
        %v1448 = vlaneseq
        %v1449 = vshrl.u32 %v1448, 7
        %v1450 = vsub.s32 0, %v1449
        %v1451 = vrot.slane %v1446, %v1450
        %v1469 = vunpack.c.l.b16 %v1430
        %v1470 = vunpack.c.l.b16 %v1431
        %v1471 = vunpack.c.l.b16 %v1432
        %v1472 = vunpack.c.l.b16 %v1433
        %v1473 = vunpack.c.l.b16 %v1434
        %v1474 = vunpack.c.l.b16 %v1435
        %v1475 = vunpack.c.l.b16 %v1436
        %v1476 = vunpack.c.l.b16 %v1437
        %v1477 = vunpack.c.l.b16 %v1438
        %v1478 = vunpack.c.l.b16 %v1439
        %v1479 = vunpack.c.l.b16 %v1440
        %v1480 = vunpack.c.l.b16 %v1441
        %v1481 = vunpack.c.l.b16 %v1442
        %v1482 = vunpack.c.l.b16 %v1443
        %v1483 = vunpack.c.l.b16 %v1444
        %v1484 = vunpack.c.l.b16 %v1445
        %v1485 = vpack.c.b16 %v1470, %v1469
        %v1486 = vpack.c.b16 %v1472, %v1471
        %v1487 = vpack.c.b16 %v1474, %v1473
        %v1488 = vpack.c.b16 %v1476, %v1475
        %v1489 = vpack.c.b16 %v1478, %v1477
        %v1490 = vpack.c.b16 %v1480, %v1479
        %v1491 = vpack.c.b16 %v1482, %v1481
        %v1492 = vpack.c.b16 %v1484, %v1483
        %1501 = vmatprep.subr.bf16.mxu0 0
        %1502 = vmatpush1.bf16.msra.mxu0 %v1485
        %1503 = vmatprep.subr.bf16.mxu0 0
        %1504 = vmatpush1.bf16.msra.mxu0 %v1486
        %1505 = vmatprep.subr.bf16.mxu0 0
        %1506 = vmatpush1.bf16.msra.mxu0 %v1487
        %1507 = vmatprep.subr.bf16.mxu0 0
        %1508 = vmatpush1.bf16.msra.mxu0 %v1488
        %1509 = vmatprep.subr.bf16.mxu0 0
        %1510 = vmatpush1.bf16.msra.mxu0 %v1489
        %1511 = vmatprep.subr.bf16.mxu0 0
        %1512 = vmatpush1.bf16.msra.mxu0 %v1490
        %1513 = vmatprep.subr.bf16.mxu0 0
        %1514 = vmatpush1.bf16.msra.mxu0 %v1491
        %1515 = vmatprep.subr.bf16.mxu0 0
        %1516 = vmatpush1.bf16.msra.mxu0 %v1492
        %1517 = vmatprep.subr.bf16.mxu0 0
        %1518 = vmatpush1.bf16.msra.mxu0 0
        %1519 = vmatprep.subr.bf16.mxu0 0
        %1520 = vmatpush1.bf16.msra.mxu0 0
        %1521 = vmatprep.subr.bf16.mxu0 0
        %1522 = vmatpush1.bf16.msra.mxu0 0
        %1523 = vmatprep.subr.bf16.mxu0 0
        %1524 = vmatpush1.bf16.msra.mxu0 0
        %1525 = vmatprep.subr.bf16.mxu0 0
        %1526 = vmatpush1.bf16.msra.mxu0 0
        %1527 = vmatprep.subr.bf16.mxu0 0
        %1528 = vmatpush1.bf16.msra.mxu0 0
        %1529 = vmatprep.subr.bf16.mxu0 0
        %1530 = vmatpush1.bf16.msra.mxu0 0
        %1531 = vmatprep.subr.bf16.mxu0 0
        %1532 = vmatpush1.bf16.msra.mxu0 0
        %1533 = vmatprep.mubr.bf16.mxu0 0
        %1534 = vmatmul.mubr.bf16.gmra.mrb[0].mxu0 %v1429
        %v1535 = vpop.f32.mrb[0].mxu0
        %v1536 = vadd.f32 %v1451, %v1535
        %v1537 = vpop.f32.mrb[0].mxu0
        %v1538 = vpop.f32.mrb[0].mxu0
        %v1539 = vpop.f32.mrb[0].mxu0
        %1540 = vdwg.mxu0
        %v1541 = vadd.f32 %v1536, %v1360
        %v1542 = vld [vmem:[%s14] sm:$0x1]
        %v1543 = vld [vmem:[%s15] sm:$0x1]
        %v1544 = vsel %vm1282, %v1541, 0.0
        %1545 = vadd.xlane.f32.xlu0 %v1544
        %v1546 = vpop.xlane.xlu0 %1545
        %v1547 = vmul.f32 %v1546, %v1334
        %v1548 = vmul.f32 %v1541, %v1541
        %v1549 = vsel %vm1282, %v1548, 0.0
        %1550 = vadd.xlane.f32.xlu0 %v1549
        %v1551 = vpop.xlane.xlu0 %1550
        %v1552 = vmul.f32 %v1551, %v1334
        %v1553 = vmul.f32 %v1547, %v1547
        %v1554 = vsub.f32 %v1552, %v1553
        %v1555 = vsub.f32 %v1541, %v1547
        %v1556 = vadd.f32 %v1554, 1e-05
        %v1557 = vrsqrt.pop %v1556
        %v1558 = vmul.f32 %v1555, %v1557
        %v1560 = vlaneseq
        %v1561 = vshrl.u32 %v1560, 7
        %v1562 = vsub.s32 0, %v1561
        %v1563 = vrot.slane %v1542, %v1562
        %v1565 = vmul.f32 %v1558, %v1563
        %v1567 = vlaneseq
        %v1568 = vshrl.u32 %v1567, 7
        %v1569 = vsub.s32 0, %v1568
        %v1570 = vrot.slane %v1543, %v1569
        %v1572 = vadd.f32 %v1565, %v1570
        %1573 = vst.msk [vmem:[%s692] sm:$0xff] %vm1282, %v1572
        %s1574 = sand.u32 %s425, 1
        %s1575 = scalar_lea.sflag [#allocation5], %s1574
        %s1576 = sand.u32 %s425, 1
        %s1577 = smul.addr %s1576, 8
        %s1578 = scalar_lea.vmem [#allocation14], %s1577
        // Predicated region
        $region109: #{tpu_custom_call.1} parent=83 // pred_check
          %p1579 = pneg %p435
        $region110: #{tpu_custom_call.1} parent=83 // pred_check_branch
          %1581 = sbr.rel (%p1579) target = $region112
        $region111: #{tpu_custom_call.1} parent=83 // pred_region
          %s1583 = ssub.s32 128, 128
          %1584 = vsyncadd %s1575, %s1583
          %s1585 = sadd.s32 %s43, %s42
          %s1586 = smul.addr %s1585, 128
          %s1587 = scalar_lea.hbm %s16, %s1586
          %s1589 = sshll.u32 %s1578, 4
          %s1590 = int_to_ptr.vmem [resolvable:$true] %s1589
          %1592 = dma.vmem_to_hbm [thread:$0]  %s1590, 128, %s1587, %s1575
        $region112: #{tpu_custom_call.1} parent=83 // pred_fallthru
          _
      $region84: #{tpu_custom_call.1} parent=5 // pred_fallthru
        _
      %p1593 = scmp.le.s32.totalorder 2, %s33
      // Predicated region
      $region113: #{tpu_custom_call.1} parent=5 // pred_check
        %p1594 = pneg %p1593
      $region114: #{tpu_custom_call.1} parent=5 // pred_check_branch
        %1596 = sbr.rel (%p1594) target = $region116
      $region115: #{tpu_custom_call.1} parent=5 // pred_region
        %s1597 = ssub.s32 %s33, 2
        // Predicated region
        $region117: #{tpu_custom_call.1} parent=115 // pred_check
          %p1598 = pneg %p441
        $region118: #{tpu_custom_call.1} parent=115 // pred_check_branch
          %1600 = sbr.rel (%p1598) target = $region120
        $region119: #{tpu_custom_call.1} parent=115 // pred_region
          %s1601 = sand.u32 %s426, 1
          %s1602 = scalar_lea.sflag [#allocation5], %s1601
          %s1603 = sand.u32 %s426, 1
          %s1604 = smul.addr %s1603, 8
          %s1605 = scalar_lea.vmem [#allocation14], %s1604
          %1606 = dma.done %s1602, 128
        $region120: #{tpu_custom_call.1} parent=115 // pred_fallthru
          _
      $region116: #{tpu_custom_call.1} parent=5 // pred_fallthru
        _
    $region6: #{tpu_custom_call.1} parent=1 // loop_footer
      %s37 = sadd.s32 1, %s33
    $region7: #{tpu_custom_call.1} parent=1 // loop_footer_branch
      %32 = sbr.rel target = $region3
    $region8: #{tpu_custom_call.1} parent=1 // loop_exit
      _
    %1607 = vsyncpa [#allocation4], 1
    %s1608 = scalar_lea.sflag [#allocation4], 1
    %1609 = vsyncpa %s1608, 1
    %1610 = vsyncpa [#allocation7], 1
    %s1611 = scalar_lea.sflag [#allocation7], 1
    %1612 = vsyncpa %s1611, 1
    %1613 = vsyncpa [#allocation10], 1
    %1614 = vsyncpa [#allocation13], 1
    %1615 = vsyncpa [#allocation5], 1
    %s1616 = scalar_lea.sflag [#allocation5], 1
    %1617 = vsyncpa %s1616, 1

// kernel: tpu_custom_call.1
$region0: #{tpu_custom_call.1}
  #allocation0 [shape = 'u32[]', space=smem, size = 0x4, offset = 0x4, fixed_abs, tag = 'smem constant byte address 0x4 - core index']
  #allocation1 [shape = 'u32[144,128]{1,0:T(1,128)}', space=vmem, size = 0x12000, scoped, tag = 'internal scratch']
  #allocation2 [shape = 'bf16[8,32]{1,0:T(8,128)(2,1)}', space=vmem, size = 0x800, scoped, tag = 'scratch operand']
  %s0 = inlined_call_operand.hbm [shape: bf16[2,8,32], index: 0, kind: input, shape index: {}]
  %s1 = inlined_call_operand.vmem [shape: bf16[2,4,8,8], index: 1, kind: input, shape index: {}]
  %s2 = inlined_call_operand.vmem [shape: bf16[2,4,8,8], index: 2, kind: input, shape index: {}]
  %s3 = inlined_call_operand.hbm [shape: bf16[2,4,8,8], index: 3, kind: input, shape index: {}]
  %s4 = inlined_call_operand.vmem [shape: f32[2,1,8], index: 4, kind: input, shape index: {}]
  %s5 = inlined_call_operand.hbm [shape: bf16[8,8], index: 5, kind: input, shape index: {}]
  %s6 = inlined_call_operand.vmem [shape: bf16[32,32], index: 6, kind: input, shape index: {}]
  %s7 = inlined_call_operand.hbm [shape: f32[1,32], index: 7, kind: input, shape index: {}]
  %s8 = inlined_call_operand.hbm [shape: f32[1,32], index: 8, kind: input, shape index: {}]
  %s9 = inlined_call_operand.hbm [shape: f32[1,32], index: 9, kind: input, shape index: {}]
  %s10 = inlined_call_operand.vmem [shape: bf16[32,128], index: 10, kind: input, shape index: {}]
  %s11 = inlined_call_operand.vmem [shape: f32[1,128], index: 11, kind: input, shape index: {}]
  %s12 = inlined_call_operand.vmem [shape: bf16[128,32], index: 12, kind: input, shape index: {}]
  %s13 = inlined_call_operand.vmem [shape: f32[1,32], index: 13, kind: input, shape index: {}]
  %s14 = inlined_call_operand.vmem [shape: f32[1,32], index: 14, kind: input, shape index: {}]
  %s15 = inlined_call_operand.vmem [shape: f32[1,32], index: 15, kind: input, shape index: {}]
  %s16 = inlined_call_operand.hbm [shape: f32[2,8,32], index: 16, kind: output, shape index: {}]
  %s17 = sld [smem:[#allocation0]]
  $region121: #{tpu_custom_call.1} parent=0
    _
  %s19 = ssub.s32 1, %s17
  %s20 = scalar_select 0, %s19, %s17
  $region1: #{tpu_custom_call.1} parent=0
    #allocation3 [shape = 'u8[4096]{0}', space=vmem, size = 0x1000, scoped, tag = 'input window, operand 0']
    #allocation4 [shape = 's32[2]{0}', space=sflag, size = 0x8, scoped, tag = 'scoped memory for tpu_custom_call.1']
    #allocation5 [shape = 's32[2]{0}', space=sflag, size = 0x8, scoped, tag = 'scoped memory for tpu_custom_call.1']
    #allocation6 [shape = 'u8[16384]{0}', space=vmem, size = 0x4000, scoped, tag = 'input window, operand 3']
    #allocation7 [shape = 's32[2]{0}', space=sflag, size = 0x8, scoped, tag = 'scoped memory for tpu_custom_call.1']
    #allocation8 [shape = 'u8[2048]{0}', space=vmem, size = 0x800, scoped, tag = 'input window, operand 5, single buffered']
    #allocation9 [shape = 'u8[512]{0}', space=vmem, size = 0x400, scoped, tag = 'input window, operand 7, single buffered']
    #allocation10 [shape = 's32[1]{0}', space=sflag, size = 0x4, scoped, tag = 'scoped memory for tpu_custom_call.1']
    #allocation11 [shape = 'u8[512]{0}', space=vmem, size = 0x400, scoped, tag = 'input window, operand 8, single buffered']
    #allocation12 [shape = 'u8[512]{0}', space=vmem, size = 0x400, scoped, tag = 'input window, operand 9, single buffered']
    #allocation13 [shape = 's32[1]{0}', space=sflag, size = 0x4, scoped, tag = 'scoped memory for tpu_custom_call.1']
    #allocation14 [shape = 'u8[8192]{0}', space=vmem, size = 0x2000, scoped, tag = 'output window, operand 0']
    %21 = vsyncpa [#allocation4], 0
    %s22 = scalar_lea.sflag [#allocation4], 1
    %23 = vsyncpa %s22, 0
    %24 = vsyncpa [#allocation7], 0
    %s25 = scalar_lea.sflag [#allocation7], 1
    %26 = vsyncpa %s25, 0
    %27 = vsyncpa [#allocation10], 0
    %28 = vsyncpa [#allocation13], 0
    %29 = vsyncpa [#allocation5], 0
    %s30 = scalar_lea.sflag [#allocation5], 1
    %31 = vsyncpa %s30, 0
    loop: start=0, step=1, limit=4
    $region2: #{tpu_custom_call.1} parent=1 // loop_pre_header
      _
    $region3: #{tpu_custom_call.1} parent=1 // loop_header
      %s33 = sphi 0, %s37
      %p34 = scmp.ge.s32.totalorder %s33, 4
      %s40 = sphi 0, %s52
      %s41 = sphi 0, %s48
      %s42 = sphi 0, %s40
      %s43 = sphi 0, %s41
      %s44 = sphi 0, %s42
      %s45 = sphi 0, %s43
      %s57 = sphi 0, %s59
      %s60 = sphi 0, %s57
      %s61 = sphi 0, %s60
      %s77 = sphi 0, %s61
      %s85 = sphi 0, %s87
      %s88 = sphi 0, %s85
      %s89 = sphi 0, %s88
      %s105 = sphi 0, %s89
      %s111 = sphi 0, %s113
      %s114 = sphi 0, %s111
      %s115 = sphi 0, %s114
      %s131 = sphi 0, %s115
      %s137 = sphi 0, %s139
      %s140 = sphi 0, %s137
      %s141 = sphi 0, %s140
      %s157 = sphi 0, %s141
      %s163 = sphi 0, %s165
      %s166 = sphi 0, %s163
      %s167 = sphi 0, %s166
      %s183 = sphi 0, %s167
      %s187 = sphi 0, %s187
      %s189 = sphi 0, %s187
      %s190 = sphi 0, %s189
      %s204 = sphi 0, %s190
      %s208 = sphi 0, %s208
      %s210 = sphi 0, %s208
      %s211 = sphi 0, %s210
      %s225 = sphi 0, %s211
      %s229 = sphi 0, %s229
      %s231 = sphi 0, %s229
      %s232 = sphi 0, %s231
      %s246 = sphi 0, %s232
      %s250 = sphi 0, %s250
      %s252 = sphi 0, %s250
      %s253 = sphi 0, %s252
      %s267 = sphi 0, %s253
      %s271 = sphi 0, %s271
      %s273 = sphi 0, %s271
      %s274 = sphi 0, %s273
      %s288 = sphi 0, %s274
      %s292 = sphi 0, %s292
      %s294 = sphi 0, %s292
      %s295 = sphi 0, %s294
      %s309 = sphi 0, %s295
      %s313 = sphi 0, %s313
      %s315 = sphi 0, %s313
      %s316 = sphi 0, %s315
      %s330 = sphi 0, %s316
      %s334 = sphi 0, %s334
      %s336 = sphi 0, %s334
      %s337 = sphi 0, %s336
      %s351 = sphi 0, %s337
      %s355 = sphi 0, %s355
      %s357 = sphi 0, %s355
      %s358 = sphi 0, %s357
      %s372 = sphi 0, %s358
      %s376 = sphi 0, %s376
      %s378 = sphi 0, %s376
      %s379 = sphi 0, %s378
      %s393 = sphi 0, %s379
      %s397 = sphi 0, %s397
      %s399 = sphi 0, %s397
      %s400 = sphi 0, %s399
      %s414 = sphi 0, %s400
      %s422 = sphi 0, %s424
      %s425 = sphi 0, %s422
      %s426 = sphi 0, %s425
      %s442 = sphi 0, %s426
    $region4: #{tpu_custom_call.1} parent=1 // loop_header_branch
      %36 = sbr.rel (%p34) target = $region8
    $region5: #{tpu_custom_call.1} parent=1 // loop_body
      %s38 = ssub.s32 %s33, 1
      %s39 = ssub.s32 %s33, 2
      %s46 = sadd.s32 1, %s41
      %p47 = scmp.ge.s32.totalorder %s46, 1
      %s48 = scalar_select %p47, 0, %s46
      %s49 = sadd.s32 1, %s40
      %s50 = scalar_select %p47, %s49, %s40
      %p51 = scmp.ge.s32.totalorder %s50, 2
      %s52 = scalar_select %p51, 0, %s50
      %s53 = ssub.s32 %s40, %s52
      %s54 = ssub.s32 %s41, %s48
      %s55 = sor.u32 %s53, %s54
      %p56 = scmp.eq.s32.totalorder %s55, 0
      %s58 = sadd.s32 %s57, 1
      %s59 = scalar_select %p56, %s57, %s58
      %p62 = pneg %p56
      %p63 = scmp.eq.s32.totalorder %s33, 1
      %p64 = por %p62, %p63
      %p65 = scmp.ne.s32.totalorder %s57, %s60
      %p66 = scmp.eq.s32.totalorder %s33, 0
      %p67 = por %p65, %p66
      %p68 = scmp.ne.s32.totalorder %s57, %s60
      %p69 = scmp.eq.s32.totalorder %s38, 1
      %p70 = por %p68, %p69
      %p71 = scmp.ne.s32.totalorder %s60, %s61
      %p72 = scmp.eq.s32.totalorder %s38, 0
      %p73 = por %p71, %p72
      %p74 = scmp.ne.s32.totalorder %s60, %s61
      %p75 = scmp.eq.s32.totalorder %s39, 1
      %p76 = por %p74, %p75
      %p78 = scmp.ne.s32.totalorder %s61, %s77
      %p79 = scmp.eq.s32.totalorder %s39, 0
      %p80 = por %p78, %p79
      %s81 = ssub.s32 %s40, %s52
      %s82 = ssub.s32 %s41, %s48
      %s83 = sor.u32 %s81, %s82
      %p84 = scmp.eq.s32.totalorder %s83, 0
      %s86 = sadd.s32 %s85, 1
      %s87 = scalar_select %p84, %s85, %s86
      %p90 = pneg %p84
      %p91 = scmp.eq.s32.totalorder %s33, 1
      %p92 = por %p90, %p91
      %p93 = scmp.ne.s32.totalorder %s85, %s88
      %p94 = scmp.eq.s32.totalorder %s33, 0
      %p95 = por %p93, %p94
      %p96 = scmp.ne.s32.totalorder %s85, %s88
      %p97 = scmp.eq.s32.totalorder %s38, 1
      %p98 = por %p96, %p97
      %p99 = scmp.ne.s32.totalorder %s88, %s89
      %p100 = scmp.eq.s32.totalorder %s38, 0
      %p101 = por %p99, %p100
      %p102 = scmp.ne.s32.totalorder %s88, %s89
      %p103 = scmp.eq.s32.totalorder %s39, 1
      %p104 = por %p102, %p103
      %p106 = scmp.ne.s32.totalorder %s89, %s105
      %p107 = scmp.eq.s32.totalorder %s39, 0
      %p108 = por %p106, %p107
      %s109 = ssub.s32 %s40, %s52
      %p110 = scmp.eq.s32.totalorder %s109, 0
      %s112 = sadd.s32 %s111, 1
      %s113 = scalar_select %p110, %s111, %s112
      %p116 = pneg %p110
      %p117 = scmp.eq.s32.totalorder %s33, 1
      %p118 = por %p116, %p117
      %p119 = scmp.ne.s32.totalorder %s111, %s114
      %p120 = scmp.eq.s32.totalorder %s33, 0
      %p121 = por %p119, %p120
      %p122 = scmp.ne.s32.totalorder %s111, %s114
      %p123 = scmp.eq.s32.totalorder %s38, 1
      %p124 = por %p122, %p123
      %p125 = scmp.ne.s32.totalorder %s114, %s115
      %p126 = scmp.eq.s32.totalorder %s38, 0
      %p127 = por %p125, %p126
      %p128 = scmp.ne.s32.totalorder %s114, %s115
      %p129 = scmp.eq.s32.totalorder %s39, 1
      %p130 = por %p128, %p129
      %p132 = scmp.ne.s32.totalorder %s115, %s131
      %p133 = scmp.eq.s32.totalorder %s39, 0
      %p134 = por %p132, %p133
      %s135 = ssub.s32 %s40, %s52
      %p136 = scmp.eq.s32.totalorder %s135, 0
      %s138 = sadd.s32 %s137, 1
      %s139 = scalar_select %p136, %s137, %s138
      %p142 = pneg %p136
      %p143 = scmp.eq.s32.totalorder %s33, 1
      %p144 = por %p142, %p143
      %p145 = scmp.ne.s32.totalorder %s137, %s140
      %p146 = scmp.eq.s32.totalorder %s33, 0
      %p147 = por %p145, %p146
      %p148 = scmp.ne.s32.totalorder %s137, %s140
      %p149 = scmp.eq.s32.totalorder %s38, 1
      %p150 = por %p148, %p149
      %p151 = scmp.ne.s32.totalorder %s140, %s141
      %p152 = scmp.eq.s32.totalorder %s38, 0
      %p153 = por %p151, %p152
      %p154 = scmp.ne.s32.totalorder %s140, %s141
      %p155 = scmp.eq.s32.totalorder %s39, 1
      %p156 = por %p154, %p155
      %p158 = scmp.ne.s32.totalorder %s141, %s157
      %p159 = scmp.eq.s32.totalorder %s39, 0
      %p160 = por %p158, %p159
      %s161 = ssub.s32 %s40, %s52
      %p162 = scmp.eq.s32.totalorder %s161, 0
      %s164 = sadd.s32 %s163, 1
      %s165 = scalar_select %p162, %s163, %s164
      %p168 = pneg %p162
      %p169 = scmp.eq.s32.totalorder %s33, 1
      %p170 = por %p168, %p169
      %p171 = scmp.ne.s32.totalorder %s163, %s166
      %p172 = scmp.eq.s32.totalorder %s33, 0
      %p173 = por %p171, %p172
      %p174 = scmp.ne.s32.totalorder %s163, %s166
      %p175 = scmp.eq.s32.totalorder %s38, 1
      %p176 = por %p174, %p175
      %p177 = scmp.ne.s32.totalorder %s166, %s167
      %p178 = scmp.eq.s32.totalorder %s38, 0
      %p179 = por %p177, %p178
      %p180 = scmp.ne.s32.totalorder %s166, %s167
      %p181 = scmp.eq.s32.totalorder %s39, 1
      %p182 = por %p180, %p181
      %p184 = scmp.ne.s32.totalorder %s167, %s183
      %p185 = scmp.eq.s32.totalorder %s39, 0
      %p186 = por %p184, %p185
      %s188 = sadd.s32 %s187, 1
      %p191 = scmp.eq.s32.totalorder %s33, 1
      %p192 = scmp.ne.s32.totalorder %s187, %s189
      %p193 = scmp.eq.s32.totalorder %s33, 0
      %p194 = por %p192, %p193
      %p195 = scmp.ne.s32.totalorder %s187, %s189
      %p196 = scmp.eq.s32.totalorder %s38, 1
      %p197 = por %p195, %p196
      %p198 = scmp.ne.s32.totalorder %s189, %s190
      %p199 = scmp.eq.s32.totalorder %s38, 0
      %p200 = por %p198, %p199
      %p201 = scmp.ne.s32.totalorder %s189, %s190
      %p202 = scmp.eq.s32.totalorder %s39, 1
      %p203 = por %p201, %p202
      %p205 = scmp.ne.s32.totalorder %s190, %s204
      %p206 = scmp.eq.s32.totalorder %s39, 0
      %p207 = por %p205, %p206
      %s209 = sadd.s32 %s208, 1
      %p212 = scmp.eq.s32.totalorder %s33, 1
      %p213 = scmp.ne.s32.totalorder %s208, %s210
      %p214 = scmp.eq.s32.totalorder %s33, 0
      %p215 = por %p213, %p214
      %p216 = scmp.ne.s32.totalorder %s208, %s210
      %p217 = scmp.eq.s32.totalorder %s38, 1
      %p218 = por %p216, %p217
      %p219 = scmp.ne.s32.totalorder %s210, %s211
      %p220 = scmp.eq.s32.totalorder %s38, 0
      %p221 = por %p219, %p220
      %p222 = scmp.ne.s32.totalorder %s210, %s211
      %p223 = scmp.eq.s32.totalorder %s39, 1
      %p224 = por %p222, %p223
      %p226 = scmp.ne.s32.totalorder %s211, %s225
      %p227 = scmp.eq.s32.totalorder %s39, 0
      %p228 = por %p226, %p227
      %s230 = sadd.s32 %s229, 1
      %p233 = scmp.eq.s32.totalorder %s33, 1
      %p234 = scmp.ne.s32.totalorder %s229, %s231
      %p235 = scmp.eq.s32.totalorder %s33, 0
      %p236 = por %p234, %p235
      %p237 = scmp.ne.s32.totalorder %s229, %s231
      %p238 = scmp.eq.s32.totalorder %s38, 1
      %p239 = por %p237, %p238
      %p240 = scmp.ne.s32.totalorder %s231, %s232
      %p241 = scmp.eq.s32.totalorder %s38, 0
      %p242 = por %p240, %p241
      %p243 = scmp.ne.s32.totalorder %s231, %s232
      %p244 = scmp.eq.s32.totalorder %s39, 1
      %p245 = por %p243, %p244
      %p247 = scmp.ne.s32.totalorder %s232, %s246
      %p248 = scmp.eq.s32.totalorder %s39, 0
      %p249 = por %p247, %p248
      %s251 = sadd.s32 %s250, 1
      %p254 = scmp.eq.s32.totalorder %s33, 1
      %p255 = scmp.ne.s32.totalorder %s250, %s252
      %p256 = scmp.eq.s32.totalorder %s33, 0
      %p257 = por %p255, %p256
      %p258 = scmp.ne.s32.totalorder %s250, %s252
      %p259 = scmp.eq.s32.totalorder %s38, 1
      %p260 = por %p258, %p259
      %p261 = scmp.ne.s32.totalorder %s252, %s253
      %p262 = scmp.eq.s32.totalorder %s38, 0
      %p263 = por %p261, %p262
      %p264 = scmp.ne.s32.totalorder %s252, %s253
      %p265 = scmp.eq.s32.totalorder %s39, 1
      %p266 = por %p264, %p265
      %p268 = scmp.ne.s32.totalorder %s253, %s267
      %p269 = scmp.eq.s32.totalorder %s39, 0
      %p270 = por %p268, %p269
      %s272 = sadd.s32 %s271, 1
      %p275 = scmp.eq.s32.totalorder %s33, 1
      %p276 = scmp.ne.s32.totalorder %s271, %s273
      %p277 = scmp.eq.s32.totalorder %s33, 0
      %p278 = por %p276, %p277
      %p279 = scmp.ne.s32.totalorder %s271, %s273
      %p280 = scmp.eq.s32.totalorder %s38, 1
      %p281 = por %p279, %p280
      %p282 = scmp.ne.s32.totalorder %s273, %s274
      %p283 = scmp.eq.s32.totalorder %s38, 0
      %p284 = por %p282, %p283
      %p285 = scmp.ne.s32.totalorder %s273, %s274
      %p286 = scmp.eq.s32.totalorder %s39, 1
      %p287 = por %p285, %p286
      %p289 = scmp.ne.s32.totalorder %s274, %s288
      %p290 = scmp.eq.s32.totalorder %s39, 0
      %p291 = por %p289, %p290
      %s293 = sadd.s32 %s292, 1
      %p296 = scmp.eq.s32.totalorder %s33, 1
      %p297 = scmp.ne.s32.totalorder %s292, %s294
      %p298 = scmp.eq.s32.totalorder %s33, 0
      %p299 = por %p297, %p298
      %p300 = scmp.ne.s32.totalorder %s292, %s294
      %p301 = scmp.eq.s32.totalorder %s38, 1
      %p302 = por %p300, %p301
      %p303 = scmp.ne.s32.totalorder %s294, %s295
      %p304 = scmp.eq.s32.totalorder %s38, 0
      %p305 = por %p303, %p304
      %p306 = scmp.ne.s32.totalorder %s294, %s295
      %p307 = scmp.eq.s32.totalorder %s39, 1
      %p308 = por %p306, %p307
      %p310 = scmp.ne.s32.totalorder %s295, %s309
      %p311 = scmp.eq.s32.totalorder %s39, 0
      %p312 = por %p310, %p311
      %s314 = sadd.s32 %s313, 1
      %p317 = scmp.eq.s32.totalorder %s33, 1
      %p318 = scmp.ne.s32.totalorder %s313, %s315
      %p319 = scmp.eq.s32.totalorder %s33, 0
      %p320 = por %p318, %p319
      %p321 = scmp.ne.s32.totalorder %s313, %s315
      %p322 = scmp.eq.s32.totalorder %s38, 1
      %p323 = por %p321, %p322
      %p324 = scmp.ne.s32.totalorder %s315, %s316
      %p325 = scmp.eq.s32.totalorder %s38, 0
      %p326 = por %p324, %p325
      %p327 = scmp.ne.s32.totalorder %s315, %s316
      %p328 = scmp.eq.s32.totalorder %s39, 1
      %p329 = por %p327, %p328
      %p331 = scmp.ne.s32.totalorder %s316, %s330
      %p332 = scmp.eq.s32.totalorder %s39, 0
      %p333 = por %p331, %p332
      %s335 = sadd.s32 %s334, 1
      %p338 = scmp.eq.s32.totalorder %s33, 1
      %p339 = scmp.ne.s32.totalorder %s334, %s336
      %p340 = scmp.eq.s32.totalorder %s33, 0
      %p341 = por %p339, %p340
      %p342 = scmp.ne.s32.totalorder %s334, %s336
      %p343 = scmp.eq.s32.totalorder %s38, 1
      %p344 = por %p342, %p343
      %p345 = scmp.ne.s32.totalorder %s336, %s337
      %p346 = scmp.eq.s32.totalorder %s38, 0
      %p347 = por %p345, %p346
      %p348 = scmp.ne.s32.totalorder %s336, %s337
      %p349 = scmp.eq.s32.totalorder %s39, 1
      %p350 = por %p348, %p349
      %p352 = scmp.ne.s32.totalorder %s337, %s351
      %p353 = scmp.eq.s32.totalorder %s39, 0
      %p354 = por %p352, %p353
      %s356 = sadd.s32 %s355, 1
      %p359 = scmp.eq.s32.totalorder %s33, 1
      %p360 = scmp.ne.s32.totalorder %s355, %s357
      %p361 = scmp.eq.s32.totalorder %s33, 0
      %p362 = por %p360, %p361
      %p363 = scmp.ne.s32.totalorder %s355, %s357
      %p364 = scmp.eq.s32.totalorder %s38, 1
      %p365 = por %p363, %p364
      %p366 = scmp.ne.s32.totalorder %s357, %s358
      %p367 = scmp.eq.s32.totalorder %s38, 0
      %p368 = por %p366, %p367
      %p369 = scmp.ne.s32.totalorder %s357, %s358
      %p370 = scmp.eq.s32.totalorder %s39, 1
      %p371 = por %p369, %p370
      %p373 = scmp.ne.s32.totalorder %s358, %s372
      %p374 = scmp.eq.s32.totalorder %s39, 0
      %p375 = por %p373, %p374
      %s377 = sadd.s32 %s376, 1
      %p380 = scmp.eq.s32.totalorder %s33, 1
      %p381 = scmp.ne.s32.totalorder %s376, %s378
      %p382 = scmp.eq.s32.totalorder %s33, 0
      %p383 = por %p381, %p382
      %p384 = scmp.ne.s32.totalorder %s376, %s378
      %p385 = scmp.eq.s32.totalorder %s38, 1
      %p386 = por %p384, %p385
      %p387 = scmp.ne.s32.totalorder %s378, %s379
      %p388 = scmp.eq.s32.totalorder %s38, 0
      %p389 = por %p387, %p388
      %p390 = scmp.ne.s32.totalorder %s378, %s379
      %p391 = scmp.eq.s32.totalorder %s39, 1
      %p392 = por %p390, %p391
      %p394 = scmp.ne.s32.totalorder %s379, %s393
      %p395 = scmp.eq.s32.totalorder %s39, 0
      %p396 = por %p394, %p395
      %s398 = sadd.s32 %s397, 1
      %p401 = scmp.eq.s32.totalorder %s33, 1
      %p402 = scmp.ne.s32.totalorder %s397, %s399
      %p403 = scmp.eq.s32.totalorder %s33, 0
      %p404 = por %p402, %p403
      %p405 = scmp.ne.s32.totalorder %s397, %s399
      %p406 = scmp.eq.s32.totalorder %s38, 1
      %p407 = por %p405, %p406
      %p408 = scmp.ne.s32.totalorder %s399, %s400
      %p409 = scmp.eq.s32.totalorder %s38, 0
      %p410 = por %p408, %p409
      %p411 = scmp.ne.s32.totalorder %s399, %s400
      %p412 = scmp.eq.s32.totalorder %s39, 1
      %p413 = por %p411, %p412
      %p415 = scmp.ne.s32.totalorder %s400, %s414
      %p416 = scmp.eq.s32.totalorder %s39, 0
      %p417 = por %p415, %p416
      %s418 = ssub.s32 %s40, %s52
      %s419 = ssub.s32 %s41, %s48
      %s420 = sor.u32 %s418, %s419
      %p421 = scmp.eq.s32.totalorder %s420, 0
      %s423 = sadd.s32 %s422, 1
      %s424 = scalar_select %p421, %s422, %s423
      %p427 = pneg %p421
      %p428 = scmp.eq.s32.totalorder %s33, 1
      %p429 = por %p427, %p428
      %p430 = scmp.ne.s32.totalorder %s422, %s425
      %p431 = scmp.eq.s32.totalorder %s33, 0
      %p432 = por %p430, %p431
      %p433 = scmp.ne.s32.totalorder %s422, %s425
      %p434 = scmp.eq.s32.totalorder %s38, 1
      %p435 = por %p433, %p434
      %p436 = scmp.ne.s32.totalorder %s425, %s426
      %p437 = scmp.eq.s32.totalorder %s38, 0
      %p438 = por %p436, %p437
      %p439 = scmp.ne.s32.totalorder %s425, %s426
      %p440 = scmp.eq.s32.totalorder %s39, 1
      %p441 = por %p439, %p440
      %p443 = scmp.ne.s32.totalorder %s426, %s442
      %p444 = scmp.eq.s32.totalorder %s39, 0
      %p445 = por %p443, %p444
      %p446 = scmp.le.s32.totalorder 1, %s33
      %p447 = scmp.lt.s32.totalorder %s33, 3
      %p448 = pnand %p446, %p447
      %p449 = pneg %p448
      // Predicated region
      $region9: #{tpu_custom_call.1} parent=5 // pred_check
        _
      $region10: #{tpu_custom_call.1} parent=5 // pred_check_branch
        %451 = sbr.rel (%p448) target = $region12
      $region11: #{tpu_custom_call.1} parent=5 // pred_region
        %s452 = ssub.s32 %s33, 1
        // Predicated region
        $region13: #{tpu_custom_call.1} parent=11 // pred_check
          %p453 = pneg %p200
        $region14: #{tpu_custom_call.1} parent=11 // pred_check_branch
          %455 = sbr.rel (%p453) target = $region16
        $region15: #{tpu_custom_call.1} parent=11 // pred_region
          %s457 = ssub.s32 64, 64
          %458 = vsyncadd [#allocation7], %s457
          %s460 = sshll.u32 [#allocation8], 4
          %s461 = int_to_ptr.vmem [resolvable:$true] %s460
          %463 = dma.hbm_to_vmem [thread:$0]  %s5, 64, %s461, [#allocation7]
        $region16: #{tpu_custom_call.1} parent=11 // pred_fallthru
          _
        // Predicated region
        $region17: #{tpu_custom_call.1} parent=11 // pred_check
          %p464 = pneg %p221
        $region18: #{tpu_custom_call.1} parent=11 // pred_check_branch
          %466 = sbr.rel (%p464) target = $region20
        $region19: #{tpu_custom_call.1} parent=11 // pred_region
          _
        $region20: #{tpu_custom_call.1} parent=11 // pred_fallthru
          _
        // Predicated region
        $region21: #{tpu_custom_call.1} parent=11 // pred_check
          %p467 = pneg %p242
        $region22: #{tpu_custom_call.1} parent=11 // pred_check_branch
          %469 = sbr.rel (%p467) target = $region24
        $region23: #{tpu_custom_call.1} parent=11 // pred_region
          %s471 = ssub.s32 16, 16
          %472 = vsyncadd [#allocation10], %s471
          %s474 = sshll.u32 [#allocation9], 4
          %s475 = int_to_ptr.vmem [resolvable:$true] %s474
          %477 = dma.hbm_to_vmem [thread:$0]  %s7, 16, %s475, [#allocation10]
        $region24: #{tpu_custom_call.1} parent=11 // pred_fallthru
          _
        // Predicated region
        $region25: #{tpu_custom_call.1} parent=11 // pred_check
          %p478 = pneg %p263
        $region26: #{tpu_custom_call.1} parent=11 // pred_check_branch
          %480 = sbr.rel (%p478) target = $region28
        $region27: #{tpu_custom_call.1} parent=11 // pred_region
          %s482 = ssub.s32 16, 16
          %483 = vsyncadd [#allocation10], %s482
          %s485 = sshll.u32 [#allocation11], 4
          %s486 = int_to_ptr.vmem [resolvable:$true] %s485
          %488 = dma.hbm_to_vmem [thread:$0]  %s8, 16, %s486, [#allocation10]
        $region28: #{tpu_custom_call.1} parent=11 // pred_fallthru
          _
        // Predicated region
        $region29: #{tpu_custom_call.1} parent=11 // pred_check
          %p489 = pneg %p284
        $region30: #{tpu_custom_call.1} parent=11 // pred_check_branch
          %491 = sbr.rel (%p489) target = $region32
        $region31: #{tpu_custom_call.1} parent=11 // pred_region
          %s493 = ssub.s32 16, 16
          %494 = vsyncadd [#allocation13], %s493
          %s496 = sshll.u32 [#allocation12], 4
          %s497 = int_to_ptr.vmem [resolvable:$true] %s496
          %499 = dma.hbm_to_vmem [thread:$0]  %s9, 16, %s497, [#allocation13]
        $region32: #{tpu_custom_call.1} parent=11 // pred_fallthru
          _
        // Predicated region
        $region33: #{tpu_custom_call.1} parent=11 // pred_check
          %p500 = pneg %p305
        $region34: #{tpu_custom_call.1} parent=11 // pred_check_branch
          %502 = sbr.rel (%p500) target = $region36
        $region35: #{tpu_custom_call.1} parent=11 // pred_region
          _
        $region36: #{tpu_custom_call.1} parent=11 // pred_fallthru
          _
        // Predicated region
        $region37: #{tpu_custom_call.1} parent=11 // pred_check
          %p503 = pneg %p326
        $region38: #{tpu_custom_call.1} parent=11 // pred_check_branch
          %505 = sbr.rel (%p503) target = $region40
        $region39: #{tpu_custom_call.1} parent=11 // pred_region
          _
        $region40: #{tpu_custom_call.1} parent=11 // pred_fallthru
          _
        // Predicated region
        $region41: #{tpu_custom_call.1} parent=11 // pred_check
          %p506 = pneg %p347
        $region42: #{tpu_custom_call.1} parent=11 // pred_check_branch
          %508 = sbr.rel (%p506) target = $region44
        $region43: #{tpu_custom_call.1} parent=11 // pred_region
          _
        $region44: #{tpu_custom_call.1} parent=11 // pred_fallthru
          _
        // Predicated region
        $region45: #{tpu_custom_call.1} parent=11 // pred_check
          %p509 = pneg %p368
        $region46: #{tpu_custom_call.1} parent=11 // pred_check_branch
          %511 = sbr.rel (%p509) target = $region48
        $region47: #{tpu_custom_call.1} parent=11 // pred_region
          _
        $region48: #{tpu_custom_call.1} parent=11 // pred_fallthru
          _
        // Predicated region
        $region49: #{tpu_custom_call.1} parent=11 // pred_check
          %p512 = pneg %p389
        $region50: #{tpu_custom_call.1} parent=11 // pred_check_branch
          %514 = sbr.rel (%p512) target = $region52
        $region51: #{tpu_custom_call.1} parent=11 // pred_region
          _
        $region52: #{tpu_custom_call.1} parent=11 // pred_fallthru
          _
        // Predicated region
        $region53: #{tpu_custom_call.1} parent=11 // pred_check
          %p515 = pneg %p410
        $region54: #{tpu_custom_call.1} parent=11 // pred_check_branch
          %517 = sbr.rel (%p515) target = $region56
        $region55: #{tpu_custom_call.1} parent=11 // pred_region
          _
        $region56: #{tpu_custom_call.1} parent=11 // pred_fallthru
          _
      $region12: #{tpu_custom_call.1} parent=5 // pred_fallthru
        _
      %p518 = scmp.lt.s32.totalorder %s33, 2
      // Predicated region
      $region57: #{tpu_custom_call.1} parent=5 // pred_check
        %p519 = pneg %p518
      $region58: #{tpu_custom_call.1} parent=5 // pred_check_branch
        %521 = sbr.rel (%p519) target = $region60
      $region59: #{tpu_custom_call.1} parent=5 // pred_region
        // Predicated region
        $region61: #{tpu_custom_call.1} parent=59 // pred_check
          %p522 = pneg %p67
        $region62: #{tpu_custom_call.1} parent=59 // pred_check_branch
          %524 = sbr.rel (%p522) target = $region64
        $region63: #{tpu_custom_call.1} parent=59 // pred_region
          %s525 = sand.u32 %s57, 1
          %s526 = scalar_lea.sflag [#allocation4], %s525
          %s527 = sand.u32 %s57, 1
          %s528 = smul.addr %s527, 4
          %s529 = scalar_lea.vmem [#allocation3], %s528
          %s531 = ssub.s32 64, 64
          %532 = vsyncadd %s526, %s531
          %s533 = sadd.s32 %s41, %s40
          %s534 = smul.addr %s533, 64
          %s535 = scalar_lea.hbm %s0, %s534
          %s537 = sshll.u32 %s529, 4
          %s538 = int_to_ptr.vmem [resolvable:$true] %s537
          %540 = dma.hbm_to_vmem [thread:$0]  %s535, 64, %s538, %s526
        $region64: #{tpu_custom_call.1} parent=59 // pred_fallthru
          _
        // Predicated region
        $region65: #{tpu_custom_call.1} parent=59 // pred_check
          %p541 = pneg %p95
        $region66: #{tpu_custom_call.1} parent=59 // pred_check_branch
          %543 = sbr.rel (%p541) target = $region68
        $region67: #{tpu_custom_call.1} parent=59 // pred_region
          %p544 = scmp.lt.s32.totalorder %s40, 1
          %s545 = scalar_select %p544, %s40, 1
          %p546 = scmp.lt.s32.totalorder %s41, 0
          %s547 = scalar_select %p546, %s41, 0
          %s548 = smul.addr %s545, 4
          %s549 = sadd.s32 %s547, %s548
          %s550 = smul.addr %s549, 4
          %s551 = scalar_lea.vmem %s1, %s550
        $region68: #{tpu_custom_call.1} parent=59 // pred_fallthru
          _
        // Predicated region
        $region69: #{tpu_custom_call.1} parent=59 // pred_check
          %p552 = pneg %p121
        $region70: #{tpu_custom_call.1} parent=59 // pred_check_branch
          %554 = sbr.rel (%p552) target = $region72
        $region71: #{tpu_custom_call.1} parent=59 // pred_region
          %p555 = scmp.lt.s32.totalorder %s40, 1
          %s556 = scalar_select %p555, %s40, 1
          %s557 = smul.addr %s556, 4
          %s558 = smul.addr %s557, 4
          %s559 = scalar_lea.vmem %s2, %s558
        $region72: #{tpu_custom_call.1} parent=59 // pred_fallthru
          _
        // Predicated region
        $region73: #{tpu_custom_call.1} parent=59 // pred_check
          %p560 = pneg %p147
        $region74: #{tpu_custom_call.1} parent=59 // pred_check_branch
          %562 = sbr.rel (%p560) target = $region76
        $region75: #{tpu_custom_call.1} parent=59 // pred_region
          %s563 = sand.u32 %s33, 1
          %s564 = scalar_lea.sflag [#allocation7], %s563
          %s565 = sand.u32 %s137, 1
          %s566 = smul.addr %s565, 16
          %s567 = scalar_lea.vmem [#allocation6], %s566
          %s569 = ssub.s32 256, 256
          %570 = vsyncadd %s564, %s569
          %s571 = smul.addr %s40, 4
          %s572 = smul.addr %s571, 64
          %s573 = scalar_lea.hbm %s3, %s572
          %s574 = sshll.u32 %s567, 4
          %s575 = int_to_ptr.vmem [resolvable:$true] %s574
          %580 = dma.hbm_to_vmem [thread:$0]  %s573, 256, %s575, %s564, 64, 64, 4
        $region76: #{tpu_custom_call.1} parent=59 // pred_fallthru
          _
        // Predicated region
        $region77: #{tpu_custom_call.1} parent=59 // pred_check
          %p581 = pneg %p173
        $region78: #{tpu_custom_call.1} parent=59 // pred_check_branch
          %583 = sbr.rel (%p581) target = $region80
        $region79: #{tpu_custom_call.1} parent=59 // pred_region
          %p584 = scmp.lt.s32.totalorder %s40, 1
          %s585 = scalar_select %p584, %s40, 1
          %s586 = scalar_lea.vmem %s4, %s585
        $region80: #{tpu_custom_call.1} parent=59 // pred_fallthru
          _
      $region60: #{tpu_custom_call.1} parent=5 // pred_fallthru
        _
      %p587 = scmp.le.s32.totalorder 1, %s33
      %p588 = scmp.lt.s32.totalorder %s33, 3
      %p589 = pnand %p587, %p588
      %p590 = pneg %p589
      // Predicated region
      $region81: #{tpu_custom_call.1} parent=5 // pred_check
        _
      $region82: #{tpu_custom_call.1} parent=5 // pred_check_branch
        %592 = sbr.rel (%p589) target = $region84
      $region83: #{tpu_custom_call.1} parent=5 // pred_region
        %s593 = ssub.s32 %s33, 1
        %s594 = sand.u32 %s60, 1
        %s595 = scalar_lea.sflag [#allocation4], %s594
        %s596 = sand.u32 %s60, 1
        %s597 = smul.addr %s596, 4
        %s598 = scalar_lea.vmem [#allocation3], %s597
        // Predicated region
        $region85: #{tpu_custom_call.1} parent=83 // pred_check
          %p599 = pneg %p73
        $region86: #{tpu_custom_call.1} parent=83 // pred_check_branch
          %601 = sbr.rel (%p599) target = $region88
        $region87: #{tpu_custom_call.1} parent=83 // pred_region
          %602 = dma.done %s595, 64
        $region88: #{tpu_custom_call.1} parent=83 // pred_fallthru
          _
        %s603 = sand.u32 %s38, 1
        %s604 = scalar_lea.sflag [#allocation7], %s603
        %s605 = sand.u32 %s140, 1
        %s606 = smul.addr %s605, 16
        %s607 = scalar_lea.vmem [#allocation6], %s606
        // Predicated region
        $region89: #{tpu_custom_call.1} parent=83 // pred_check
          %p608 = pneg %p153
        $region90: #{tpu_custom_call.1} parent=83 // pred_check_branch
          %610 = sbr.rel (%p608) target = $region92
        $region91: #{tpu_custom_call.1} parent=83 // pred_region
          %611 = dma.done %s604, 256
        $region92: #{tpu_custom_call.1} parent=83 // pred_fallthru
          _
        // Predicated region
        $region93: #{tpu_custom_call.1} parent=83 // pred_check
          %p612 = pneg %p200
        $region94: #{tpu_custom_call.1} parent=83 // pred_check_branch
          %614 = sbr.rel (%p612) target = $region96
        $region95: #{tpu_custom_call.1} parent=83 // pred_region
          %615 = dma.done [#allocation7], 64
        $region96: #{tpu_custom_call.1} parent=83 // pred_fallthru
          _
        // Predicated region
        $region97: #{tpu_custom_call.1} parent=83 // pred_check
          %p616 = pneg %p242
        $region98: #{tpu_custom_call.1} parent=83 // pred_check_branch
          %618 = sbr.rel (%p616) target = $region100
        $region99: #{tpu_custom_call.1} parent=83 // pred_region
          %619 = dma.done [#allocation10], 16
        $region100: #{tpu_custom_call.1} parent=83 // pred_fallthru
          _
        // Predicated region
        $region101: #{tpu_custom_call.1} parent=83 // pred_check
          %p620 = pneg %p263
        $region102: #{tpu_custom_call.1} parent=83 // pred_check_branch
          %622 = sbr.rel (%p620) target = $region104
        $region103: #{tpu_custom_call.1} parent=83 // pred_region
          %623 = dma.done [#allocation10], 16
        $region104: #{tpu_custom_call.1} parent=83 // pred_fallthru
          _
        // Predicated region
        $region105: #{tpu_custom_call.1} parent=83 // pred_check
          %p624 = pneg %p284
        $region106: #{tpu_custom_call.1} parent=83 // pred_check_branch
          %626 = sbr.rel (%p624) target = $region108
        $region107: #{tpu_custom_call.1} parent=83 // pred_region
          %627 = dma.done [#allocation13], 16
        $region108: #{tpu_custom_call.1} parent=83 // pred_fallthru
          _
        %s628 = sand.u32 %s60, 1
        %s629 = scalar_lea.sflag [#allocation4], %s628
        %s630 = sand.u32 %s60, 1
        %s631 = smul.addr %s630, 4
        %s632 = scalar_lea.vmem [#allocation3], %s631
        %p633 = pneg %p73
        %p634 = pneg %p70
        %p635 = scmp.lt.s32.totalorder %s42, 1
        %s636 = scalar_select %p635, %s42, 1
        %p637 = scmp.lt.s32.totalorder %s43, 0
        %s638 = scalar_select %p637, %s43, 0
        %s639 = smul.addr %s636, 4
        %s640 = sadd.s32 %s638, %s639
        %s641 = smul.addr %s640, 4
        %s642 = scalar_lea.vmem %s1, %s641
        %p643 = pneg %p101
        %p644 = pneg %p98
        %p645 = scmp.lt.s32.totalorder %s42, 1
        %s646 = scalar_select %p645, %s42, 1
        %s647 = smul.addr %s646, 4
        %s648 = smul.addr %s647, 4
        %s649 = scalar_lea.vmem %s2, %s648
        %p650 = pneg %p127
        %p651 = pneg %p124
        %s652 = sand.u32 %s38, 1
        %s653 = scalar_lea.sflag [#allocation7], %s652
        %s654 = sand.u32 %s140, 1
        %s655 = smul.addr %s654, 16
        %s656 = scalar_lea.vmem [#allocation6], %s655
        %p657 = pneg %p153
        %p658 = pneg %p150
        %p659 = scmp.lt.s32.totalorder %s42, 1
        %s660 = scalar_select %p659, %s42, 1
        %s661 = scalar_lea.vmem %s4, %s660
        %p662 = pneg %p179
        %p663 = pneg %p176
        %p664 = pneg %p200
        %p665 = pneg %p197
        %p666 = pneg %p221
        %p667 = pneg %p218
        %p668 = pneg %p242
        %p669 = pneg %p239
        %p670 = pneg %p263
        %p671 = pneg %p260
        %p672 = pneg %p284
        %p673 = pneg %p281
        %p674 = pneg %p305
        %p675 = pneg %p302
        %p676 = pneg %p326
        %p677 = pneg %p323
        %p678 = pneg %p347
        %p679 = pneg %p344
        %p680 = pneg %p368
        %p681 = pneg %p365
        %p682 = pneg %p389
        %p683 = pneg %p386
        %p684 = pneg %p410
        %p685 = pneg %p407
        %p686 = pneg %p438
        %p687 = pneg %p435
        %s688 = sand.u32 %s425, 1
        %s689 = scalar_lea.sflag [#allocation5], %s688
        %s690 = sand.u32 %s425, 1
        %s691 = smul.addr %s690, 8
        %s692 = scalar_lea.vmem [#allocation14], %s691
        %p693 = scmp.lt.s32.totalorder %s42, 1
        %s694 = scalar_select %p693, %s42, 1
        %p695 = scmp.lt.s32.totalorder %s43, 0
        %s696 = scalar_select %p695, %s43, 0
        %s697 = smul.addr %s694, 4
        %s698 = sadd.s32 %s696, %s697
        %s699 = smul.addr %s698, 4
        %s700 = scalar_lea.vmem %s1, %s699
        %p701 = scmp.lt.s32.totalorder %s42, 1
        %s702 = scalar_select %p701, %s42, 1
        %s703 = smul.addr %s702, 4
        %s704 = smul.addr %s703, 4
        %s705 = scalar_lea.vmem %s2, %s704
        %p706 = scmp.lt.s32.totalorder %s42, 1
        %s707 = scalar_select %p706, %s42, 1
        %s708 = scalar_lea.vmem %s4, %s707
        %v710 = vld [vmem:[%s708] sm:$0x1]
        %v711 = vld [vmem:[%s700] sm:$0xf]
        %v712 = vld [vmem:[%s700 + $0x4] sm:$0xf]
        %v713 = vld [vmem:[%s700 + $0x8] sm:$0xf]
        %v714 = vld [vmem:[%s700 + $0xc] sm:$0xf]
        %v715 = vld [vmem:[#allocation8] sm:$0xf]
        %v720 = vunpack.c.l.b16 %v711
        %v721 = vunpack.c.l.b16 %v712
        %v722 = vunpack.c.l.b16 %v713
        %v723 = vunpack.c.l.b16 %v714
        %v724 = vpack.c.b16 %v721, %v720
        %v725 = vpack.c.b16 %v723, %v722
        %vm726 = vcmask 64512
        %v728 = vsel %vm726, %v724, 0
        %v731 = vsel %vm726, %v725, 0
        %vm733 = vcmask 1043456
        %v735 = vsel %vm733, %v715, 0
        %737 = vmatprep.subr.bf16.mxu0 0
        %738 = vmatpush1.bf16.msra.mxu0 %v735
        %739 = vmatprep.subr.bf16.mxu0 0
        %740 = vmatpush1.bf16.msra.mxu0 0
        %741 = vmatprep.subr.bf16.mxu0 0
        %742 = vmatpush1.bf16.msra.mxu0 0
        %743 = vmatprep.subr.bf16.mxu0 0
        %744 = vmatpush1.bf16.msra.mxu0 0
        %745 = vmatprep.subr.bf16.mxu0 0
        %746 = vmatpush1.bf16.msra.mxu0 0
        %747 = vmatprep.subr.bf16.mxu0 0
        %748 = vmatpush1.bf16.msra.mxu0 0
        %749 = vmatprep.subr.bf16.mxu0 0
        %750 = vmatpush1.bf16.msra.mxu0 0
        %751 = vmatprep.subr.bf16.mxu0 0
        %752 = vmatpush1.bf16.msra.mxu0 0
        %753 = vmatprep.subr.bf16.mxu0 0
        %754 = vmatpush1.bf16.msra.mxu0 0
        %755 = vmatprep.subr.bf16.mxu0 0
        %756 = vmatpush1.bf16.msra.mxu0 0
        %757 = vmatprep.subr.bf16.mxu0 0
        %758 = vmatpush1.bf16.msra.mxu0 0
        %759 = vmatprep.subr.bf16.mxu0 0
        %760 = vmatpush1.bf16.msra.mxu0 0
        %761 = vmatprep.subr.bf16.mxu0 0
        %762 = vmatpush1.bf16.msra.mxu0 0
        %763 = vmatprep.subr.bf16.mxu0 0
        %764 = vmatpush1.bf16.msra.mxu0 0
        %765 = vmatprep.subr.bf16.mxu0 0
        %766 = vmatpush1.bf16.msra.mxu0 0
        %767 = vmatprep.subr.bf16.mxu0 0
        %768 = vmatpush1.bf16.msra.mxu0 0
        %769 = vmatprep.mubr.bf16.mxu0 0
        %770 = vmatmul.mubr.bf16.gmra.mrb[0].mxu0 %v728
        %v771 = vpop.f32.mrb[0].mxu0
        %v772 = vadd.f32 0.0, %v771
        %v773 = vpop.f32.mrb[0].mxu0
        %v774 = vpop.f32.mrb[0].mxu0
        %v775 = vadd.f32 0.0, %v774
        %v776 = vpop.f32.mrb[0].mxu0
        %777 = vmatprep.mubr.bf16.mxu0 0
        %778 = vmatmul.mubr.bf16.gmra.mrb[0].mxu0 %v731
        %v779 = vpop.f32.mrb[0].mxu0
        %v780 = vadd.f32 0.0, %v779
        %v781 = vpop.f32.mrb[0].mxu0
        %v782 = vpop.f32.mrb[0].mxu0
        %v783 = vadd.f32 0.0, %v782
        %v784 = vpop.f32.mrb[0].mxu0
        %785 = vdwg.mxu0
        %v786 = vpack.c.bf16 %v775, %v772
        %v787 = vpack.c.bf16 %v783, %v780
        %v790 = vunpack.c.l.b16 %v786
        %v791 = vunpack.c.h.b16 %v786
        %v792 = vunpack.c.l.b16 %v787
        %v793 = vunpack.c.h.b16 %v787
        %v794 = vpack.c.b16 %v790, %v790
        %v795 = vpack.c.b16 %v791, %v791
        %v796 = vpack.c.b16 %v792, %v792
        %v797 = vpack.c.b16 %v793, %v793
        %v798 = vld [vmem:[%s705] sm:$0xf]
        %v799 = vld [vmem:[%s705 + $0x4] sm:$0xf]
        %v800 = vld [vmem:[%s705 + $0x8] sm:$0xf]
        %v801 = vld [vmem:[%s705 + $0xc] sm:$0xf]
        %v802 = vld [vmem:[%s607] sm:$0xf]
        %v803 = vld [vmem:[%s607 + $0x4] sm:$0xf]
        %v804 = vld [vmem:[%s607 + $0x8] sm:$0xf]
        %v805 = vld [vmem:[%s607 + $0xc] sm:$0xf]
        %v807 = vlaneseq
        %v808 = vshrl.u32 %v807, 7
        %v809 = vsub.s32 0, %v808
        %v810 = vrot.slane %v710, %v809
        %v813 = vsel %vm726, %v794, 0
        %v816 = vsel %vm726, %v798, 0
        %818 = vmatprep.subr.bf16.mxu0 0
        %819 = vmatpush1.bf16.xpose.msra.mxu0 %v816
        %820 = vmatprep.subr.bf16.mxu0 0
        %821 = vmatpush1.bf16.xpose.msra.mxu0 0
        %822 = vmatprep.subr.bf16.mxu0 0
        %823 = vmatpush1.bf16.xpose.msra.mxu0 0
        %824 = vmatprep.subr.bf16.mxu0 0
        %825 = vmatpush1.bf16.xpose.msra.mxu0 0
        %826 = vmatprep.subr.bf16.mxu0 0
        %827 = vmatpush1.bf16.xpose.msra.mxu0 0
        %828 = vmatprep.subr.bf16.mxu0 0
        %829 = vmatpush1.bf16.xpose.msra.mxu0 0
        %830 = vmatprep.subr.bf16.mxu0 0
        %831 = vmatpush1.bf16.xpose.msra.mxu0 0
        %832 = vmatprep.subr.bf16.mxu0 0
        %833 = vmatpush1.bf16.xpose.msra.mxu0 0
        %834 = vmatprep.subr.bf16.mxu0 0
        %835 = vmatpush1.bf16.xpose.msra.mxu0 0
        %836 = vmatprep.subr.bf16.mxu0 0
        %837 = vmatpush1.bf16.xpose.msra.mxu0 0
        %838 = vmatprep.subr.bf16.mxu0 0
        %839 = vmatpush1.bf16.xpose.msra.mxu0 0
        %840 = vmatprep.subr.bf16.mxu0 0
        %841 = vmatpush1.bf16.xpose.msra.mxu0 0
        %842 = vmatprep.subr.bf16.mxu0 0
        %843 = vmatpush1.bf16.xpose.msra.mxu0 0
        %844 = vmatprep.subr.bf16.mxu0 0
        %845 = vmatpush1.bf16.xpose.msra.mxu0 0
        %846 = vmatprep.subr.bf16.mxu0 0
        %847 = vmatpush1.bf16.xpose.msra.mxu0 0
        %848 = vmatprep.subr.bf16.mxu0 0
        %849 = vmatpush1.bf16.xpose.msra.mxu0 0
        %850 = vmatprep.mubr.bf16.mxu0 0
        %851 = vmatmul.mubr.bf16.gmra.mrb[0].mxu0 %v813
        %v852 = vpop.f32.mrb[0].mxu0
        %v853 = vadd.f32 %v810, %v852
        %v854 = vpop.f32.mrb[0].mxu0
        %v855 = vpop.f32.mrb[0].mxu0
        %v856 = vpop.f32.mrb[0].mxu0
        %857 = vdwg.mxu0
        %v859 = vsel %vm726, %v795, 0
        %v862 = vsel %vm726, %v799, 0
        %864 = vmatprep.subr.bf16.mxu0 0
        %865 = vmatpush1.bf16.xpose.msra.mxu0 %v862
        %866 = vmatprep.subr.bf16.mxu0 0
        %867 = vmatpush1.bf16.xpose.msra.mxu0 0
        %868 = vmatprep.subr.bf16.mxu0 0
        %869 = vmatpush1.bf16.xpose.msra.mxu0 0
        %870 = vmatprep.subr.bf16.mxu0 0
        %871 = vmatpush1.bf16.xpose.msra.mxu0 0
        %872 = vmatprep.subr.bf16.mxu0 0
        %873 = vmatpush1.bf16.xpose.msra.mxu0 0
        %874 = vmatprep.subr.bf16.mxu0 0
        %875 = vmatpush1.bf16.xpose.msra.mxu0 0
        %876 = vmatprep.subr.bf16.mxu0 0
        %877 = vmatpush1.bf16.xpose.msra.mxu0 0
        %878 = vmatprep.subr.bf16.mxu0 0
        %879 = vmatpush1.bf16.xpose.msra.mxu0 0
        %880 = vmatprep.subr.bf16.mxu0 0
        %881 = vmatpush1.bf16.xpose.msra.mxu0 0
        %882 = vmatprep.subr.bf16.mxu0 0
        %883 = vmatpush1.bf16.xpose.msra.mxu0 0
        %884 = vmatprep.subr.bf16.mxu0 0
        %885 = vmatpush1.bf16.xpose.msra.mxu0 0
        %886 = vmatprep.subr.bf16.mxu0 0
        %887 = vmatpush1.bf16.xpose.msra.mxu0 0
        %888 = vmatprep.subr.bf16.mxu0 0
        %889 = vmatpush1.bf16.xpose.msra.mxu0 0
        %890 = vmatprep.subr.bf16.mxu0 0
        %891 = vmatpush1.bf16.xpose.msra.mxu0 0
        %892 = vmatprep.subr.bf16.mxu0 0
        %893 = vmatpush1.bf16.xpose.msra.mxu0 0
        %894 = vmatprep.subr.bf16.mxu0 0
        %895 = vmatpush1.bf16.xpose.msra.mxu0 0
        %896 = vmatprep.mubr.bf16.mxu0 0
        %897 = vmatmul.mubr.bf16.gmra.mrb[0].mxu0 %v859
        %v898 = vpop.f32.mrb[0].mxu0
        %v899 = vadd.f32 %v810, %v898
        %v900 = vpop.f32.mrb[0].mxu0
        %v901 = vpop.f32.mrb[0].mxu0
        %v902 = vpop.f32.mrb[0].mxu0
        %903 = vdwg.mxu0
        %v905 = vsel %vm726, %v796, 0
        %v908 = vsel %vm726, %v800, 0
        %910 = vmatprep.subr.bf16.mxu0 0
        %911 = vmatpush1.bf16.xpose.msra.mxu0 %v908
        %912 = vmatprep.subr.bf16.mxu0 0
        %913 = vmatpush1.bf16.xpose.msra.mxu0 0
        %914 = vmatprep.subr.bf16.mxu0 0
        %915 = vmatpush1.bf16.xpose.msra.mxu0 0
        %916 = vmatprep.subr.bf16.mxu0 0
        %917 = vmatpush1.bf16.xpose.msra.mxu0 0
        %918 = vmatprep.subr.bf16.mxu0 0
        %919 = vmatpush1.bf16.xpose.msra.mxu0 0
        %920 = vmatprep.subr.bf16.mxu0 0
        %921 = vmatpush1.bf16.xpose.msra.mxu0 0
        %922 = vmatprep.subr.bf16.mxu0 0
        %923 = vmatpush1.bf16.xpose.msra.mxu0 0
        %924 = vmatprep.subr.bf16.mxu0 0
        %925 = vmatpush1.bf16.xpose.msra.mxu0 0
        %926 = vmatprep.subr.bf16.mxu0 0
        %927 = vmatpush1.bf16.xpose.msra.mxu0 0
        %928 = vmatprep.subr.bf16.mxu0 0
        %929 = vmatpush1.bf16.xpose.msra.mxu0 0
        %930 = vmatprep.subr.bf16.mxu0 0
        %931 = vmatpush1.bf16.xpose.msra.mxu0 0
        %932 = vmatprep.subr.bf16.mxu0 0
        %933 = vmatpush1.bf16.xpose.msra.mxu0 0
        %934 = vmatprep.subr.bf16.mxu0 0
        %935 = vmatpush1.bf16.xpose.msra.mxu0 0
        %936 = vmatprep.subr.bf16.mxu0 0
        %937 = vmatpush1.bf16.xpose.msra.mxu0 0
        %938 = vmatprep.subr.bf16.mxu0 0
        %939 = vmatpush1.bf16.xpose.msra.mxu0 0
        %940 = vmatprep.subr.bf16.mxu0 0
        %941 = vmatpush1.bf16.xpose.msra.mxu0 0
        %942 = vmatprep.mubr.bf16.mxu0 0
        %943 = vmatmul.mubr.bf16.gmra.mrb[0].mxu0 %v905
        %v944 = vpop.f32.mrb[0].mxu0
        %v945 = vadd.f32 %v810, %v944
        %v946 = vpop.f32.mrb[0].mxu0
        %v947 = vpop.f32.mrb[0].mxu0
        %v948 = vpop.f32.mrb[0].mxu0
        %949 = vdwg.mxu0
        %v951 = vsel %vm726, %v797, 0
        %v954 = vsel %vm726, %v801, 0
        %956 = vmatprep.subr.bf16.mxu0 0
        %957 = vmatpush1.bf16.xpose.msra.mxu0 %v954
        %958 = vmatprep.subr.bf16.mxu0 0
        %959 = vmatpush1.bf16.xpose.msra.mxu0 0
        %960 = vmatprep.subr.bf16.mxu0 0
        %961 = vmatpush1.bf16.xpose.msra.mxu0 0
        %962 = vmatprep.subr.bf16.mxu0 0
        %963 = vmatpush1.bf16.xpose.msra.mxu0 0
        %964 = vmatprep.subr.bf16.mxu0 0
        %965 = vmatpush1.bf16.xpose.msra.mxu0 0
        %966 = vmatprep.subr.bf16.mxu0 0
        %967 = vmatpush1.bf16.xpose.msra.mxu0 0
        %968 = vmatprep.subr.bf16.mxu0 0
        %969 = vmatpush1.bf16.xpose.msra.mxu0 0
        %970 = vmatprep.subr.bf16.mxu0 0
        %971 = vmatpush1.bf16.xpose.msra.mxu0 0
        %972 = vmatprep.subr.bf16.mxu0 0
        %973 = vmatpush1.bf16.xpose.msra.mxu0 0
        %974 = vmatprep.subr.bf16.mxu0 0
        %975 = vmatpush1.bf16.xpose.msra.mxu0 0
        %976 = vmatprep.subr.bf16.mxu0 0
        %977 = vmatpush1.bf16.xpose.msra.mxu0 0
        %978 = vmatprep.subr.bf16.mxu0 0
        %979 = vmatpush1.bf16.xpose.msra.mxu0 0
        %980 = vmatprep.subr.bf16.mxu0 0
        %981 = vmatpush1.bf16.xpose.msra.mxu0 0
        %982 = vmatprep.subr.bf16.mxu0 0
        %983 = vmatpush1.bf16.xpose.msra.mxu0 0
        %984 = vmatprep.subr.bf16.mxu0 0
        %985 = vmatpush1.bf16.xpose.msra.mxu0 0
        %986 = vmatprep.subr.bf16.mxu0 0
        %987 = vmatpush1.bf16.xpose.msra.mxu0 0
        %988 = vmatprep.mubr.bf16.mxu0 0
        %989 = vmatmul.mubr.bf16.gmra.mrb[0].mxu0 %v951
        %v990 = vpop.f32.mrb[0].mxu0
        %v991 = vadd.f32 %v810, %v990
        %v992 = vpop.f32.mrb[0].mxu0
        %v993 = vpop.f32.mrb[0].mxu0
        %v994 = vpop.f32.mrb[0].mxu0
        %995 = vdwg.mxu0
        %v996 = vsel %vm726, %v853, -inf
        %997 = vmax.xlane.f32.xlu0 %v996
        %v998 = vpop.xlane.xlu0 %997
        %v999 = vsel %vm726, %v899, -inf
        %1000 = vmax.xlane.f32.xlu0 %v999
        %v1001 = vpop.xlane.xlu0 %1000
        %v1002 = vsel %vm726, %v945, -inf
        %1003 = vmax.xlane.f32.xlu0 %v1002
        %v1004 = vpop.xlane.xlu0 %1003
        %v1005 = vsel %vm726, %v991, -inf
        %1006 = vmax.xlane.f32.xlu0 %v1005
        %v1007 = vpop.xlane.xlu0 %1006
        %v1008 = vsub.f32 %v853, %v998
        %v1009 = vsub.f32 %v899, %v1001
        %v1010 = vsub.f32 %v945, %v1004
        %v1011 = vsub.f32 %v991, %v1007
        %v1012 = vmul.f32 %v1008, 1.442695
        %v1013 = vpow.pop %v1012
        %v1014 = vmul.f32 %v1009, 1.442695
        %v1015 = vpow.pop %v1014
        %v1016 = vmul.f32 %v1010, 1.442695
        %v1017 = vpow.pop %v1016
        %v1018 = vmul.f32 %v1011, 1.442695
        %v1019 = vpow.pop %v1018
        %v1020 = vsel %vm726, %v1013, 0.0
        %1021 = vadd.xlane.f32.xlu0 %v1020
        %v1022 = vpop.xlane.xlu0 %1021
        %v1023 = vsel %vm726, %v1015, 0.0
        %1024 = vadd.xlane.f32.xlu0 %v1023
        %v1025 = vpop.xlane.xlu0 %1024
        %v1026 = vsel %vm726, %v1017, 0.0
        %1027 = vadd.xlane.f32.xlu0 %v1026
        %v1028 = vpop.xlane.xlu0 %1027
        %v1029 = vsel %vm726, %v1019, 0.0
        %1030 = vadd.xlane.f32.xlu0 %v1029
        %v1031 = vpop.xlane.xlu0 %1030
        %v1032 = vrcp.pop %v1022
        %v1033 = vrcp.pop %v1025
        %v1034 = vrcp.pop %v1028
        %v1035 = vrcp.pop %v1031
        %v1036 = vmul.f32 %v1013, %v1032
        %v1037 = vmul.f32 %v1015, %v1033
        %v1038 = vmul.f32 %v1017, %v1034
        %v1039 = vmul.f32 %v1019, %v1035
        %v1040 = vpack.c.bf16 %v1036, %v1036
        %v1041 = vpack.c.bf16 %v1037, %v1037
        %v1042 = vpack.c.bf16 %v1038, %v1038
        %v1043 = vpack.c.bf16 %v1039, %v1039
        %v1045 = vsel %vm726, %v1040, 0
        %v1048 = vsel %vm733, %v802, 0
        %1050 = vmatprep.subr.bf16.mxu0 0
        %1051 = vmatpush1.bf16.msra.mxu0 %v1048
        %1052 = vmatprep.subr.bf16.mxu0 0
        %1053 = vmatpush1.bf16.msra.mxu0 0
        %1054 = vmatprep.subr.bf16.mxu0 0
        %1055 = vmatpush1.bf16.msra.mxu0 0
        %1056 = vmatprep.subr.bf16.mxu0 0
        %1057 = vmatpush1.bf16.msra.mxu0 0
        %1058 = vmatprep.subr.bf16.mxu0 0
        %1059 = vmatpush1.bf16.msra.mxu0 0
        %1060 = vmatprep.subr.bf16.mxu0 0
        %1061 = vmatpush1.bf16.msra.mxu0 0
        %1062 = vmatprep.subr.bf16.mxu0 0
        %1063 = vmatpush1.bf16.msra.mxu0 0
        %1064 = vmatprep.subr.bf16.mxu0 0
        %1065 = vmatpush1.bf16.msra.mxu0 0
        %1066 = vmatprep.subr.bf16.mxu0 0
        %1067 = vmatpush1.bf16.msra.mxu0 0
        %1068 = vmatprep.subr.bf16.mxu0 0
        %1069 = vmatpush1.bf16.msra.mxu0 0
        %1070 = vmatprep.subr.bf16.mxu0 0
        %1071 = vmatpush1.bf16.msra.mxu0 0
        %1072 = vmatprep.subr.bf16.mxu0 0
        %1073 = vmatpush1.bf16.msra.mxu0 0
        %1074 = vmatprep.subr.bf16.mxu0 0
        %1075 = vmatpush1.bf16.msra.mxu0 0
        %1076 = vmatprep.subr.bf16.mxu0 0
        %1077 = vmatpush1.bf16.msra.mxu0 0
        %1078 = vmatprep.subr.bf16.mxu0 0
        %1079 = vmatpush1.bf16.msra.mxu0 0
        %1080 = vmatprep.subr.bf16.mxu0 0
        %1081 = vmatpush1.bf16.msra.mxu0 0
        %1082 = vmatprep.mubr.bf16.mxu0 0
        %1083 = vmatmul.mubr.bf16.gmra.mrb[0].mxu0 %v1045
        %v1084 = vpop.f32.mrb[0].mxu0
        %v1085 = vadd.f32 0.0, %v1084
        %v1086 = vpop.f32.mrb[0].mxu0
        %v1087 = vpop.f32.mrb[0].mxu0
        %v1088 = vpop.f32.mrb[0].mxu0
        %1089 = vdwg.mxu0
        %v1091 = vsel %vm726, %v1041, 0
        %v1094 = vsel %vm733, %v803, 0
        %1096 = vmatprep.subr.bf16.mxu0 0
        %1097 = vmatpush1.bf16.msra.mxu0 %v1094
        %1098 = vmatprep.subr.bf16.mxu0 0
        %1099 = vmatpush1.bf16.msra.mxu0 0
        %1100 = vmatprep.subr.bf16.mxu0 0
        %1101 = vmatpush1.bf16.msra.mxu0 0
        %1102 = vmatprep.subr.bf16.mxu0 0
        %1103 = vmatpush1.bf16.msra.mxu0 0
        %1104 = vmatprep.subr.bf16.mxu0 0
        %1105 = vmatpush1.bf16.msra.mxu0 0
        %1106 = vmatprep.subr.bf16.mxu0 0
        %1107 = vmatpush1.bf16.msra.mxu0 0
        %1108 = vmatprep.subr.bf16.mxu0 0
        %1109 = vmatpush1.bf16.msra.mxu0 0
        %1110 = vmatprep.subr.bf16.mxu0 0
        %1111 = vmatpush1.bf16.msra.mxu0 0
        %1112 = vmatprep.subr.bf16.mxu0 0
        %1113 = vmatpush1.bf16.msra.mxu0 0
        %1114 = vmatprep.subr.bf16.mxu0 0
        %1115 = vmatpush1.bf16.msra.mxu0 0
        %1116 = vmatprep.subr.bf16.mxu0 0
        %1117 = vmatpush1.bf16.msra.mxu0 0
        %1118 = vmatprep.subr.bf16.mxu0 0
        %1119 = vmatpush1.bf16.msra.mxu0 0
        %1120 = vmatprep.subr.bf16.mxu0 0
        %1121 = vmatpush1.bf16.msra.mxu0 0
        %1122 = vmatprep.subr.bf16.mxu0 0
        %1123 = vmatpush1.bf16.msra.mxu0 0
        %1124 = vmatprep.subr.bf16.mxu0 0
        %1125 = vmatpush1.bf16.msra.mxu0 0
        %1126 = vmatprep.subr.bf16.mxu0 0
        %1127 = vmatpush1.bf16.msra.mxu0 0
        %1128 = vmatprep.mubr.bf16.mxu0 0
        %1129 = vmatmul.mubr.bf16.gmra.mrb[0].mxu0 %v1091
        %v1130 = vpop.f32.mrb[0].mxu0
        %v1131 = vadd.f32 0.0, %v1130
        %v1132 = vpop.f32.mrb[0].mxu0
        %v1133 = vpop.f32.mrb[0].mxu0
        %v1134 = vpop.f32.mrb[0].mxu0
        %1135 = vdwg.mxu0
        %v1137 = vsel %vm726, %v1042, 0
        %v1140 = vsel %vm733, %v804, 0
        %1142 = vmatprep.subr.bf16.mxu0 0
        %1143 = vmatpush1.bf16.msra.mxu0 %v1140
        %1144 = vmatprep.subr.bf16.mxu0 0
        %1145 = vmatpush1.bf16.msra.mxu0 0
        %1146 = vmatprep.subr.bf16.mxu0 0
        %1147 = vmatpush1.bf16.msra.mxu0 0
        %1148 = vmatprep.subr.bf16.mxu0 0
        %1149 = vmatpush1.bf16.msra.mxu0 0
        %1150 = vmatprep.subr.bf16.mxu0 0
        %1151 = vmatpush1.bf16.msra.mxu0 0
        %1152 = vmatprep.subr.bf16.mxu0 0
        %1153 = vmatpush1.bf16.msra.mxu0 0
        %1154 = vmatprep.subr.bf16.mxu0 0
        %1155 = vmatpush1.bf16.msra.mxu0 0
        %1156 = vmatprep.subr.bf16.mxu0 0
        %1157 = vmatpush1.bf16.msra.mxu0 0
        %1158 = vmatprep.subr.bf16.mxu0 0
        %1159 = vmatpush1.bf16.msra.mxu0 0
        %1160 = vmatprep.subr.bf16.mxu0 0
        %1161 = vmatpush1.bf16.msra.mxu0 0
        %1162 = vmatprep.subr.bf16.mxu0 0
        %1163 = vmatpush1.bf16.msra.mxu0 0
        %1164 = vmatprep.subr.bf16.mxu0 0
        %1165 = vmatpush1.bf16.msra.mxu0 0
        %1166 = vmatprep.subr.bf16.mxu0 0
        %1167 = vmatpush1.bf16.msra.mxu0 0
        %1168 = vmatprep.subr.bf16.mxu0 0
        %1169 = vmatpush1.bf16.msra.mxu0 0
        %1170 = vmatprep.subr.bf16.mxu0 0
        %1171 = vmatpush1.bf16.msra.mxu0 0
        %1172 = vmatprep.subr.bf16.mxu0 0
        %1173 = vmatpush1.bf16.msra.mxu0 0
        %1174 = vmatprep.mubr.bf16.mxu0 0
        %1175 = vmatmul.mubr.bf16.gmra.mrb[0].mxu0 %v1137
        %v1176 = vpop.f32.mrb[0].mxu0
        %v1177 = vadd.f32 0.0, %v1176
        %v1178 = vpop.f32.mrb[0].mxu0
        %v1179 = vpop.f32.mrb[0].mxu0
        %v1180 = vpop.f32.mrb[0].mxu0
        %1181 = vdwg.mxu0
        %v1183 = vsel %vm726, %v1043, 0
        %v1186 = vsel %vm733, %v805, 0
        %1188 = vmatprep.subr.bf16.mxu0 0
        %1189 = vmatpush1.bf16.msra.mxu0 %v1186
        %1190 = vmatprep.subr.bf16.mxu0 0
        %1191 = vmatpush1.bf16.msra.mxu0 0
        %1192 = vmatprep.subr.bf16.mxu0 0
        %1193 = vmatpush1.bf16.msra.mxu0 0
        %1194 = vmatprep.subr.bf16.mxu0 0
        %1195 = vmatpush1.bf16.msra.mxu0 0
        %1196 = vmatprep.subr.bf16.mxu0 0
        %1197 = vmatpush1.bf16.msra.mxu0 0
        %1198 = vmatprep.subr.bf16.mxu0 0
        %1199 = vmatpush1.bf16.msra.mxu0 0
        %1200 = vmatprep.subr.bf16.mxu0 0
        %1201 = vmatpush1.bf16.msra.mxu0 0
        %1202 = vmatprep.subr.bf16.mxu0 0
        %1203 = vmatpush1.bf16.msra.mxu0 0
        %1204 = vmatprep.subr.bf16.mxu0 0
        %1205 = vmatpush1.bf16.msra.mxu0 0
        %1206 = vmatprep.subr.bf16.mxu0 0
        %1207 = vmatpush1.bf16.msra.mxu0 0
        %1208 = vmatprep.subr.bf16.mxu0 0
        %1209 = vmatpush1.bf16.msra.mxu0 0
        %1210 = vmatprep.subr.bf16.mxu0 0
        %1211 = vmatpush1.bf16.msra.mxu0 0
        %1212 = vmatprep.subr.bf16.mxu0 0
        %1213 = vmatpush1.bf16.msra.mxu0 0
        %1214 = vmatprep.subr.bf16.mxu0 0
        %1215 = vmatpush1.bf16.msra.mxu0 0
        %1216 = vmatprep.subr.bf16.mxu0 0
        %1217 = vmatpush1.bf16.msra.mxu0 0
        %1218 = vmatprep.subr.bf16.mxu0 0
        %1219 = vmatpush1.bf16.msra.mxu0 0
        %1220 = vmatprep.mubr.bf16.mxu0 0
        %1221 = vmatmul.mubr.bf16.gmra.mrb[0].mxu0 %v1183
        %v1222 = vpop.f32.mrb[0].mxu0
        %v1223 = vadd.f32 0.0, %v1222
        %v1224 = vpop.f32.mrb[0].mxu0
        %v1225 = vpop.f32.mrb[0].mxu0
        %v1226 = vpop.f32.mrb[0].mxu0
        %1227 = vdwg.mxu0
        %v1228 = vpack.c.bf16 %v1085, %v1085
        %v1229 = vpack.c.bf16 %v1131, %v1131
        %v1230 = vpack.c.bf16 %v1177, %v1177
        %v1231 = vpack.c.bf16 %v1223, %v1223
        %vm1232 = vcmask 60416
        %1233 = vst.msk [vmem:[#allocation2] sm:$0xf] %vm1232, %v1228
        %v1235 = vunpack.c.l.b16 %v1229
        %v1236 = vpack.c.b16 %v1235, %v1235
        %1237 = vrot.lane.b32.xlu0 %v1236, 8
        %v1238 = vpop.permute.xlu0 %1237
        %vm1240 = vcmask 126016
        %1241 = vst.msk [vmem:[#allocation2] sm:$0xf] %vm1240, %v1238
        %v1243 = vunpack.c.l.b16 %v1230
        %v1244 = vpack.c.b16 %v1243, %v1243
        %1245 = vrot.lane.b32.xlu0 %v1244, 16
        %v1246 = vpop.permute.xlu0 %1245
        %vm1248 = vcmask 191616
        %1249 = vst.msk [vmem:[#allocation2] sm:$0xf] %vm1248, %v1246
        %v1251 = vunpack.c.l.b16 %v1231
        %v1252 = vpack.c.b16 %v1251, %v1251
        %1253 = vrot.lane.b32.xlu0 %v1252, 24
        %v1254 = vpop.permute.xlu0 %1253
        %vm1256 = vcmask 257216
        %1257 = vst.msk [vmem:[#allocation2] sm:$0xf] %vm1256, %v1254
        %v1258 = vld [vmem:[#allocation2] sm:$0xf]
        %v1259 = vld [vmem:[%s6] sm:$0xf]
        %v1260 = vld [vmem:[%s6 + $0x4] sm:$0xf]
        %v1261 = vld [vmem:[%s6 + $0x8] sm:$0xf]
        %v1262 = vld [vmem:[%s6 + $0xc] sm:$0xf]
        %v1263 = vld [vmem:[#allocation9] sm:$0x1]
        %v1265 = vlaneseq
        %v1266 = vshrl.u32 %v1265, 7
        %v1267 = vsub.s32 0, %v1266
        %v1268 = vrot.slane %v1263, %v1267
        %v1274 = vunpack.c.l.b16 %v1259
        %v1275 = vunpack.c.l.b16 %v1260
        %v1276 = vunpack.c.l.b16 %v1261
        %v1277 = vunpack.c.l.b16 %v1262
        %v1278 = vpack.c.b16 %v1275, %v1274
        %v1279 = vpack.c.b16 %v1277, %v1276
        %vm1282 = vcmask 261120
        %v1284 = vsel %vm1282, %v1258, 0
        %1286 = vmatprep.subr.bf16.mxu0 0
        %1287 = vmatpush1.bf16.msra.mxu0 %v1278
        %1288 = vmatprep.subr.bf16.mxu0 0
        %1289 = vmatpush1.bf16.msra.mxu0 %v1279
        %1290 = vmatprep.subr.bf16.mxu0 0
        %1291 = vmatpush1.bf16.msra.mxu0 0
        %1292 = vmatprep.subr.bf16.mxu0 0
        %1293 = vmatpush1.bf16.msra.mxu0 0
        %1294 = vmatprep.subr.bf16.mxu0 0
        %1295 = vmatpush1.bf16.msra.mxu0 0
        %1296 = vmatprep.subr.bf16.mxu0 0
        %1297 = vmatpush1.bf16.msra.mxu0 0
        %1298 = vmatprep.subr.bf16.mxu0 0
        %1299 = vmatpush1.bf16.msra.mxu0 0
        %1300 = vmatprep.subr.bf16.mxu0 0
        %1301 = vmatpush1.bf16.msra.mxu0 0
        %1302 = vmatprep.subr.bf16.mxu0 0
        %1303 = vmatpush1.bf16.msra.mxu0 0
        %1304 = vmatprep.subr.bf16.mxu0 0
        %1305 = vmatpush1.bf16.msra.mxu0 0
        %1306 = vmatprep.subr.bf16.mxu0 0
        %1307 = vmatpush1.bf16.msra.mxu0 0
        %1308 = vmatprep.subr.bf16.mxu0 0
        %1309 = vmatpush1.bf16.msra.mxu0 0
        %1310 = vmatprep.subr.bf16.mxu0 0
        %1311 = vmatpush1.bf16.msra.mxu0 0
        %1312 = vmatprep.subr.bf16.mxu0 0
        %1313 = vmatpush1.bf16.msra.mxu0 0
        %1314 = vmatprep.subr.bf16.mxu0 0
        %1315 = vmatpush1.bf16.msra.mxu0 0
        %1316 = vmatprep.subr.bf16.mxu0 0
        %1317 = vmatpush1.bf16.msra.mxu0 0
        %1318 = vmatprep.mubr.bf16.mxu0 0
        %1319 = vmatmul.mubr.bf16.gmra.mrb[0].mxu0 %v1284
        %v1320 = vpop.f32.mrb[0].mxu0
        %v1321 = vadd.f32 %v1268, %v1320
        %v1322 = vpop.f32.mrb[0].mxu0
        %v1323 = vpop.f32.mrb[0].mxu0
        %v1324 = vpop.f32.mrb[0].mxu0
        %1325 = vdwg.mxu0
        %v1326 = vld [vmem:[%s598] sm:$0xf]
        %v1327 = vunpack.c.l.bf16 %v1326
        %v1328 = vadd.f32 %v1321, %v1327
        %v1329 = vld [vmem:[#allocation11] sm:$0x1]
        %v1330 = vld [vmem:[#allocation12] sm:$0x1]
        %v1331 = vsel %vm1282, %v1328, 0.0
        %1332 = vadd.xlane.f32.xlu0 %v1331
        %v1333 = vpop.xlane.xlu0 %1332
        %v1334 = vrcp.pop 32.0
        %v1335 = vmul.f32 %v1333, %v1334
        %v1336 = vmul.f32 %v1328, %v1328
        %v1337 = vsel %vm1282, %v1336, 0.0
        %1338 = vadd.xlane.f32.xlu0 %v1337
        %v1339 = vpop.xlane.xlu0 %1338
        %v1340 = vmul.f32 %v1339, %v1334
        %v1341 = vmul.f32 %v1335, %v1335
        %v1342 = vsub.f32 %v1340, %v1341
        %v1343 = vsub.f32 %v1328, %v1335
        %v1344 = vadd.f32 %v1342, 1e-05
        %v1345 = vrsqrt.pop %v1344
        %v1346 = vmul.f32 %v1343, %v1345
        %v1348 = vlaneseq
        %v1349 = vshrl.u32 %v1348, 7
        %v1350 = vsub.s32 0, %v1349
        %v1351 = vrot.slane %v1329, %v1350
        %v1353 = vmul.f32 %v1346, %v1351
        %v1355 = vlaneseq
        %v1356 = vshrl.u32 %v1355, 7
        %v1357 = vsub.s32 0, %v1356
        %v1358 = vrot.slane %v1330, %v1357
        %v1360 = vadd.f32 %v1353, %v1358
        %v1361 = vpack.c.bf16 %v1360, %v1360
        %v1362 = vld [vmem:[%s10] sm:$0xf]
        %v1363 = vld [vmem:[%s10 + $0x4] sm:$0xf]
        %v1364 = vld [vmem:[%s10 + $0x8] sm:$0xf]
        %v1365 = vld [vmem:[%s10 + $0xc] sm:$0xf]
        %v1366 = vld [vmem:[%s11] sm:$0x1]
        %v1368 = vlaneseq
        %v1369 = vshrl.u32 %v1368, 7
        %v1370 = vsub.s32 0, %v1369
        %v1371 = vrot.slane %v1366, %v1370
        %v1377 = vunpack.c.l.b16 %v1362
        %v1378 = vunpack.c.l.b16 %v1363
        %v1379 = vunpack.c.l.b16 %v1364
        %v1380 = vunpack.c.l.b16 %v1365
        %v1381 = vpack.c.b16 %v1378, %v1377
        %v1382 = vpack.c.b16 %v1380, %v1379
        %v1386 = vsel %vm1282, %v1361, 0
        %1388 = vmatprep.subr.bf16.mxu0 0
        %1389 = vmatpush1.bf16.msra.mxu0 %v1381
        %1390 = vmatprep.subr.bf16.mxu0 0
        %1391 = vmatpush1.bf16.msra.mxu0 %v1382
        %1392 = vmatprep.subr.bf16.mxu0 0
        %1393 = vmatpush1.bf16.msra.mxu0 0
        %1394 = vmatprep.subr.bf16.mxu0 0
        %1395 = vmatpush1.bf16.msra.mxu0 0
        %1396 = vmatprep.subr.bf16.mxu0 0
        %1397 = vmatpush1.bf16.msra.mxu0 0
        %1398 = vmatprep.subr.bf16.mxu0 0
        %1399 = vmatpush1.bf16.msra.mxu0 0
        %1400 = vmatprep.subr.bf16.mxu0 0
        %1401 = vmatpush1.bf16.msra.mxu0 0
        %1402 = vmatprep.subr.bf16.mxu0 0
        %1403 = vmatpush1.bf16.msra.mxu0 0
        %1404 = vmatprep.subr.bf16.mxu0 0
        %1405 = vmatpush1.bf16.msra.mxu0 0
        %1406 = vmatprep.subr.bf16.mxu0 0
        %1407 = vmatpush1.bf16.msra.mxu0 0
        %1408 = vmatprep.subr.bf16.mxu0 0
        %1409 = vmatpush1.bf16.msra.mxu0 0
        %1410 = vmatprep.subr.bf16.mxu0 0
        %1411 = vmatpush1.bf16.msra.mxu0 0
        %1412 = vmatprep.subr.bf16.mxu0 0
        %1413 = vmatpush1.bf16.msra.mxu0 0
        %1414 = vmatprep.subr.bf16.mxu0 0
        %1415 = vmatpush1.bf16.msra.mxu0 0
        %1416 = vmatprep.subr.bf16.mxu0 0
        %1417 = vmatpush1.bf16.msra.mxu0 0
        %1418 = vmatprep.subr.bf16.mxu0 0
        %1419 = vmatpush1.bf16.msra.mxu0 0
        %1420 = vmatprep.mubr.bf16.mxu0 0
        %1421 = vmatmul.mubr.bf16.gmra.mrb[0].mxu0 %v1386
        %v1422 = vpop.f32.mrb[0].mxu0
        %v1423 = vadd.f32 %v1371, %v1422
        %v1424 = vpop.f32.mrb[0].mxu0
        %v1425 = vpop.f32.mrb[0].mxu0
        %v1426 = vpop.f32.mrb[0].mxu0
        %1427 = vdwg.mxu0
        %v1428 = vmax.f32 %v1423, 0.0
        %v1429 = vpack.c.bf16 %v1428, %v1428
        %v1430 = vld [vmem:[%s12] sm:$0xf]
        %v1431 = vld [vmem:[%s12 + $0x4] sm:$0xf]
        %v1432 = vld [vmem:[%s12 + $0x8] sm:$0xf]
        %v1433 = vld [vmem:[%s12 + $0xc] sm:$0xf]
        %v1434 = vld [vmem:[%s12 + $0x10] sm:$0xf]
        %v1435 = vld [vmem:[%s12 + $0x14] sm:$0xf]
        %v1436 = vld [vmem:[%s12 + $0x18] sm:$0xf]
        %v1437 = vld [vmem:[%s12 + $0x1c] sm:$0xf]
        %v1438 = vld [vmem:[%s12 + $0x20] sm:$0xf]
        %v1439 = vld [vmem:[%s12 + $0x24] sm:$0xf]
        %v1440 = vld [vmem:[%s12 + $0x28] sm:$0xf]
        %v1441 = vld [vmem:[%s12 + $0x2c] sm:$0xf]
        %v1442 = vld [vmem:[%s12 + $0x30] sm:$0xf]
        %v1443 = vld [vmem:[%s12 + $0x34] sm:$0xf]
        %v1444 = vld [vmem:[%s12 + $0x38] sm:$0xf]
        %v1445 = vld [vmem:[%s12 + $0x3c] sm:$0xf]
        %v1446 = vld [vmem:[%s13] sm:$0x1]
        %v1448 = vlaneseq
        %v1449 = vshrl.u32 %v1448, 7
        %v1450 = vsub.s32 0, %v1449
        %v1451 = vrot.slane %v1446, %v1450
        %v1469 = vunpack.c.l.b16 %v1430
        %v1470 = vunpack.c.l.b16 %v1431
        %v1471 = vunpack.c.l.b16 %v1432
        %v1472 = vunpack.c.l.b16 %v1433
        %v1473 = vunpack.c.l.b16 %v1434
        %v1474 = vunpack.c.l.b16 %v1435
        %v1475 = vunpack.c.l.b16 %v1436
        %v1476 = vunpack.c.l.b16 %v1437
        %v1477 = vunpack.c.l.b16 %v1438
        %v1478 = vunpack.c.l.b16 %v1439
        %v1479 = vunpack.c.l.b16 %v1440
        %v1480 = vunpack.c.l.b16 %v1441
        %v1481 = vunpack.c.l.b16 %v1442
        %v1482 = vunpack.c.l.b16 %v1443
        %v1483 = vunpack.c.l.b16 %v1444
        %v1484 = vunpack.c.l.b16 %v1445
        %v1485 = vpack.c.b16 %v1470, %v1469
        %v1486 = vpack.c.b16 %v1472, %v1471
        %v1487 = vpack.c.b16 %v1474, %v1473
        %v1488 = vpack.c.b16 %v1476, %v1475
        %v1489 = vpack.c.b16 %v1478, %v1477
        %v1490 = vpack.c.b16 %v1480, %v1479
        %v1491 = vpack.c.b16 %v1482, %v1481
        %v1492 = vpack.c.b16 %v1484, %v1483
        %1501 = vmatprep.subr.bf16.mxu0 0
        %1502 = vmatpush1.bf16.msra.mxu0 %v1485
        %1503 = vmatprep.subr.bf16.mxu0 0
        %1504 = vmatpush1.bf16.msra.mxu0 %v1486
        %1505 = vmatprep.subr.bf16.mxu0 0
        %1506 = vmatpush1.bf16.msra.mxu0 %v1487
        %1507 = vmatprep.subr.bf16.mxu0 0
        %1508 = vmatpush1.bf16.msra.mxu0 %v1488
        %1509 = vmatprep.subr.bf16.mxu0 0
        %1510 = vmatpush1.bf16.msra.mxu0 %v1489
        %1511 = vmatprep.subr.bf16.mxu0 0
        %1512 = vmatpush1.bf16.msra.mxu0 %v1490
        %1513 = vmatprep.subr.bf16.mxu0 0
        %1514 = vmatpush1.bf16.msra.mxu0 %v1491
        %1515 = vmatprep.subr.bf16.mxu0 0
        %1516 = vmatpush1.bf16.msra.mxu0 %v1492
        %1517 = vmatprep.subr.bf16.mxu0 0
        %1518 = vmatpush1.bf16.msra.mxu0 0
        %1519 = vmatprep.subr.bf16.mxu0 0
        %1520 = vmatpush1.bf16.msra.mxu0 0
        %1521 = vmatprep.subr.bf16.mxu0 0
        %1522 = vmatpush1.bf16.msra.mxu0 0
        %1523 = vmatprep.subr.bf16.mxu0 0
        %1524 = vmatpush1.bf16.msra.mxu0 0
        %1525 = vmatprep.subr.bf16.mxu0 0
        %1526 = vmatpush1.bf16.msra.mxu0 0
        %1527 = vmatprep.subr.bf16.mxu0 0
        %1528 = vmatpush1.bf16.msra.mxu0 0
        %1529 = vmatprep.subr.bf16.mxu0 0
        %1530 = vmatpush1.bf16.msra.mxu0 0
        %1531 = vmatprep.subr.bf16.mxu0 0
        %1532 = vmatpush1.bf16.msra.mxu0 0
        %1533 = vmatprep.mubr.bf16.mxu0 0
        %1534 = vmatmul.mubr.bf16.gmra.mrb[0].mxu0 %v1429
        %v1535 = vpop.f32.mrb[0].mxu0
        %v1536 = vadd.f32 %v1451, %v1535
        %v1537 = vpop.f32.mrb[0].mxu0
        %v1538 = vpop.f32.mrb[0].mxu0
        %v1539 = vpop.f32.mrb[0].mxu0
        %1540 = vdwg.mxu0
        %v1541 = vadd.f32 %v1536, %v1360
        %v1542 = vld [vmem:[%s14] sm:$0x1]
        %v1543 = vld [vmem:[%s15] sm:$0x1]
        %v1544 = vsel %vm1282, %v1541, 0.0
        %1545 = vadd.xlane.f32.xlu0 %v1544
        %v1546 = vpop.xlane.xlu0 %1545
        %v1547 = vmul.f32 %v1546, %v1334
        %v1548 = vmul.f32 %v1541, %v1541
        %v1549 = vsel %vm1282, %v1548, 0.0
        %1550 = vadd.xlane.f32.xlu0 %v1549
        %v1551 = vpop.xlane.xlu0 %1550
        %v1552 = vmul.f32 %v1551, %v1334
        %v1553 = vmul.f32 %v1547, %v1547
        %v1554 = vsub.f32 %v1552, %v1553
        %v1555 = vsub.f32 %v1541, %v1547
        %v1556 = vadd.f32 %v1554, 1e-05
        %v1557 = vrsqrt.pop %v1556
        %v1558 = vmul.f32 %v1555, %v1557
        %v1560 = vlaneseq
        %v1561 = vshrl.u32 %v1560, 7
        %v1562 = vsub.s32 0, %v1561
        %v1563 = vrot.slane %v1542, %v1562
        %v1565 = vmul.f32 %v1558, %v1563
        %v1567 = vlaneseq
        %v1568 = vshrl.u32 %v1567, 7
        %v1569 = vsub.s32 0, %v1568
        %v1570 = vrot.slane %v1543, %v1569
        %v1572 = vadd.f32 %v1565, %v1570
        %1573 = vst.msk [vmem:[%s692] sm:$0xff] %vm1282, %v1572
        %s1574 = sand.u32 %s425, 1
        %s1575 = scalar_lea.sflag [#allocation5], %s1574
        %s1576 = sand.u32 %s425, 1
        %s1577 = smul.addr %s1576, 8
        %s1578 = scalar_lea.vmem [#allocation14], %s1577
        // Predicated region
        $region109: #{tpu_custom_call.1} parent=83 // pred_check
          %p1579 = pneg %p435
        $region110: #{tpu_custom_call.1} parent=83 // pred_check_branch
          %1581 = sbr.rel (%p1579) target = $region112
        $region111: #{tpu_custom_call.1} parent=83 // pred_region
          %s1583 = ssub.s32 128, 128
          %1584 = vsyncadd %s1575, %s1583
          %s1585 = sadd.s32 %s43, %s42
          %s1586 = smul.addr %s1585, 128
          %s1587 = scalar_lea.hbm %s16, %s1586
          %s1589 = sshll.u32 %s1578, 4
          %s1590 = int_to_ptr.vmem [resolvable:$true] %s1589
          %1592 = dma.vmem_to_hbm [thread:$0]  %s1590, 128, %s1587, %s1575
        $region112: #{tpu_custom_call.1} parent=83 // pred_fallthru
          _
      $region84: #{tpu_custom_call.1} parent=5 // pred_fallthru
        _
      %p1593 = scmp.le.s32.totalorder 2, %s33
      // Predicated region
      $region113: #{tpu_custom_call.1} parent=5 // pred_check
        %p1594 = pneg %p1593
      $region114: #{tpu_custom_call.1} parent=5 // pred_check_branch
        %1596 = sbr.rel (%p1594) target = $region116
      $region115: #{tpu_custom_call.1} parent=5 // pred_region
        %s1597 = ssub.s32 %s33, 2
        // Predicated region
        $region117: #{tpu_custom_call.1} parent=115 // pred_check
          %p1598 = pneg %p441
        $region118: #{tpu_custom_call.1} parent=115 // pred_check_branch
          %1600 = sbr.rel (%p1598) target = $region120
        $region119: #{tpu_custom_call.1} parent=115 // pred_region
          %s1601 = sand.u32 %s426, 1
          %s1602 = scalar_lea.sflag [#allocation5], %s1601
          %s1603 = sand.u32 %s426, 1
          %s1604 = smul.addr %s1603, 8
          %s1605 = scalar_lea.vmem [#allocation14], %s1604
          %1606 = dma.done %s1602, 128
        $region120: #{tpu_custom_call.1} parent=115 // pred_fallthru
          _
      $region116: #{tpu_custom_call.1} parent=5 // pred_fallthru
        _
    $region6: #{tpu_custom_call.1} parent=1 // loop_footer
      %s37 = sadd.s32 1, %s33
    $region7: #{tpu_custom_call.1} parent=1 // loop_footer_branch
      %32 = sbr.rel target = $region3
    $region8: #{tpu_custom_call.1} parent=1 // loop_exit
      _
    %1607 = vsyncpa [#allocation4], 1
    %s1608 = scalar_lea.sflag [#allocation4], 1
    %1609 = vsyncpa %s1608, 1
    %1610 = vsyncpa [#allocation7], 1
    %s1611 = scalar_lea.sflag [#allocation7], 1
    %1612 = vsyncpa %s1611, 1
    %1613 = vsyncpa [#allocation10], 1
    %1614 = vsyncpa [#allocation13], 1
    %1615 = vsyncpa [#allocation5], 1
    %s1616 = scalar_lea.sflag [#allocation5], 1
    %1617 = vsyncpa %s1616, 1

</llo_original>
